<compile_context>
chip_gen: v7x
topology: tpu7x:2x2x1
jax: 0.10.0
libtpu: 0.0.40
codegen_flags: <defaults>
</compile_context>

<pallas_src>
import functools

import jax
import jax.numpy as jnp
from jax.experimental import pallas as pl
from jax.experimental.pallas import tpu as pltpu

# ----------------------------------------------------------------------------
# Model constants (mirroring the PyTorch module).
# ----------------------------------------------------------------------------
K = 5                                     # conv kernel size
C_EMB = 300                               # embedding dim of the reference module
C_EMB_PAD = 384                           # zero-padded to a lane multiple of 128
C_HID = 128                               # conv channels
CONV_DILATIONS = (1, 2, 4, 8, 16, 32, 64)
PAD_IN = 16                               # >= (K-1)*1, one bf16 sublane-packed tile
PAD_A = 128                               # buf_a read with dilations 2/8/32 -> 4*32
PAD_B = 256                               # buf_b read with dilations 4/16/64 -> 4*64
FC_DIMS = ((C_HID, 64), (64, 32), (32, 1))


# ----------------------------------------------------------------------------
# Fused kernel: in-kernel causal padding + 7 dilated causal convs (+ReLU)
#               + last-time-step MLP head, all VMEM-resident.
#
#   x_ref : (B_tile, L, C_emb)   bf16 embedded tokens (channels-last)
#   w1    : (K*C_emb, 128)       bf16 tap-flattened layer-1 weight
#   wr    : (6, K*128, 128)      bf16 tap-flattened weights of layers 2..7
#   b1/br : f32 biases;  fw*/fb*: f32 fc head
#   o_ref : (B_tile, 1, 1) f32 logits
#
# conv semantics: out[t] = relu( sum_k x[t - (K-1-k)*d] @ w_k + b ), zeros for
# negative time -- identical to torch Conv1d(padding=(K-1)*d)[..., :-pad].
# The zero region is the prefix rows of each activation buffer, zeroed once per
# grid step and never overwritten.
# ----------------------------------------------------------------------------
def _fused_kernel(x_ref, w1_ref, b1_ref, wr_ref, br_ref,
                  fw1_ref, fb1_ref, fw2_ref, fb2_ref, fw3_ref, fb3_ref,
                  o_ref,
                  xin, buf_a, buf_b,
                  *, L, B_tile, C_emb):
    f32 = jnp.float32
    bf16 = jnp.bfloat16
    M = B_tile * L                        # matmul M dimension (batch folded in)

    # -- stage 0: causal left-pad the embedded input entirely in VMEM (bf16) ---
    xin[:, :PAD_IN, :] = jnp.zeros((B_tile, PAD_IN, C_emb), bf16)
    xin[:, PAD_IN:, :] = x_ref[...]

    # Zero prefixes of the ping/pong buffers == shared causal padding.
    buf_a[:, :PAD_A, :] = jnp.zeros((B_tile, PAD_A, C_HID), bf16)
    buf_b[:, :PAD_B, :] = jnp.zeros((B_tile, PAD_B, C_HID), bf16)

    def conv_full(src, pad_s, dst, pad_d, d, w, b):
        # One tap-concatenated matmul: (M, K*C_in) @ (K*C_in, 128); accumulation
        # over all K taps happens inside the MXU (deep contraction), no VALU adds.
        taps = [src[:, pad_s - (K - 1 - k) * d: pad_s - (K - 1 - k) * d + L, :]
                for k in range(K)]
        xs = jnp.concatenate(taps, axis=-1).reshape(M, -1)
        acc = jnp.dot(xs, w, preferred_element_type=f32) + b
        dst[:, pad_d:, :] = jnp.maximum(acc, 0.0).astype(bf16).reshape(B_tile, L, C_HID)

    # -- layer 1: C_emb -> 128, dilation 1 --------------------------------------
    conv_full(xin, PAD_IN, buf_a, PAD_A, 1, w1_ref[...], b1_ref[...])

    # -- layers 2..6: 128 -> 128, dilations 2..32, ping-pong in VMEM ------------
    plan = ((buf_a, PAD_A, buf_b, PAD_B, 2),
            (buf_b, PAD_B, buf_a, PAD_A, 4),
            (buf_a, PAD_A, buf_b, PAD_B, 8),
            (buf_b, PAD_B, buf_a, PAD_A, 16),
            (buf_a, PAD_A, buf_b, PAD_B, 32))
    for li, (src, ps, dst, pd, d) in enumerate(plan):
        conv_full(src, ps, dst, pd, d, wr_ref[li], br_ref[li:li + 1, :])

    # -- layer 7 (dilation 64): only the last time step feeds the fc head -------
    d = CONV_DILATIONS[-1]
    t_last = PAD_B + L - 1
    taps = [buf_b[:, t_last - (K - 1 - k) * d: t_last - (K - 1 - k) * d + 1, :]
            for k in range(K)]
    xs = jnp.concatenate(taps, axis=-1).reshape(B_tile, K * C_HID)
    h = jnp.dot(xs, wr_ref[5], preferred_element_type=f32) + br_ref[5:6, :]
    h = jnp.maximum(h, 0.0)                                   # (B_tile, 128) f32

    # -- fc head: 128 -> 64 -> 32 -> 1 (Dropouts are identity in eval) ----------
    h = jnp.maximum(jnp.dot(h, fw1_ref[...], preferred_element_type=f32) + fb1_ref[...], 0.0)
    h = jnp.maximum(jnp.dot(h, fw2_ref[...], preferred_element_type=f32) + fb2_ref[...], 0.0)
    out = jnp.dot(h, fw3_ref[...], preferred_element_type=f32) + fb3_ref[...]
    o_ref[...] = out.reshape(B_tile, 1, 1).astype(o_ref.dtype)


# ----------------------------------------------------------------------------
# Wrapper: grid over batch tiles, everything else fused inside the kernel.
# ----------------------------------------------------------------------------
def fused_single_ccnn(x, w1, b1, wr, br, fc):
    """x: (B, L, C_EMB_PAD) bf16 embedded tokens -> (B, 1) f32 logits."""
    B, L, c_emb = x.shape
    if L % 8 != 0:
        raise ValueError("sequence length must be a multiple of 8 (sublane tile)")
    if c_emb % 128 != 0:
        raise ValueError("embedding dim must be lane-padded to a multiple of 128")

    (fw1, fb1), (fw2, fb2), (fw3, fb3) = fc

    # --- per-generation VMEM capacity (v7x: 64 MiB/TC, v5e/v6e: 128 MiB) -------
    try:
        vmem_cap = int(getattr(pltpu.get_tpu_info(), "vmem_capacity_bytes", 64 << 20))
    except Exception:
        vmem_cap = 64 << 20
    budget = int(0.70 * vmem_cap)

    weight_bytes = 2 * ((w1.size + wr.size) * 2            # bf16, x2 for pipelining
                        + (b1.size + br.size) * 4
                        + (fw1.size + fb1.size + fw2.size + fb2.size
                           + fw3.size + fb3.size) * 4)

    # bf16 scratch + double-buffered input block + in-kernel matmul temporaries,
    # all per batch row.
    per_row = ((PAD_IN + L) * c_emb * 2                     # xin
               + (PAD_A + L) * C_HID * 2                    # buf_a (ping)
               + (PAD_B + L) * C_HID * 2                    # buf_b (pong)
               + 2 * L * c_emb * 2                          # x input block (x2 buffers)
               + L * K * c_emb * 2                          # concatenated layer-1 taps
               + 2 * L * C_HID * 4)                         # f32 accumulator headroom
    max_fit = max(1, (budget - weight_bytes) // per_row)

    # Target M = B_tile*L ~ 1024 rows per matmul (MXU well fed); keep >= 2 grid
    # tiles whenever B >= 2 so both v7x TensorCores get work (grid is "parallel").
    # TODO(synk): for B == 1 on v7x a sequence split with a 256-row halo would
    # engage the second TensorCore; not implemented here.
    B_tile = int(max(1, min(B, max_fit, max(1, 1024 // L), 64)))
    if B >= 2:
        B_tile = min(B_tile, pl.cdiv(B, 2))
    n_tiles = pl.cdiv(B, B_tile)
    B_pad = n_tiles * B_tile
    if B_pad != B:
        x = jnp.pad(x, ((0, B_pad - B), (0, 0), (0, 0)))

    kernel = functools.partial(_fused_kernel, L=L, B_tile=B_tile, C_emb=c_emb)

    need = weight_bytes + B_tile * per_row + (4 << 20)
    vmem_limit = int(min(max(need * 13 // 10, 32 << 20), int(0.9 * vmem_cap)))

    # --- advisory cost estimate -------------------------------------------------
    conv_flops = (2 * B_pad * L * (K * c_emb * C_HID + 5 * K * C_HID * C_HID)
                  + 2 * B_pad * K * C_HID * C_HID)            # last layer: last step only
    fc_flops = 2 * B_pad * (C_HID * 64 + 64 * 32 + 32 * 1)
    bytes_accessed = (x.size * 2 + (w1.size + wr.size) * 2
                      + (b1.size + br.size) * 4
                      + (fw1.size + fb1.size + fw2.size + fb2.size
                         + fw3.size + fb3.size) * 4
                      + B_pad * 4)

    out = pl.pallas_call(
        kernel,
        out_shape=jax.ShapeDtypeStruct((B_pad, 1, 1), jnp.float32),
        grid=(n_tiles,),
        in_specs=[
            pl.BlockSpec((B_tile, L, c_emb), lambda i: (i, 0, 0)),        # x
            pl.BlockSpec((K * c_emb, C_HID), lambda i: (0, 0)),           # w1 (tap-flattened)
            pl.BlockSpec((1, C_HID), lambda i: (0, 0)),                   # b1
            pl.BlockSpec((6, K * C_HID, C_HID), lambda i: (0, 0, 0)),     # w2..w7
            pl.BlockSpec((6, C_HID), lambda i: (0, 0)),                   # b2..b7
            pl.BlockSpec((C_HID, 64), lambda i: (0, 0)),                  # fc1 w
            pl.BlockSpec((1, 64), lambda i: (0, 0)),                      # fc1 b
            pl.BlockSpec((64, 32), lambda i: (0, 0)),                     # fc2 w
            pl.BlockSpec((1, 32), lambda i: (0, 0)),                      # fc2 b
            pl.BlockSpec((32, 1), lambda i: (0, 0)),                      # fc3 w
            pl.BlockSpec((1, 1), lambda i: (0, 0)),                       # fc3 b
        ],
        out_specs=pl.BlockSpec((B_tile, 1, 1), lambda i: (i, 0, 0)),
        scratch_shapes=[
            pltpu.VMEM((B_tile, PAD_IN + L, c_emb), jnp.bfloat16),        # padded input
            pltpu.VMEM((B_tile, PAD_A + L, C_HID), jnp.bfloat16),         # ping
            pltpu.VMEM((B_tile, PAD_B + L, C_HID), jnp.bfloat16),         # pong
        ],
        compiler_params=pltpu.CompilerParams(
            dimension_semantics=("parallel",),
            vmem_limit_bytes=vmem_limit,
        ),
        cost_estimate=pl.CostEstimate(
            flops=conv_flops + fc_flops,
            transcendentals=0,
            bytes_accessed=bytes_accessed,
        ),
    )(x, w1, b1, wr, br, fw1, fb1, fw2, fb2, fw3, fb3)
    return out.reshape(B_pad, 1)[:B]


# ----------------------------------------------------------------------------
# Parameter construction (deterministic, mirrors the PyTorch module's shapes).
# ----------------------------------------------------------------------------
def init_params(key, token_size):
    params = {}
    key, k_emb = jax.random.split(key)
    emb = jax.random.normal(k_emb, (token_size, C_EMB), jnp.float32)
    # pad embedding dim 300 -> 384 (zero columns) for dense lane layout
    params["embedding"] = jnp.pad(emb, ((0, 0), (0, C_EMB_PAD - C_EMB)))

    # conv layer 1: 300(->384) -> 128, kernel 5, dilation 1.
    # Stored tap-major (K, C_in_pad, C_out) then flattened to (K*C_in_pad, C_out)
    # to match the in-kernel tap concatenation (w_k = W[:, :, k].T).
    key, kw, kb = jax.random.split(key, 3)
    std = (2.0 / (C_EMB * K)) ** 0.5                       # kaiming-normal-ish
    w1 = jax.random.normal(kw, (K, C_EMB, C_HID), jnp.float32) * std
    w1 = jnp.pad(w1, ((0, 0), (0, C_EMB_PAD - C_EMB), (0, 0)))   # zero in-ch pad
    params["conv1_w"] = w1.reshape(K * C_EMB_PAD, C_HID).astype(jnp.bfloat16)
    params["conv1_b"] = jax.random.normal(kb, (1, C_HID), jnp.float32) * 0.01

    # conv layers 2..7: 128 -> 128, kernel 5, dilations 2..64 (stacked + flattened)
    ws, bs = [], []
    for _ in CONV_DILATIONS[1:]:
        key, kw, kb = jax.random.split(key, 3)
        std = (2.0 / (C_HID * K)) ** 0.5
        ws.append(jax.random.normal(kw, (K, C_HID, C_HID), jnp.float32) * std)
        bs.append(jax.random.normal(kb, (C_HID,), jnp.float32) * 0.01)
    params["convR_w"] = jnp.stack(ws).reshape(6, K * C_HID, C_HID).astype(jnp.bfloat16)
    params["convR_b"] = jnp.stack(bs)                            # (6, 128) f32

    # fc head (xavier-normal-ish), stored as (in, out)
    fcs = []
    for fin, fout in FC_DIMS:
        key, kw, kb = jax.random.split(key, 3)
        std = (2.0 / (fin + fout)) ** 0.5
        fcs.append((jax.random.normal(kw, (fin, fout), jnp.float32) * std,
                    jax.random.normal(kb, (1, fout), jnp.float32) * 0.01))
    params["fc"] = fcs
    return params


# ----------------------------------------------------------------------------
# Full forward pass (embedding gather is glue in plain JAX).
# ----------------------------------------------------------------------------
@jax.jit
def single_ccnn_forward(params, token_ids):
    # token_ids: (B, L) int32
    x = jnp.take(params["embedding"], token_ids, axis=0).astype(jnp.bfloat16)
    return fused_single_ccnn(x,
                             params["conv1_w"], params["conv1_b"],
                             params["convR_w"], params["convR_b"],
                             params["fc"])


if __name__ == "__main__":
    key = jax.random.PRNGKey(0)
    token_size = 100
    B, L = 2, 16

    params = init_params(key, token_size)
    key, k_ids = jax.random.split(key)
    token_ids = jax.random.randint(k_ids, (B, L), 0, token_size, dtype=jnp.int32)

    logits = single_ccnn_forward(params, token_ids)
    jax.block_until_ready(logits)
    assert logits.shape == (B, 1) and logits.dtype == jnp.float32
    assert bool(jnp.all(jnp.isfinite(logits)))
    print("KERNEL_OK")
</pallas_src>

<mosaic_0001>
module attributes {stable_mosaic.version = 11 : i64} {
  func.func @_fused_kernel(%arg0: i32, %arg1: memref<1x16x384xbf16, #tpu.memory_space<vmem>>, %arg2: memref<1920x128xbf16, #tpu.memory_space<vmem>>, %arg3: memref<1x128xf32, #tpu.memory_space<vmem>>, %arg4: memref<6x640x128xbf16, #tpu.memory_space<vmem>>, %arg5: memref<6x128xf32, #tpu.memory_space<vmem>>, %arg6: memref<128x64xf32, #tpu.memory_space<vmem>>, %arg7: memref<1x64xf32, #tpu.memory_space<vmem>>, %arg8: memref<64x32xf32, #tpu.memory_space<vmem>>, %arg9: memref<1x32xf32, #tpu.memory_space<vmem>>, %arg10: memref<32x1xf32, #tpu.memory_space<vmem>>, %arg11: memref<1x1xf32, #tpu.memory_space<vmem>>, %arg12: memref<1x1x1xf32, #tpu.memory_space<vmem>>, %arg13: memref<1x32x384xbf16, #tpu.memory_space<vmem>>, %arg14: memref<1x144x128xbf16, #tpu.memory_space<vmem>>, %arg15: memref<1x272x128xbf16, #tpu.memory_space<vmem>>) attributes {dimension_semantics = [#tpu.dimension_semantics<parallel>], iteration_bounds = array<i64: 2>, scalar_prefetch = 0 : i64, scratch_operands = 3 : i64, tpu.core_type = #tpu.core_type<tc>, window_params = [{transform_indices = @transform_0, window_bounds = array<i64: 1, 16, 384>}, {pipeline_mode = #tpu.pipeline_mode<synchronous>, transform_indices = @transform_1, window_bounds = array<i64: 1920, 128>}, {pipeline_mode = #tpu.pipeline_mode<synchronous>, transform_indices = @transform_2, window_bounds = array<i64: 1, 128>}, {pipeline_mode = #tpu.pipeline_mode<synchronous>, transform_indices = @transform_3, window_bounds = array<i64: 6, 640, 128>}, {pipeline_mode = #tpu.pipeline_mode<synchronous>, transform_indices = @transform_4, window_bounds = array<i64: 6, 128>}, {pipeline_mode = #tpu.pipeline_mode<synchronous>, transform_indices = @transform_5, window_bounds = array<i64: 128, 64>}, {pipeline_mode = #tpu.pipeline_mode<synchronous>, transform_indices = @transform_6, window_bounds = array<i64: 1, 64>}, {pipeline_mode = #tpu.pipeline_mode<synchronous>, transform_indices = @transform_7, window_bounds = array<i64: 64, 32>}, {pipeline_mode = #tpu.pipeline_mode<synchronous>, transform_indices = @transform_8, window_bounds = array<i64: 1, 32>}, {pipeline_mode = #tpu.pipeline_mode<synchronous>, transform_indices = @transform_9, window_bounds = array<i64: 32, 1>}, {pipeline_mode = #tpu.pipeline_mode<synchronous>, transform_indices = @transform_10, window_bounds = array<i64: 1, 1>}, {transform_indices = @transform_11, window_bounds = array<i64: 1, 1, 1>}]} {
    %cst = arith.constant 0.000000e+00 : bf16
    %0 = vector.broadcast %cst : bf16 to vector<1x16x384xbf16>
    %c0 = arith.constant 0 : index
    %c0_0 = arith.constant 0 : index
    %c0_1 = arith.constant 0 : index
    %1 = vector.load %arg13[%c0, %c0_0, %c0_1] : memref<1x32x384xbf16, #tpu.memory_space<vmem>>, vector<1x16x384xbf16>
    tpu.vector_store %arg13[%c0, %c0_0, %c0_1], %0 {strides = array<i32>} : memref<1x32x384xbf16, #tpu.memory_space<vmem>>, vector<1x16x384xbf16>,
    %c0_2 = arith.constant 0 : index
    %c0_3 = arith.constant 0 : index
    %c0_4 = arith.constant 0 : index
    %2 = vector.load %arg1[%c0_2, %c0_3, %c0_4] : memref<1x16x384xbf16, #tpu.memory_space<vmem>>, vector<1x16x384xbf16>
    %c0_5 = arith.constant 0 : index
    %c16 = arith.constant 16 : index
    %c0_6 = arith.constant 0 : index
    %3 = vector.load %arg13[%c0_5, %c16, %c0_6] : memref<1x32x384xbf16, #tpu.memory_space<vmem>>, vector<1x16x384xbf16>
    tpu.vector_store %arg13[%c0_5, %c16, %c0_6], %2 {strides = array<i32>} : memref<1x32x384xbf16, #tpu.memory_space<vmem>>, vector<1x16x384xbf16>,
    %cst_7 = arith.constant 0.000000e+00 : bf16
    %4 = vector.broadcast %cst_7 : bf16 to vector<1x128x128xbf16>
    %c0_8 = arith.constant 0 : index
    %c0_9 = arith.constant 0 : index
    %c0_10 = arith.constant 0 : index
    %5 = vector.load %arg14[%c0_8, %c0_9, %c0_10] : memref<1x144x128xbf16, #tpu.memory_space<vmem>>, vector<1x128x128xbf16>
    tpu.vector_store %arg14[%c0_8, %c0_9, %c0_10], %4 {strides = array<i32>} : memref<1x144x128xbf16, #tpu.memory_space<vmem>>, vector<1x128x128xbf16>,
    %cst_11 = arith.constant 0.000000e+00 : bf16
    %6 = vector.broadcast %cst_11 : bf16 to vector<1x256x128xbf16>
    %c0_12 = arith.constant 0 : index
    %c0_13 = arith.constant 0 : index
    %c0_14 = arith.constant 0 : index
    %7 = vector.load %arg15[%c0_12, %c0_13, %c0_14] : memref<1x272x128xbf16, #tpu.memory_space<vmem>>, vector<1x256x128xbf16>
    tpu.vector_store %arg15[%c0_12, %c0_13, %c0_14], %6 {strides = array<i32>} : memref<1x272x128xbf16, #tpu.memory_space<vmem>>, vector<1x256x128xbf16>,
    %c0_15 = arith.constant 0 : index
    %c0_16 = arith.constant 0 : index
    %8 = vector.load %arg2[%c0_15, %c0_16] : memref<1920x128xbf16, #tpu.memory_space<vmem>>, vector<1920x128xbf16>
    %c0_17 = arith.constant 0 : index
    %c0_18 = arith.constant 0 : index
    %9 = vector.load %arg3[%c0_17, %c0_18] : memref<1x128xf32, #tpu.memory_space<vmem>>, vector<1x128xf32>
    %c0_19 = arith.constant 0 : index
    %c12 = arith.constant 12 : index
    %c0_20 = arith.constant 0 : index
    %10 = vector.load %arg13[%c0_19, %c12, %c0_20] : memref<1x32x384xbf16, #tpu.memory_space<vmem>>, vector<1x16x384xbf16>
    %c0_21 = arith.constant 0 : index
    %c13 = arith.constant 13 : index
    %c0_22 = arith.constant 0 : index
    %11 = vector.load %arg13[%c0_21, %c13, %c0_22] : memref<1x32x384xbf16, #tpu.memory_space<vmem>>, vector<1x16x384xbf16>
    %c0_23 = arith.constant 0 : index
    %c14 = arith.constant 14 : index
    %c0_24 = arith.constant 0 : index
    %12 = vector.load %arg13[%c0_23, %c14, %c0_24] : memref<1x32x384xbf16, #tpu.memory_space<vmem>>, vector<1x16x384xbf16>
    %c0_25 = arith.constant 0 : index
    %c15 = arith.constant 15 : index
    %c0_26 = arith.constant 0 : index
    %13 = vector.load %arg13[%c0_25, %c15, %c0_26] : memref<1x32x384xbf16, #tpu.memory_space<vmem>>, vector<1x16x384xbf16>
    %c0_27 = arith.constant 0 : index
    %c16_28 = arith.constant 16 : index
    %c0_29 = arith.constant 0 : index
    %14 = vector.load %arg13[%c0_27, %c16_28, %c0_29] : memref<1x32x384xbf16, #tpu.memory_space<vmem>>, vector<1x16x384xbf16>
    %15 = tpu.concatenate %10, %11, %12, %13, %14 in 2 : vector<1x16x384xbf16>, vector<1x16x384xbf16>, vector<1x16x384xbf16>, vector<1x16x384xbf16>, vector<1x16x384xbf16> -> vector<1x16x1920xbf16>
    %16 = vector.shape_cast %15 : vector<1x16x1920xbf16> to vector<16x1920xbf16>
    %cst_30 = arith.constant dense<0.000000e+00> : vector<16x128xf32>
    %17 = tpu.matmul %16, %8, %cst_30 {dimension_numbers = #tpu.dot_dimension_numbers<[1], [0], [0], [1], [0, 0, 1, 1], [], []>} : vector<16x1920xbf16>, vector<1920x128xbf16>, vector<16x128xf32> -> vector<16x128xf32>
    %18 = vector.broadcast %9 : vector<1x128xf32> to vector<16x128xf32>
    %19 = arith.addf %17, %18 : vector<16x128xf32>
    %cst_31 = arith.constant 0.000000e+00 : f32
    %20 = vector.broadcast %cst_31 : f32 to vector<16x128xf32>
    %21 = arith.maximumf %19, %20 : vector<16x128xf32>
    %22 = arith.truncf %21 : vector<16x128xf32> to vector<16x128xbf16>
    %23 = vector.shape_cast %22 : vector<16x128xbf16> to vector<1x16x128xbf16>
    %c0_32 = arith.constant 0 : index
    %c128 = arith.constant 128 : index
    %c0_33 = arith.constant 0 : index
    %24 = vector.load %arg14[%c0_32, %c128, %c0_33] : memref<1x144x128xbf16, #tpu.memory_space<vmem>>, vector<1x16x128xbf16>
    tpu.vector_store %arg14[%c0_32, %c128, %c0_33], %23 {strides = array<i32>} : memref<1x144x128xbf16, #tpu.memory_space<vmem>>, vector<1x16x128xbf16>,
    %c0_34 = arith.constant 0 : index
    %c0_35 = arith.constant 0 : index
    %c0_36 = arith.constant 0 : index
    %25 = vector.load %arg4[%c0_34, %c0_35, %c0_36] : memref<6x640x128xbf16, #tpu.memory_space<vmem>>, vector<1x640x128xbf16>
    %26 = vector.shape_cast %25 : vector<1x640x128xbf16> to vector<640x128xbf16>
    %c0_37 = arith.constant 0 : index
    %c0_38 = arith.constant 0 : index
    %27 = vector.load %arg5[%c0_37, %c0_38] : memref<6x128xf32, #tpu.memory_space<vmem>>, vector<1x128xf32>
    %c0_39 = arith.constant 0 : index
    %c120 = arith.constant 120 : index
    %c0_40 = arith.constant 0 : index
    %28 = vector.load %arg14[%c0_39, %c120, %c0_40] : memref<1x144x128xbf16, #tpu.memory_space<vmem>>, vector<1x16x128xbf16>
    %c0_41 = arith.constant 0 : index
    %c122 = arith.constant 122 : index
    %c0_42 = arith.constant 0 : index
    %29 = vector.load %arg14[%c0_41, %c122, %c0_42] : memref<1x144x128xbf16, #tpu.memory_space<vmem>>, vector<1x16x128xbf16>
    %c0_43 = arith.constant 0 : index
    %c124 = arith.constant 124 : index
    %c0_44 = arith.constant 0 : index
    %30 = vector.load %arg14[%c0_43, %c124, %c0_44] : memref<1x144x128xbf16, #tpu.memory_space<vmem>>, vector<1x16x128xbf16>
    %c0_45 = arith.constant 0 : index
    %c126 = arith.constant 126 : index
    %c0_46 = arith.constant 0 : index
    %31 = vector.load %arg14[%c0_45, %c126, %c0_46] : memref<1x144x128xbf16, #tpu.memory_space<vmem>>, vector<1x16x128xbf16>
    %c0_47 = arith.constant 0 : index
    %c128_48 = arith.constant 128 : index
    %c0_49 = arith.constant 0 : index
    %32 = vector.load %arg14[%c0_47, %c128_48, %c0_49] : memref<1x144x128xbf16, #tpu.memory_space<vmem>>, vector<1x16x128xbf16>
    %33 = tpu.concatenate %28, %29, %30, %31, %32 in 2 : vector<1x16x128xbf16>, vector<1x16x128xbf16>, vector<1x16x128xbf16>, vector<1x16x128xbf16>, vector<1x16x128xbf16> -> vector<1x16x640xbf16>
    %34 = vector.shape_cast %33 : vector<1x16x640xbf16> to vector<16x640xbf16>
    %cst_50 = arith.constant dense<0.000000e+00> : vector<16x128xf32>
    %35 = tpu.matmul %34, %26, %cst_50 {dimension_numbers = #tpu.dot_dimension_numbers<[1], [0], [0], [1], [0, 0, 1, 1], [], []>} : vector<16x640xbf16>, vector<640x128xbf16>, vector<16x128xf32> -> vector<16x128xf32>
    %36 = vector.broadcast %27 : vector<1x128xf32> to vector<16x128xf32>
    %37 = arith.addf %35, %36 : vector<16x128xf32>
    %cst_51 = arith.constant 0.000000e+00 : f32
    %38 = vector.broadcast %cst_51 : f32 to vector<16x128xf32>
    %39 = arith.maximumf %37, %38 : vector<16x128xf32>
    %40 = arith.truncf %39 : vector<16x128xf32> to vector<16x128xbf16>
    %41 = vector.shape_cast %40 : vector<16x128xbf16> to vector<1x16x128xbf16>
    %c0_52 = arith.constant 0 : index
    %c256 = arith.constant 256 : index
    %c0_53 = arith.constant 0 : index
    %42 = vector.load %arg15[%c0_52, %c256, %c0_53] : memref<1x272x128xbf16, #tpu.memory_space<vmem>>, vector<1x16x128xbf16>
    tpu.vector_store %arg15[%c0_52, %c256, %c0_53], %41 {strides = array<i32>} : memref<1x272x128xbf16, #tpu.memory_space<vmem>>, vector<1x16x128xbf16>,
    %c1 = arith.constant 1 : index
    %c0_54 = arith.constant 0 : index
    %c0_55 = arith.constant 0 : index
    %43 = vector.load %arg4[%c1, %c0_54, %c0_55] : memref<6x640x128xbf16, #tpu.memory_space<vmem>>, vector<1x640x128xbf16>
    %44 = vector.shape_cast %43 : vector<1x640x128xbf16> to vector<640x128xbf16>
    %c1_56 = arith.constant 1 : index
    %c0_57 = arith.constant 0 : index
    %45 = vector.load %arg5[%c1_56, %c0_57] : memref<6x128xf32, #tpu.memory_space<vmem>>, vector<1x128xf32>
    %c0_58 = arith.constant 0 : index
    %c240 = arith.constant 240 : index
    %c0_59 = arith.constant 0 : index
    %46 = vector.load %arg15[%c0_58, %c240, %c0_59] : memref<1x272x128xbf16, #tpu.memory_space<vmem>>, vector<1x16x128xbf16>
    %c0_60 = arith.constant 0 : index
    %c244 = arith.constant 244 : index
    %c0_61 = arith.constant 0 : index
    %47 = vector.load %arg15[%c0_60, %c244, %c0_61] : memref<1x272x128xbf16, #tpu.memory_space<vmem>>, vector<1x16x128xbf16>
    %c0_62 = arith.constant 0 : index
    %c248 = arith.constant 248 : index
    %c0_63 = arith.constant 0 : index
    %48 = vector.load %arg15[%c0_62, %c248, %c0_63] : memref<1x272x128xbf16, #tpu.memory_space<vmem>>, vector<1x16x128xbf16>
    %c0_64 = arith.constant 0 : index
    %c252 = arith.constant 252 : index
    %c0_65 = arith.constant 0 : index
    %49 = vector.load %arg15[%c0_64, %c252, %c0_65] : memref<1x272x128xbf16, #tpu.memory_space<vmem>>, vector<1x16x128xbf16>
    %c0_66 = arith.constant 0 : index
    %c256_67 = arith.constant 256 : index
    %c0_68 = arith.constant 0 : index
    %50 = vector.load %arg15[%c0_66, %c256_67, %c0_68] : memref<1x272x128xbf16, #tpu.memory_space<vmem>>, vector<1x16x128xbf16>
    %51 = tpu.concatenate %46, %47, %48, %49, %50 in 2 : vector<1x16x128xbf16>, vector<1x16x128xbf16>, vector<1x16x128xbf16>, vector<1x16x128xbf16>, vector<1x16x128xbf16> -> vector<1x16x640xbf16>
    %52 = vector.shape_cast %51 : vector<1x16x640xbf16> to vector<16x640xbf16>
    %cst_69 = arith.constant dense<0.000000e+00> : vector<16x128xf32>
    %53 = tpu.matmul %52, %44, %cst_69 {dimension_numbers = #tpu.dot_dimension_numbers<[1], [0], [0], [1], [0, 0, 1, 1], [], []>} : vector<16x640xbf16>, vector<640x128xbf16>, vector<16x128xf32> -> vector<16x128xf32>
    %54 = vector.broadcast %45 : vector<1x128xf32> to vector<16x128xf32>
    %55 = arith.addf %53, %54 : vector<16x128xf32>
    %cst_70 = arith.constant 0.000000e+00 : f32
    %56 = vector.broadcast %cst_70 : f32 to vector<16x128xf32>
    %57 = arith.maximumf %55, %56 : vector<16x128xf32>
    %58 = arith.truncf %57 : vector<16x128xf32> to vector<16x128xbf16>
    %59 = vector.shape_cast %58 : vector<16x128xbf16> to vector<1x16x128xbf16>
    %c0_71 = arith.constant 0 : index
    %c128_72 = arith.constant 128 : index
    %c0_73 = arith.constant 0 : index
    %60 = vector.load %arg14[%c0_71, %c128_72, %c0_73] : memref<1x144x128xbf16, #tpu.memory_space<vmem>>, vector<1x16x128xbf16>
    tpu.vector_store %arg14[%c0_71, %c128_72, %c0_73], %59 {strides = array<i32>} : memref<1x144x128xbf16, #tpu.memory_space<vmem>>, vector<1x16x128xbf16>,
    %c2 = arith.constant 2 : index
    %c0_74 = arith.constant 0 : index
    %c0_75 = arith.constant 0 : index
    %61 = vector.load %arg4[%c2, %c0_74, %c0_75] : memref<6x640x128xbf16, #tpu.memory_space<vmem>>, vector<1x640x128xbf16>
    %62 = vector.shape_cast %61 : vector<1x640x128xbf16> to vector<640x128xbf16>
    %c2_76 = arith.constant 2 : index
    %c0_77 = arith.constant 0 : index
    %63 = vector.load %arg5[%c2_76, %c0_77] : memref<6x128xf32, #tpu.memory_space<vmem>>, vector<1x128xf32>
    %c0_78 = arith.constant 0 : index
    %c96 = arith.constant 96 : index
    %c0_79 = arith.constant 0 : index
    %64 = vector.load %arg14[%c0_78, %c96, %c0_79] : memref<1x144x128xbf16, #tpu.memory_space<vmem>>, vector<1x16x128xbf16>
    %c0_80 = arith.constant 0 : index
    %c104 = arith.constant 104 : index
    %c0_81 = arith.constant 0 : index
    %65 = vector.load %arg14[%c0_80, %c104, %c0_81] : memref<1x144x128xbf16, #tpu.memory_space<vmem>>, vector<1x16x128xbf16>
    %c0_82 = arith.constant 0 : index
    %c112 = arith.constant 112 : index
    %c0_83 = arith.constant 0 : index
    %66 = vector.load %arg14[%c0_82, %c112, %c0_83] : memref<1x144x128xbf16, #tpu.memory_space<vmem>>, vector<1x16x128xbf16>
    %c0_84 = arith.constant 0 : index
    %c120_85 = arith.constant 120 : index
    %c0_86 = arith.constant 0 : index
    %67 = vector.load %arg14[%c0_84, %c120_85, %c0_86] : memref<1x144x128xbf16, #tpu.memory_space<vmem>>, vector<1x16x128xbf16>
    %c0_87 = arith.constant 0 : index
    %c128_88 = arith.constant 128 : index
    %c0_89 = arith.constant 0 : index
    %68 = vector.load %arg14[%c0_87, %c128_88, %c0_89] : memref<1x144x128xbf16, #tpu.memory_space<vmem>>, vector<1x16x128xbf16>
    %69 = tpu.concatenate %64, %65, %66, %67, %68 in 2 : vector<1x16x128xbf16>, vector<1x16x128xbf16>, vector<1x16x128xbf16>, vector<1x16x128xbf16>, vector<1x16x128xbf16> -> vector<1x16x640xbf16>
    %70 = vector.shape_cast %69 : vector<1x16x640xbf16> to vector<16x640xbf16>
    %cst_90 = arith.constant dense<0.000000e+00> : vector<16x128xf32>
    %71 = tpu.matmul %70, %62, %cst_90 {dimension_numbers = #tpu.dot_dimension_numbers<[1], [0], [0], [1], [0, 0, 1, 1], [], []>} : vector<16x640xbf16>, vector<640x128xbf16>, vector<16x128xf32> -> vector<16x128xf32>
    %72 = vector.broadcast %63 : vector<1x128xf32> to vector<16x128xf32>
    %73 = arith.addf %71, %72 : vector<16x128xf32>
    %cst_91 = arith.constant 0.000000e+00 : f32
    %74 = vector.broadcast %cst_91 : f32 to vector<16x128xf32>
    %75 = arith.maximumf %73, %74 : vector<16x128xf32>
    %76 = arith.truncf %75 : vector<16x128xf32> to vector<16x128xbf16>
    %77 = vector.shape_cast %76 : vector<16x128xbf16> to vector<1x16x128xbf16>
    %c0_92 = arith.constant 0 : index
    %c256_93 = arith.constant 256 : index
    %c0_94 = arith.constant 0 : index
    %78 = vector.load %arg15[%c0_92, %c256_93, %c0_94] : memref<1x272x128xbf16, #tpu.memory_space<vmem>>, vector<1x16x128xbf16>
    tpu.vector_store %arg15[%c0_92, %c256_93, %c0_94], %77 {strides = array<i32>} : memref<1x272x128xbf16, #tpu.memory_space<vmem>>, vector<1x16x128xbf16>,
    %c3 = arith.constant 3 : index
    %c0_95 = arith.constant 0 : index
    %c0_96 = arith.constant 0 : index
    %79 = vector.load %arg4[%c3, %c0_95, %c0_96] : memref<6x640x128xbf16, #tpu.memory_space<vmem>>, vector<1x640x128xbf16>
    %80 = vector.shape_cast %79 : vector<1x640x128xbf16> to vector<640x128xbf16>
    %c3_97 = arith.constant 3 : index
    %c0_98 = arith.constant 0 : index
    %81 = vector.load %arg5[%c3_97, %c0_98] : memref<6x128xf32, #tpu.memory_space<vmem>>, vector<1x128xf32>
    %c0_99 = arith.constant 0 : index
    %c192 = arith.constant 192 : index
    %c0_100 = arith.constant 0 : index
    %82 = vector.load %arg15[%c0_99, %c192, %c0_100] : memref<1x272x128xbf16, #tpu.memory_space<vmem>>, vector<1x16x128xbf16>
    %c0_101 = arith.constant 0 : index
    %c208 = arith.constant 208 : index
    %c0_102 = arith.constant 0 : index
    %83 = vector.load %arg15[%c0_101, %c208, %c0_102] : memref<1x272x128xbf16, #tpu.memory_space<vmem>>, vector<1x16x128xbf16>
    %c0_103 = arith.constant 0 : index
    %c224 = arith.constant 224 : index
    %c0_104 = arith.constant 0 : index
    %84 = vector.load %arg15[%c0_103, %c224, %c0_104] : memref<1x272x128xbf16, #tpu.memory_space<vmem>>, vector<1x16x128xbf16>
    %c0_105 = arith.constant 0 : index
    %c240_106 = arith.constant 240 : index
    %c0_107 = arith.constant 0 : index
    %85 = vector.load %arg15[%c0_105, %c240_106, %c0_107] : memref<1x272x128xbf16, #tpu.memory_space<vmem>>, vector<1x16x128xbf16>
    %c0_108 = arith.constant 0 : index
    %c256_109 = arith.constant 256 : index
    %c0_110 = arith.constant 0 : index
    %86 = vector.load %arg15[%c0_108, %c256_109, %c0_110] : memref<1x272x128xbf16, #tpu.memory_space<vmem>>, vector<1x16x128xbf16>
    %87 = tpu.concatenate %82, %83, %84, %85, %86 in 2 : vector<1x16x128xbf16>, vector<1x16x128xbf16>, vector<1x16x128xbf16>, vector<1x16x128xbf16>, vector<1x16x128xbf16> -> vector<1x16x640xbf16>
    %88 = vector.shape_cast %87 : vector<1x16x640xbf16> to vector<16x640xbf16>
    %cst_111 = arith.constant dense<0.000000e+00> : vector<16x128xf32>
    %89 = tpu.matmul %88, %80, %cst_111 {dimension_numbers = #tpu.dot_dimension_numbers<[1], [0], [0], [1], [0, 0, 1, 1], [], []>} : vector<16x640xbf16>, vector<640x128xbf16>, vector<16x128xf32> -> vector<16x128xf32>
    %90 = vector.broadcast %81 : vector<1x128xf32> to vector<16x128xf32>
    %91 = arith.addf %89, %90 : vector<16x128xf32>
    %cst_112 = arith.constant 0.000000e+00 : f32
    %92 = vector.broadcast %cst_112 : f32 to vector<16x128xf32>
    %93 = arith.maximumf %91, %92 : vector<16x128xf32>
    %94 = arith.truncf %93 : vector<16x128xf32> to vector<16x128xbf16>
    %95 = vector.shape_cast %94 : vector<16x128xbf16> to vector<1x16x128xbf16>
    %c0_113 = arith.constant 0 : index
    %c128_114 = arith.constant 128 : index
    %c0_115 = arith.constant 0 : index
    %96 = vector.load %arg14[%c0_113, %c128_114, %c0_115] : memref<1x144x128xbf16, #tpu.memory_space<vmem>>, vector<1x16x128xbf16>
    tpu.vector_store %arg14[%c0_113, %c128_114, %c0_115], %95 {strides = array<i32>} : memref<1x144x128xbf16, #tpu.memory_space<vmem>>, vector<1x16x128xbf16>,
    %c4 = arith.constant 4 : index
    %c0_116 = arith.constant 0 : index
    %c0_117 = arith.constant 0 : index
    %97 = vector.load %arg4[%c4, %c0_116, %c0_117] : memref<6x640x128xbf16, #tpu.memory_space<vmem>>, vector<1x640x128xbf16>
    %98 = vector.shape_cast %97 : vector<1x640x128xbf16> to vector<640x128xbf16>
    %c4_118 = arith.constant 4 : index
    %c0_119 = arith.constant 0 : index
    %99 = vector.load %arg5[%c4_118, %c0_119] : memref<6x128xf32, #tpu.memory_space<vmem>>, vector<1x128xf32>
    %c0_120 = arith.constant 0 : index
    %c0_121 = arith.constant 0 : index
    %c0_122 = arith.constant 0 : index
    %100 = vector.load %arg14[%c0_120, %c0_121, %c0_122] : memref<1x144x128xbf16, #tpu.memory_space<vmem>>, vector<1x16x128xbf16>
    %c0_123 = arith.constant 0 : index
    %c32 = arith.constant 32 : index
    %c0_124 = arith.constant 0 : index
    %101 = vector.load %arg14[%c0_123, %c32, %c0_124] : memref<1x144x128xbf16, #tpu.memory_space<vmem>>, vector<1x16x128xbf16>
    %c0_125 = arith.constant 0 : index
    %c64 = arith.constant 64 : index
    %c0_126 = arith.constant 0 : index
    %102 = vector.load %arg14[%c0_125, %c64, %c0_126] : memref<1x144x128xbf16, #tpu.memory_space<vmem>>, vector<1x16x128xbf16>
    %c0_127 = arith.constant 0 : index
    %c96_128 = arith.constant 96 : index
    %c0_129 = arith.constant 0 : index
    %103 = vector.load %arg14[%c0_127, %c96_128, %c0_129] : memref<1x144x128xbf16, #tpu.memory_space<vmem>>, vector<1x16x128xbf16>
    %c0_130 = arith.constant 0 : index
    %c128_131 = arith.constant 128 : index
    %c0_132 = arith.constant 0 : index
    %104 = vector.load %arg14[%c0_130, %c128_131, %c0_132] : memref<1x144x128xbf16, #tpu.memory_space<vmem>>, vector<1x16x128xbf16>
    %105 = tpu.concatenate %100, %101, %102, %103, %104 in 2 : vector<1x16x128xbf16>, vector<1x16x128xbf16>, vector<1x16x128xbf16>, vector<1x16x128xbf16>, vector<1x16x128xbf16> -> vector<1x16x640xbf16>
    %106 = vector.shape_cast %105 : vector<1x16x640xbf16> to vector<16x640xbf16>
    %cst_133 = arith.constant dense<0.000000e+00> : vector<16x128xf32>
    %107 = tpu.matmul %106, %98, %cst_133 {dimension_numbers = #tpu.dot_dimension_numbers<[1], [0], [0], [1], [0, 0, 1, 1], [], []>} : vector<16x640xbf16>, vector<640x128xbf16>, vector<16x128xf32> -> vector<16x128xf32>
    %108 = vector.broadcast %99 : vector<1x128xf32> to vector<16x128xf32>
    %109 = arith.addf %107, %108 : vector<16x128xf32>
    %cst_134 = arith.constant 0.000000e+00 : f32
    %110 = vector.broadcast %cst_134 : f32 to vector<16x128xf32>
    %111 = arith.maximumf %109, %110 : vector<16x128xf32>
    %112 = arith.truncf %111 : vector<16x128xf32> to vector<16x128xbf16>
    %113 = vector.shape_cast %112 : vector<16x128xbf16> to vector<1x16x128xbf16>
    %c0_135 = arith.constant 0 : index
    %c256_136 = arith.constant 256 : index
    %c0_137 = arith.constant 0 : index
    %114 = vector.load %arg15[%c0_135, %c256_136, %c0_137] : memref<1x272x128xbf16, #tpu.memory_space<vmem>>, vector<1x16x128xbf16>
    tpu.vector_store %arg15[%c0_135, %c256_136, %c0_137], %113 {strides = array<i32>} : memref<1x272x128xbf16, #tpu.memory_space<vmem>>, vector<1x16x128xbf16>,
    %c0_138 = arith.constant 0 : index
    %c15_139 = arith.constant 15 : index
    %c0_140 = arith.constant 0 : index
    %115 = vector.load %arg15[%c0_138, %c15_139, %c0_140] : memref<1x272x128xbf16, #tpu.memory_space<vmem>>, vector<1x1x128xbf16>
    %c0_141 = arith.constant 0 : index
    %c79 = arith.constant 79 : index
    %c0_142 = arith.constant 0 : index
    %116 = vector.load %arg15[%c0_141, %c79, %c0_142] : memref<1x272x128xbf16, #tpu.memory_space<vmem>>, vector<1x1x128xbf16>
    %c0_143 = arith.constant 0 : index
    %c143 = arith.constant 143 : index
    %c0_144 = arith.constant 0 : index
    %117 = vector.load %arg15[%c0_143, %c143, %c0_144] : memref<1x272x128xbf16, #tpu.memory_space<vmem>>, vector<1x1x128xbf16>
    %c0_145 = arith.constant 0 : index
    %c207 = arith.constant 207 : index
    %c0_146 = arith.constant 0 : index
    %118 = vector.load %arg15[%c0_145, %c207, %c0_146] : memref<1x272x128xbf16, #tpu.memory_space<vmem>>, vector<1x1x128xbf16>
    %c0_147 = arith.constant 0 : index
    %c271 = arith.constant 271 : index
    %c0_148 = arith.constant 0 : index
    %119 = vector.load %arg15[%c0_147, %c271, %c0_148] : memref<1x272x128xbf16, #tpu.memory_space<vmem>>, vector<1x1x128xbf16>
    %120 = tpu.concatenate %115, %116, %117, %118, %119 in 2 : vector<1x1x128xbf16>, vector<1x1x128xbf16>, vector<1x1x128xbf16>, vector<1x1x128xbf16>, vector<1x1x128xbf16> -> vector<1x1x640xbf16>
    %121 = vector.shape_cast %120 : vector<1x1x640xbf16> to vector<1x640xbf16>
    %c5 = arith.constant 5 : index
    %c0_149 = arith.constant 0 : index
    %c0_150 = arith.constant 0 : index
    %122 = vector.load %arg4[%c5, %c0_149, %c0_150] : memref<6x640x128xbf16, #tpu.memory_space<vmem>>, vector<1x640x128xbf16>
    %123 = vector.shape_cast %122 : vector<1x640x128xbf16> to vector<640x128xbf16>
    %cst_151 = arith.constant dense<0.000000e+00> : vector<1x128xf32>
    %124 = tpu.matmul %121, %123, %cst_151 {dimension_numbers = #tpu.dot_dimension_numbers<[1], [0], [0], [1], [0, 0, 1, 1], [], []>} : vector<1x640xbf16>, vector<640x128xbf16>, vector<1x128xf32> -> vector<1x128xf32>
    %c5_152 = arith.constant 5 : index
    %c0_153 = arith.constant 0 : index
    %125 = vector.load %arg5[%c5_152, %c0_153] : memref<6x128xf32, #tpu.memory_space<vmem>>, vector<1x128xf32>
    %126 = arith.addf %124, %125 : vector<1x128xf32>
    %cst_154 = arith.constant 0.000000e+00 : f32
    %127 = vector.broadcast %cst_154 : f32 to vector<1x128xf32>
    %128 = arith.maximumf %126, %127 : vector<1x128xf32>
    %c0_155 = arith.constant 0 : index
    %c0_156 = arith.constant 0 : index
    %129 = vector.load %arg6[%c0_155, %c0_156] : memref<128x64xf32, #tpu.memory_space<vmem>>, vector<128x64xf32>
    %cst_157 = arith.constant dense<0.000000e+00> : vector<1x64xf32>
    %130 = tpu.matmul %128, %129, %cst_157 {dimension_numbers = #tpu.dot_dimension_numbers<[1], [0], [0], [1], [0, 0, 1, 1], [], []>} : vector<1x128xf32>, vector<128x64xf32>, vector<1x64xf32> -> vector<1x64xf32>
    %c0_158 = arith.constant 0 : index
    %c0_159 = arith.constant 0 : index
    %131 = vector.load %arg7[%c0_158, %c0_159] : memref<1x64xf32, #tpu.memory_space<vmem>>, vector<1x64xf32>
    %132 = arith.addf %130, %131 : vector<1x64xf32>
    %cst_160 = arith.constant 0.000000e+00 : f32
    %133 = vector.broadcast %cst_160 : f32 to vector<1x64xf32>
    %134 = arith.maximumf %132, %133 : vector<1x64xf32>
    %c0_161 = arith.constant 0 : index
    %c0_162 = arith.constant 0 : index
    %135 = vector.load %arg8[%c0_161, %c0_162] : memref<64x32xf32, #tpu.memory_space<vmem>>, vector<64x32xf32>
    %cst_163 = arith.constant dense<0.000000e+00> : vector<1x32xf32>
    %136 = tpu.matmul %134, %135, %cst_163 {dimension_numbers = #tpu.dot_dimension_numbers<[1], [0], [0], [1], [0, 0, 1, 1], [], []>} : vector<1x64xf32>, vector<64x32xf32>, vector<1x32xf32> -> vector<1x32xf32>
    %c0_164 = arith.constant 0 : index
    %c0_165 = arith.constant 0 : index
    %137 = vector.load %arg9[%c0_164, %c0_165] : memref<1x32xf32, #tpu.memory_space<vmem>>, vector<1x32xf32>
    %138 = arith.addf %136, %137 : vector<1x32xf32>
    %cst_166 = arith.constant 0.000000e+00 : f32
    %139 = vector.broadcast %cst_166 : f32 to vector<1x32xf32>
    %140 = arith.maximumf %138, %139 : vector<1x32xf32>
    %c0_167 = arith.constant 0 : index
    %c0_168 = arith.constant 0 : index
    %141 = vector.load %arg10[%c0_167, %c0_168] : memref<32x1xf32, #tpu.memory_space<vmem>>, vector<32x1xf32>
    %cst_169 = arith.constant dense<0.000000e+00> : vector<1x1xf32>
    %142 = tpu.matmul %140, %141, %cst_169 {dimension_numbers = #tpu.dot_dimension_numbers<[1], [0], [0], [1], [0, 0, 1, 1], [], []>} : vector<1x32xf32>, vector<32x1xf32>, vector<1x1xf32> -> vector<1x1xf32>
    %c0_170 = arith.constant 0 : index
    %c0_171 = arith.constant 0 : index
    %143 = vector.load %arg11[%c0_170, %c0_171] : memref<1x1xf32, #tpu.memory_space<vmem>>, vector<1x1xf32>
    %144 = arith.addf %142, %143 : vector<1x1xf32>
    %145 = vector.shape_cast %144 : vector<1x1xf32> to vector<1x1x1xf32>
    %c0_172 = arith.constant 0 : index
    %c0_173 = arith.constant 0 : index
    %c0_174 = arith.constant 0 : index
    %146 = vector.load %arg12[%c0_172, %c0_173, %c0_174] : memref<1x1x1xf32, #tpu.memory_space<vmem>>, vector<1x1x1xf32>
    tpu.vector_store %arg12[%c0_172, %c0_173, %c0_174], %145 {strides = array<i32>} : memref<1x1x1xf32, #tpu.memory_space<vmem>>, vector<1x1x1xf32>,
    return
  }
  func.func @transform_0(%arg0: i32) -> (i32, i32, i32) {
    %c0_i32 = arith.constant 0 : i32
    %c0_i32_0 = arith.constant 0 : i32
    %c0_i32_1 = arith.constant 0 : i32
    return %arg0, %c0_i32, %c0_i32_0 : i32, i32, i32
  }
  func.func @transform_1(%arg0: i32) -> (i32, i32) {
    %c0_i32 = arith.constant 0 : i32
    %c0_i32_0 = arith.constant 0 : i32
    %c0_i32_1 = arith.constant 0 : i32
    return %c0_i32, %c0_i32_0 : i32, i32
  }
  func.func @transform_2(%arg0: i32) -> (i32, i32) {
    %c0_i32 = arith.constant 0 : i32
    %c0_i32_0 = arith.constant 0 : i32
    %c0_i32_1 = arith.constant 0 : i32
    return %c0_i32, %c0_i32_0 : i32, i32
  }
  func.func @transform_3(%arg0: i32) -> (i32, i32, i32) {
    %c0_i32 = arith.constant 0 : i32
    %c0_i32_0 = arith.constant 0 : i32
    %c0_i32_1 = arith.constant 0 : i32
    %c0_i32_2 = arith.constant 0 : i32
    return %c0_i32, %c0_i32_0, %c0_i32_1 : i32, i32, i32
  }
  func.func @transform_4(%arg0: i32) -> (i32, i32) {
    %c0_i32 = arith.constant 0 : i32
    %c0_i32_0 = arith.constant 0 : i32
    %c0_i32_1 = arith.constant 0 : i32
    return %c0_i32, %c0_i32_0 : i32, i32
  }
  func.func @transform_5(%arg0: i32) -> (i32, i32) {
    %c0_i32 = arith.constant 0 : i32
    %c0_i32_0 = arith.constant 0 : i32
    %c0_i32_1 = arith.constant 0 : i32
    return %c0_i32, %c0_i32_0 : i32, i32
  }
  func.func @transform_6(%arg0: i32) -> (i32, i32) {
    %c0_i32 = arith.constant 0 : i32
    %c0_i32_0 = arith.constant 0 : i32
    %c0_i32_1 = arith.constant 0 : i32
    return %c0_i32, %c0_i32_0 : i32, i32
  }
  func.func @transform_7(%arg0: i32) -> (i32, i32) {
    %c0_i32 = arith.constant 0 : i32
    %c0_i32_0 = arith.constant 0 : i32
    %c0_i32_1 = arith.constant 0 : i32
    return %c0_i32, %c0_i32_0 : i32, i32
  }
  func.func @transform_8(%arg0: i32) -> (i32, i32) {
    %c0_i32 = arith.constant 0 : i32
    %c0_i32_0 = arith.constant 0 : i32
    %c0_i32_1 = arith.constant 0 : i32
    return %c0_i32, %c0_i32_0 : i32, i32
  }
  func.func @transform_9(%arg0: i32) -> (i32, i32) {
    %c0_i32 = arith.constant 0 : i32
    %c0_i32_0 = arith.constant 0 : i32
    %c0_i32_1 = arith.constant 0 : i32
    return %c0_i32, %c0_i32_0 : i32, i32
  }
  func.func @transform_10(%arg0: i32) -> (i32, i32) {
    %c0_i32 = arith.constant 0 : i32
    %c0_i32_0 = arith.constant 0 : i32
    %c0_i32_1 = arith.constant 0 : i32
    return %c0_i32, %c0_i32_0 : i32, i32
  }
  func.func @transform_11(%arg0: i32) -> (i32, i32, i32) {
    %c0_i32 = arith.constant 0 : i32
    %c0_i32_0 = arith.constant 0 : i32
    %c0_i32_1 = arith.constant 0 : i32
    return %arg0, %c0_i32, %c0_i32_0 : i32, i32, i32
  }
}

</mosaic_0001>

<llo_original>
// kernel: single_ccnn_forward.1
$region0: #{single_ccnn_forward.1}
  #allocation0 [shape = 'u32[]', space=smem, size = 0x4, offset = 0x4, fixed_abs, tag = 'smem constant byte address 0x4 - core index']
  #allocation1 [shape = 'u32[144,128]{1,0:T(1,128)}', space=vmem, size = 0x12000, scoped, tag = 'internal scratch']
  #allocation2 [shape = 'bf16[1,32,384]{2,1,0:T(16,128)(2,1)}', space=vmem, size = 0x6000, scoped, tag = 'scratch operand']
  #allocation3 [shape = 'bf16[1,144,128]{2,1,0:T(16,128)(2,1)}', space=vmem, size = 0x9000, scoped, tag = 'scratch operand']
  #allocation4 [shape = 'bf16[1,272,128]{2,1,0:T(16,128)(2,1)}', space=vmem, size = 0x11000, scoped, tag = 'scratch operand']
  #allocation5 [shape = 'f32[1,1]{1,0:T(1,128)S(1)}', space=vmem, size = 0x200, scoped, tag = 'scoped memory for single_ccnn_forward.1']
  %s0 = inlined_call_operand.vmem [shape: bf16[2,16,384], index: 0, kind: input, shape index: {}]
  %s1 = inlined_call_operand.hbm [shape: bf16[1920,128], index: 1, kind: input, shape index: {}]
  %s2 = inlined_call_operand.vmem [shape: f32[1,128], index: 2, kind: input, shape index: {}]
  %s3 = inlined_call_operand.hbm [shape: bf16[6,640,128], index: 3, kind: input, shape index: {}]
  %s4 = inlined_call_operand.vmem [shape: f32[6,128], index: 4, kind: input, shape index: {}]
  %s5 = inlined_call_operand.vmem [shape: f32[128,64], index: 5, kind: input, shape index: {}]
  %s6 = inlined_call_operand.vmem [shape: f32[1,64], index: 6, kind: input, shape index: {}]
  %s7 = inlined_call_operand.vmem [shape: f32[64,32], index: 7, kind: input, shape index: {}]
  %s8 = inlined_call_operand.vmem [shape: f32[1,32], index: 8, kind: input, shape index: {}]
  %s9 = inlined_call_operand.vmem [shape: f32[32,1], index: 9, kind: input, shape index: {}]
  %s10 = inlined_call_operand.<no memory space> [shape: f32[1,1], index: 10, kind: input, shape index: {}]
  %s11 = inlined_call_operand.vmem [shape: f32[2,1,1], index: 11, kind: output, shape index: {}]
  %s12 = sld [smem:[#allocation0]]
  $region85: #{single_ccnn_forward.1} parent=0
    _
  %s14 = ssub.s32 1, %s12
  %s15 = scalar_select 0, %s14, %s12
  %v16 = vstv %s10
  %17 = vst [vmem:[#allocation5] sm:$0x1] %v16
  $region1: #{single_ccnn_forward.1} parent=0
    #allocation6 [shape = 'u8[491520]{0}', space=vmem, size = 0x78000, scoped, tag = 'input window, operand 1, single buffered']
    #allocation7 [shape = 's32[2]{0}', space=sflag, size = 0x8, scoped, tag = 'scoped memory for single_ccnn_forward.1']
    #allocation8 [shape = 'u8[983040]{0}', space=vmem, size = 0xf0000, scoped, tag = 'input window, operand 3, single buffered']
    #allocation9 [shape = 's32[1]{0}', space=sflag, size = 0x4, scoped, tag = 'scoped memory for single_ccnn_forward.1']
    %18 = vsyncpa [#allocation7], 0
    %19 = vsyncpa [#allocation9], 0
    loop: start=0, step=1, limit=4
    $region2: #{single_ccnn_forward.1} parent=1 // loop_pre_header
      _
    $region3: #{single_ccnn_forward.1} parent=1 // loop_header
      %s21 = sphi 0, %s25
      %p22 = scmp.ge.s32.totalorder %s21, 4
      %s31 = sphi 0, %s33
      %s34 = sphi 0, %s31
      %s35 = sphi 0, %s34
      %s51 = sphi 0, %s35
      %s55 = sphi 0, %s55
      %s57 = sphi 0, %s55
      %s58 = sphi 0, %s57
      %s72 = sphi 0, %s58
      %s76 = sphi 0, %s76
      %s78 = sphi 0, %s76
      %s79 = sphi 0, %s78
      %s93 = sphi 0, %s79
      %s97 = sphi 0, %s97
      %s99 = sphi 0, %s97
      %s100 = sphi 0, %s99
      %s114 = sphi 0, %s100
      %s118 = sphi 0, %s118
      %s120 = sphi 0, %s118
      %s121 = sphi 0, %s120
      %s135 = sphi 0, %s121
      %s139 = sphi 0, %s139
      %s141 = sphi 0, %s139
      %s142 = sphi 0, %s141
      %s156 = sphi 0, %s142
      %s160 = sphi 0, %s160
      %s162 = sphi 0, %s160
      %s163 = sphi 0, %s162
      %s177 = sphi 0, %s163
      %s181 = sphi 0, %s181
      %s183 = sphi 0, %s181
      %s184 = sphi 0, %s183
      %s198 = sphi 0, %s184
      %s202 = sphi 0, %s202
      %s204 = sphi 0, %s202
      %s205 = sphi 0, %s204
      %s219 = sphi 0, %s205
      %s223 = sphi 0, %s223
      %s225 = sphi 0, %s223
      %s226 = sphi 0, %s225
      %s240 = sphi 0, %s226
      %s244 = sphi 0, %s244
      %s246 = sphi 0, %s244
      %s247 = sphi 0, %s246
      %s261 = sphi 0, %s247
      %s267 = sphi 0, %s269
      %s270 = sphi 0, %s267
      %s271 = sphi 0, %s270
      %s287 = sphi 0, %s271
    $region4: #{single_ccnn_forward.1} parent=1 // loop_header_branch
      %24 = sbr.rel (%p22) target = $region8
    $region5: #{single_ccnn_forward.1} parent=1 // loop_body
      %s26 = ssub.s32 %s21, 1
      %s27 = ssub.s32 %s21, 2
      %s28 = sadd.s32 %s21, 1
      %s29 = ssub.s32 %s21, %s28
      %p30 = scmp.eq.s32.totalorder %s29, 0
      %s32 = sadd.s32 %s31, 1
      %s33 = scalar_select %p30, %s31, %s32
      %p36 = pneg %p30
      %p37 = scmp.eq.s32.totalorder %s21, 1
      %p38 = por %p36, %p37
      %p39 = scmp.ne.s32.totalorder %s31, %s34
      %p40 = scmp.eq.s32.totalorder %s21, 0
      %p41 = por %p39, %p40
      %p42 = scmp.ne.s32.totalorder %s31, %s34
      %p43 = scmp.eq.s32.totalorder %s26, 1
      %p44 = por %p42, %p43
      %p45 = scmp.ne.s32.totalorder %s34, %s35
      %p46 = scmp.eq.s32.totalorder %s26, 0
      %p47 = por %p45, %p46
      %p48 = scmp.ne.s32.totalorder %s34, %s35
      %p49 = scmp.eq.s32.totalorder %s27, 1
      %p50 = por %p48, %p49
      %p52 = scmp.ne.s32.totalorder %s35, %s51
      %p53 = scmp.eq.s32.totalorder %s27, 0
      %p54 = por %p52, %p53
      %s56 = sadd.s32 %s55, 1
      %p59 = scmp.eq.s32.totalorder %s21, 1
      %p60 = scmp.ne.s32.totalorder %s55, %s57
      %p61 = scmp.eq.s32.totalorder %s21, 0
      %p62 = por %p60, %p61
      %p63 = scmp.ne.s32.totalorder %s55, %s57
      %p64 = scmp.eq.s32.totalorder %s26, 1
      %p65 = por %p63, %p64
      %p66 = scmp.ne.s32.totalorder %s57, %s58
      %p67 = scmp.eq.s32.totalorder %s26, 0
      %p68 = por %p66, %p67
      %p69 = scmp.ne.s32.totalorder %s57, %s58
      %p70 = scmp.eq.s32.totalorder %s27, 1
      %p71 = por %p69, %p70
      %p73 = scmp.ne.s32.totalorder %s58, %s72
      %p74 = scmp.eq.s32.totalorder %s27, 0
      %p75 = por %p73, %p74
      %s77 = sadd.s32 %s76, 1
      %p80 = scmp.eq.s32.totalorder %s21, 1
      %p81 = scmp.ne.s32.totalorder %s76, %s78
      %p82 = scmp.eq.s32.totalorder %s21, 0
      %p83 = por %p81, %p82
      %p84 = scmp.ne.s32.totalorder %s76, %s78
      %p85 = scmp.eq.s32.totalorder %s26, 1
      %p86 = por %p84, %p85
      %p87 = scmp.ne.s32.totalorder %s78, %s79
      %p88 = scmp.eq.s32.totalorder %s26, 0
      %p89 = por %p87, %p88
      %p90 = scmp.ne.s32.totalorder %s78, %s79
      %p91 = scmp.eq.s32.totalorder %s27, 1
      %p92 = por %p90, %p91
      %p94 = scmp.ne.s32.totalorder %s79, %s93
      %p95 = scmp.eq.s32.totalorder %s27, 0
      %p96 = por %p94, %p95
      %s98 = sadd.s32 %s97, 1
      %p101 = scmp.eq.s32.totalorder %s21, 1
      %p102 = scmp.ne.s32.totalorder %s97, %s99
      %p103 = scmp.eq.s32.totalorder %s21, 0
      %p104 = por %p102, %p103
      %p105 = scmp.ne.s32.totalorder %s97, %s99
      %p106 = scmp.eq.s32.totalorder %s26, 1
      %p107 = por %p105, %p106
      %p108 = scmp.ne.s32.totalorder %s99, %s100
      %p109 = scmp.eq.s32.totalorder %s26, 0
      %p110 = por %p108, %p109
      %p111 = scmp.ne.s32.totalorder %s99, %s100
      %p112 = scmp.eq.s32.totalorder %s27, 1
      %p113 = por %p111, %p112
      %p115 = scmp.ne.s32.totalorder %s100, %s114
      %p116 = scmp.eq.s32.totalorder %s27, 0
      %p117 = por %p115, %p116
      %s119 = sadd.s32 %s118, 1
      %p122 = scmp.eq.s32.totalorder %s21, 1
      %p123 = scmp.ne.s32.totalorder %s118, %s120
      %p124 = scmp.eq.s32.totalorder %s21, 0
      %p125 = por %p123, %p124
      %p126 = scmp.ne.s32.totalorder %s118, %s120
      %p127 = scmp.eq.s32.totalorder %s26, 1
      %p128 = por %p126, %p127
      %p129 = scmp.ne.s32.totalorder %s120, %s121
      %p130 = scmp.eq.s32.totalorder %s26, 0
      %p131 = por %p129, %p130
      %p132 = scmp.ne.s32.totalorder %s120, %s121
      %p133 = scmp.eq.s32.totalorder %s27, 1
      %p134 = por %p132, %p133
      %p136 = scmp.ne.s32.totalorder %s121, %s135
      %p137 = scmp.eq.s32.totalorder %s27, 0
      %p138 = por %p136, %p137
      %s140 = sadd.s32 %s139, 1
      %p143 = scmp.eq.s32.totalorder %s21, 1
      %p144 = scmp.ne.s32.totalorder %s139, %s141
      %p145 = scmp.eq.s32.totalorder %s21, 0
      %p146 = por %p144, %p145
      %p147 = scmp.ne.s32.totalorder %s139, %s141
      %p148 = scmp.eq.s32.totalorder %s26, 1
      %p149 = por %p147, %p148
      %p150 = scmp.ne.s32.totalorder %s141, %s142
      %p151 = scmp.eq.s32.totalorder %s26, 0
      %p152 = por %p150, %p151
      %p153 = scmp.ne.s32.totalorder %s141, %s142
      %p154 = scmp.eq.s32.totalorder %s27, 1
      %p155 = por %p153, %p154
      %p157 = scmp.ne.s32.totalorder %s142, %s156
      %p158 = scmp.eq.s32.totalorder %s27, 0
      %p159 = por %p157, %p158
      %s161 = sadd.s32 %s160, 1
      %p164 = scmp.eq.s32.totalorder %s21, 1
      %p165 = scmp.ne.s32.totalorder %s160, %s162
      %p166 = scmp.eq.s32.totalorder %s21, 0
      %p167 = por %p165, %p166
      %p168 = scmp.ne.s32.totalorder %s160, %s162
      %p169 = scmp.eq.s32.totalorder %s26, 1
      %p170 = por %p168, %p169
      %p171 = scmp.ne.s32.totalorder %s162, %s163
      %p172 = scmp.eq.s32.totalorder %s26, 0
      %p173 = por %p171, %p172
      %p174 = scmp.ne.s32.totalorder %s162, %s163
      %p175 = scmp.eq.s32.totalorder %s27, 1
      %p176 = por %p174, %p175
      %p178 = scmp.ne.s32.totalorder %s163, %s177
      %p179 = scmp.eq.s32.totalorder %s27, 0
      %p180 = por %p178, %p179
      %s182 = sadd.s32 %s181, 1
      %p185 = scmp.eq.s32.totalorder %s21, 1
      %p186 = scmp.ne.s32.totalorder %s181, %s183
      %p187 = scmp.eq.s32.totalorder %s21, 0
      %p188 = por %p186, %p187
      %p189 = scmp.ne.s32.totalorder %s181, %s183
      %p190 = scmp.eq.s32.totalorder %s26, 1
      %p191 = por %p189, %p190
      %p192 = scmp.ne.s32.totalorder %s183, %s184
      %p193 = scmp.eq.s32.totalorder %s26, 0
      %p194 = por %p192, %p193
      %p195 = scmp.ne.s32.totalorder %s183, %s184
      %p196 = scmp.eq.s32.totalorder %s27, 1
      %p197 = por %p195, %p196
      %p199 = scmp.ne.s32.totalorder %s184, %s198
      %p200 = scmp.eq.s32.totalorder %s27, 0
      %p201 = por %p199, %p200
      %s203 = sadd.s32 %s202, 1
      %p206 = scmp.eq.s32.totalorder %s21, 1
      %p207 = scmp.ne.s32.totalorder %s202, %s204
      %p208 = scmp.eq.s32.totalorder %s21, 0
      %p209 = por %p207, %p208
      %p210 = scmp.ne.s32.totalorder %s202, %s204
      %p211 = scmp.eq.s32.totalorder %s26, 1
      %p212 = por %p210, %p211
      %p213 = scmp.ne.s32.totalorder %s204, %s205
      %p214 = scmp.eq.s32.totalorder %s26, 0
      %p215 = por %p213, %p214
      %p216 = scmp.ne.s32.totalorder %s204, %s205
      %p217 = scmp.eq.s32.totalorder %s27, 1
      %p218 = por %p216, %p217
      %p220 = scmp.ne.s32.totalorder %s205, %s219
      %p221 = scmp.eq.s32.totalorder %s27, 0
      %p222 = por %p220, %p221
      %s224 = sadd.s32 %s223, 1
      %p227 = scmp.eq.s32.totalorder %s21, 1
      %p228 = scmp.ne.s32.totalorder %s223, %s225
      %p229 = scmp.eq.s32.totalorder %s21, 0
      %p230 = por %p228, %p229
      %p231 = scmp.ne.s32.totalorder %s223, %s225
      %p232 = scmp.eq.s32.totalorder %s26, 1
      %p233 = por %p231, %p232
      %p234 = scmp.ne.s32.totalorder %s225, %s226
      %p235 = scmp.eq.s32.totalorder %s26, 0
      %p236 = por %p234, %p235
      %p237 = scmp.ne.s32.totalorder %s225, %s226
      %p238 = scmp.eq.s32.totalorder %s27, 1
      %p239 = por %p237, %p238
      %p241 = scmp.ne.s32.totalorder %s226, %s240
      %p242 = scmp.eq.s32.totalorder %s27, 0
      %p243 = por %p241, %p242
      %s245 = sadd.s32 %s244, 1
      %p248 = scmp.eq.s32.totalorder %s21, 1
      %p249 = scmp.ne.s32.totalorder %s244, %s246
      %p250 = scmp.eq.s32.totalorder %s21, 0
      %p251 = por %p249, %p250
      %p252 = scmp.ne.s32.totalorder %s244, %s246
      %p253 = scmp.eq.s32.totalorder %s26, 1
      %p254 = por %p252, %p253
      %p255 = scmp.ne.s32.totalorder %s246, %s247
      %p256 = scmp.eq.s32.totalorder %s26, 0
      %p257 = por %p255, %p256
      %p258 = scmp.ne.s32.totalorder %s246, %s247
      %p259 = scmp.eq.s32.totalorder %s27, 1
      %p260 = por %p258, %p259
      %p262 = scmp.ne.s32.totalorder %s247, %s261
      %p263 = scmp.eq.s32.totalorder %s27, 0
      %p264 = por %p262, %p263
      %s265 = ssub.s32 %s21, %s28
      %p266 = scmp.eq.s32.totalorder %s265, 0
      %s268 = sadd.s32 %s267, 1
      %s269 = scalar_select %p266, %s267, %s268
      %p272 = pneg %p266
      %p273 = scmp.eq.s32.totalorder %s21, 1
      %p274 = por %p272, %p273
      %p275 = scmp.ne.s32.totalorder %s267, %s270
      %p276 = scmp.eq.s32.totalorder %s21, 0
      %p277 = por %p275, %p276
      %p278 = scmp.ne.s32.totalorder %s267, %s270
      %p279 = scmp.eq.s32.totalorder %s26, 1
      %p280 = por %p278, %p279
      %p281 = scmp.ne.s32.totalorder %s270, %s271
      %p282 = scmp.eq.s32.totalorder %s26, 0
      %p283 = por %p281, %p282
      %p284 = scmp.ne.s32.totalorder %s270, %s271
      %p285 = scmp.eq.s32.totalorder %s27, 1
      %p286 = por %p284, %p285
      %p288 = scmp.ne.s32.totalorder %s271, %s287
      %p289 = scmp.eq.s32.totalorder %s27, 0
      %p290 = por %p288, %p289
      %p291 = scmp.le.s32.totalorder 1, %s21
      %p292 = scmp.lt.s32.totalorder %s21, 3
      %p293 = pnand %p291, %p292
      %p294 = pneg %p293
      // Predicated region
      $region9: #{single_ccnn_forward.1} parent=5 // pred_check
        _
      $region10: #{single_ccnn_forward.1} parent=5 // pred_check_branch
        %296 = sbr.rel (%p293) target = $region12
      $region11: #{single_ccnn_forward.1} parent=5 // pred_region
        %s297 = ssub.s32 %s21, 1
        // Predicated region
        $region13: #{single_ccnn_forward.1} parent=11 // pred_check
          %p298 = pneg %p68
        $region14: #{single_ccnn_forward.1} parent=11 // pred_check_branch
          %300 = sbr.rel (%p298) target = $region16
        $region15: #{single_ccnn_forward.1} parent=11 // pred_region
          %s302 = ssub.s32 15360, 15360
          %303 = vsyncadd [#allocation7], %s302
          %s304 = sshll.u32 [#allocation6], 4
          %s305 = int_to_ptr.vmem [resolvable:$true] %s304
          %310 = dma.hbm_to_vmem [thread:$0]  %s1, 15360, %s305, [#allocation7], 64, 64, 4
        $region16: #{single_ccnn_forward.1} parent=11 // pred_fallthru
          _
        // Predicated region
        $region17: #{single_ccnn_forward.1} parent=11 // pred_check
          %p311 = pneg %p89
        $region18: #{single_ccnn_forward.1} parent=11 // pred_check_branch
          %313 = sbr.rel (%p311) target = $region20
        $region19: #{single_ccnn_forward.1} parent=11 // pred_region
          _
        $region20: #{single_ccnn_forward.1} parent=11 // pred_fallthru
          _
        // Predicated region
        $region21: #{single_ccnn_forward.1} parent=11 // pred_check
          %p314 = pneg %p110
        $region22: #{single_ccnn_forward.1} parent=11 // pred_check_branch
          %316 = sbr.rel (%p314) target = $region24
        $region23: #{single_ccnn_forward.1} parent=11 // pred_region
          %s318 = ssub.s32 30720, 30720
          %319 = vsyncadd [#allocation9], %s318
          %s320 = sshll.u32 [#allocation8], 4
          %s321 = int_to_ptr.vmem [resolvable:$true] %s320
          %326 = dma.hbm_to_vmem [thread:$0]  %s3, 30720, %s321, [#allocation9], 64, 64, 4
        $region24: #{single_ccnn_forward.1} parent=11 // pred_fallthru
          _
        // Predicated region
        $region25: #{single_ccnn_forward.1} parent=11 // pred_check
          %p327 = pneg %p131
        $region26: #{single_ccnn_forward.1} parent=11 // pred_check_branch
          %329 = sbr.rel (%p327) target = $region28
        $region27: #{single_ccnn_forward.1} parent=11 // pred_region
          _
        $region28: #{single_ccnn_forward.1} parent=11 // pred_fallthru
          _
        // Predicated region
        $region29: #{single_ccnn_forward.1} parent=11 // pred_check
          %p330 = pneg %p152
        $region30: #{single_ccnn_forward.1} parent=11 // pred_check_branch
          %332 = sbr.rel (%p330) target = $region32
        $region31: #{single_ccnn_forward.1} parent=11 // pred_region
          _
        $region32: #{single_ccnn_forward.1} parent=11 // pred_fallthru
          _
        // Predicated region
        $region33: #{single_ccnn_forward.1} parent=11 // pred_check
          %p333 = pneg %p173
        $region34: #{single_ccnn_forward.1} parent=11 // pred_check_branch
          %335 = sbr.rel (%p333) target = $region36
        $region35: #{single_ccnn_forward.1} parent=11 // pred_region
          _
        $region36: #{single_ccnn_forward.1} parent=11 // pred_fallthru
          _
        // Predicated region
        $region37: #{single_ccnn_forward.1} parent=11 // pred_check
          %p336 = pneg %p194
        $region38: #{single_ccnn_forward.1} parent=11 // pred_check_branch
          %338 = sbr.rel (%p336) target = $region40
        $region39: #{single_ccnn_forward.1} parent=11 // pred_region
          _
        $region40: #{single_ccnn_forward.1} parent=11 // pred_fallthru
          _
        // Predicated region
        $region41: #{single_ccnn_forward.1} parent=11 // pred_check
          %p339 = pneg %p215
        $region42: #{single_ccnn_forward.1} parent=11 // pred_check_branch
          %341 = sbr.rel (%p339) target = $region44
        $region43: #{single_ccnn_forward.1} parent=11 // pred_region
          _
        $region44: #{single_ccnn_forward.1} parent=11 // pred_fallthru
          _
        // Predicated region
        $region45: #{single_ccnn_forward.1} parent=11 // pred_check
          %p342 = pneg %p236
        $region46: #{single_ccnn_forward.1} parent=11 // pred_check_branch
          %344 = sbr.rel (%p342) target = $region48
        $region47: #{single_ccnn_forward.1} parent=11 // pred_region
          _
        $region48: #{single_ccnn_forward.1} parent=11 // pred_fallthru
          _
        // Predicated region
        $region49: #{single_ccnn_forward.1} parent=11 // pred_check
          %p345 = pneg %p257
        $region50: #{single_ccnn_forward.1} parent=11 // pred_check_branch
          %347 = sbr.rel (%p345) target = $region52
        $region51: #{single_ccnn_forward.1} parent=11 // pred_region
          _
        $region52: #{single_ccnn_forward.1} parent=11 // pred_fallthru
          _
      $region12: #{single_ccnn_forward.1} parent=5 // pred_fallthru
        _
      %p348 = scmp.lt.s32.totalorder %s21, 2
      // Predicated region
      $region53: #{single_ccnn_forward.1} parent=5 // pred_check
        %p349 = pneg %p348
      $region54: #{single_ccnn_forward.1} parent=5 // pred_check_branch
        %351 = sbr.rel (%p349) target = $region56
      $region55: #{single_ccnn_forward.1} parent=5 // pred_region
        // Predicated region
        $region57: #{single_ccnn_forward.1} parent=55 // pred_check
          %p352 = pneg %p41
        $region58: #{single_ccnn_forward.1} parent=55 // pred_check_branch
          %354 = sbr.rel (%p352) target = $region60
        $region59: #{single_ccnn_forward.1} parent=55 // pred_region
          %p355 = scmp.lt.s32.totalorder %s21, 1
          %s356 = scalar_select %p355, %s21, 1
          %s357 = smul.addr %s356, 6
          %s358 = smul.addr %s357, 4
          %s359 = scalar_lea.vmem %s0, %s358
        $region60: #{single_ccnn_forward.1} parent=55 // pred_fallthru
          _
      $region56: #{single_ccnn_forward.1} parent=5 // pred_fallthru
        _
      %p360 = scmp.le.s32.totalorder 1, %s21
      %p361 = scmp.lt.s32.totalorder %s21, 3
      %p362 = pnand %p360, %p361
      %p363 = pneg %p362
      // Predicated region
      $region61: #{single_ccnn_forward.1} parent=5 // pred_check
        _
      $region62: #{single_ccnn_forward.1} parent=5 // pred_check_branch
        %365 = sbr.rel (%p362) target = $region64
      $region63: #{single_ccnn_forward.1} parent=5 // pred_region
        %s366 = ssub.s32 %s21, 1
        // Predicated region
        $region65: #{single_ccnn_forward.1} parent=63 // pred_check
          %p367 = pneg %p68
        $region66: #{single_ccnn_forward.1} parent=63 // pred_check_branch
          %369 = sbr.rel (%p367) target = $region68
        $region67: #{single_ccnn_forward.1} parent=63 // pred_region
          %370 = dma.done [#allocation7], 15360
        $region68: #{single_ccnn_forward.1} parent=63 // pred_fallthru
          _
        // Predicated region
        $region69: #{single_ccnn_forward.1} parent=63 // pred_check
          %p371 = pneg %p110
        $region70: #{single_ccnn_forward.1} parent=63 // pred_check_branch
          %373 = sbr.rel (%p371) target = $region72
        $region71: #{single_ccnn_forward.1} parent=63 // pred_region
          %374 = dma.done [#allocation9], 30720
        $region72: #{single_ccnn_forward.1} parent=63 // pred_fallthru
          _
        %p375 = scmp.lt.s32.totalorder %s26, 1
        %s376 = scalar_select %p375, %s26, 1
        %s377 = smul.addr %s376, 6
        %s378 = smul.addr %s377, 4
        %s379 = scalar_lea.vmem %s0, %s378
        %p380 = pneg %p47
        %p381 = pneg %p44
        %p382 = pneg %p68
        %p383 = pneg %p65
        %p384 = pneg %p89
        %p385 = pneg %p86
        %p386 = pneg %p110
        %p387 = pneg %p107
        %p388 = pneg %p131
        %p389 = pneg %p128
        %p390 = pneg %p152
        %p391 = pneg %p149
        %p392 = pneg %p173
        %p393 = pneg %p170
        %p394 = pneg %p194
        %p395 = pneg %p191
        %p396 = pneg %p215
        %p397 = pneg %p212
        %p398 = pneg %p236
        %p399 = pneg %p233
        %p400 = pneg %p257
        %p401 = pneg %p254
        %p402 = pneg %p283
        %p403 = pneg %p280
        %p404 = scmp.lt.s32.totalorder %s26, 1
        %s405 = scalar_select %p404, %s26, 1
        %s406 = scalar_lea.vmem %s11, %s405
        %p407 = scmp.lt.s32.totalorder %s26, 1
        %s408 = scalar_select %p407, %s26, 1
        %s409 = smul.addr %s408, 6
        %s410 = smul.addr %s409, 4
        %s411 = scalar_lea.vmem %s0, %s410
        %p412 = scmp.lt.s32.totalorder %s26, 1
        %s413 = scalar_select %p412, %s26, 1
        %s414 = scalar_lea.vmem %s11, %s413
        %416 = vst [vmem:[#allocation2] sm:$0xff] 0
        %417 = vst [vmem:[#allocation2 + $0x8] sm:$0xff] 0
        %418 = vst [vmem:[#allocation2 + $0x10] sm:$0xff] 0
        %v419 = vld [vmem:[%s411] sm:$0xff]
        %v420 = vld [vmem:[%s411 + $0x8] sm:$0xf]
        %v421 = vld [vmem:[%s411 + $0xc] sm:$0xff]
        %v422 = vld [vmem:[%s411 + $0x14] sm:$0xf]
        %v427 = vunpack.c.l.b16 %v419
        %v428 = vunpack.c.h.b16 %v419
        %v429 = vunpack.c.l.b16 %v420
        %v430 = vunpack.c.l.b16 %v421
        %v431 = vunpack.c.h.b16 %v421
        %v432 = vunpack.c.l.b16 %v422
        %v433 = vpack.c.b16 %v430, %v427
        %v434 = vpack.c.b16 %v431, %v428
        %v435 = vpack.c.b16 %v432, %v429
        %439 = vst [vmem:[#allocation2 + $0x18] sm:$0xff] %v433
        %440 = vst [vmem:[#allocation2 + $0x20] sm:$0xff] %v434
        %441 = vst [vmem:[#allocation2 + $0x28] sm:$0xff] %v435
        %442 = vst [vmem:[#allocation3] sm:$0xff] 0
        %443 = vst [vmem:[#allocation3 + $0x8] sm:$0xff] 0
        %444 = vst [vmem:[#allocation3 + $0x10] sm:$0xff] 0
        %445 = vst [vmem:[#allocation3 + $0x18] sm:$0xff] 0
        %446 = vst [vmem:[#allocation3 + $0x20] sm:$0xff] 0
        %447 = vst [vmem:[#allocation3 + $0x28] sm:$0xff] 0
        %448 = vst [vmem:[#allocation3 + $0x30] sm:$0xff] 0
        %449 = vst [vmem:[#allocation3 + $0x38] sm:$0xff] 0
        %450 = vst [vmem:[#allocation4] sm:$0xff] 0
        %451 = vst [vmem:[#allocation4 + $0x8] sm:$0xff] 0
        %452 = vst [vmem:[#allocation4 + $0x10] sm:$0xff] 0
        %453 = vst [vmem:[#allocation4 + $0x18] sm:$0xff] 0
        %454 = vst [vmem:[#allocation4 + $0x20] sm:$0xff] 0
        %455 = vst [vmem:[#allocation4 + $0x28] sm:$0xff] 0
        %456 = vst [vmem:[#allocation4 + $0x30] sm:$0xff] 0
        %457 = vst [vmem:[#allocation4 + $0x38] sm:$0xff] 0
        %458 = vst [vmem:[#allocation4 + $0x40] sm:$0xff] 0
        %459 = vst [vmem:[#allocation4 + $0x48] sm:$0xff] 0
        %460 = vst [vmem:[#allocation4 + $0x50] sm:$0xff] 0
        %461 = vst [vmem:[#allocation4 + $0x58] sm:$0xff] 0
        %462 = vst [vmem:[#allocation4 + $0x60] sm:$0xff] 0
        %463 = vst [vmem:[#allocation4 + $0x68] sm:$0xff] 0
        %464 = vst [vmem:[#allocation4 + $0x70] sm:$0xff] 0
        %465 = vst [vmem:[#allocation4 + $0x78] sm:$0xff] 0
        %v466 = vld [vmem:[#allocation6] sm:$0xf]
        %v467 = vld [vmem:[#allocation6 + $0x4] sm:$0xf]
        %v468 = vld [vmem:[#allocation6 + $0x8] sm:$0xf]
        %v469 = vld [vmem:[#allocation6 + $0xc] sm:$0xf]
        %v470 = vld [vmem:[#allocation6 + $0x10] sm:$0xf]
        %v471 = vld [vmem:[#allocation6 + $0x14] sm:$0xf]
        %v472 = vld [vmem:[#allocation6 + $0x18] sm:$0xf]
        %v473 = vld [vmem:[#allocation6 + $0x1c] sm:$0xf]
        %v474 = vld [vmem:[#allocation6 + $0x20] sm:$0xf]
        %v475 = vld [vmem:[#allocation6 + $0x24] sm:$0xf]
        %v476 = vld [vmem:[#allocation6 + $0x28] sm:$0xf]
        %v477 = vld [vmem:[#allocation6 + $0x2c] sm:$0xf]
        %v478 = vld [vmem:[#allocation6 + $0x30] sm:$0xf]
        %v479 = vld [vmem:[#allocation6 + $0x34] sm:$0xf]
        %v480 = vld [vmem:[#allocation6 + $0x38] sm:$0xf]
        %v481 = vld [vmem:[#allocation6 + $0x3c] sm:$0xf]
        %v482 = vld [vmem:[#allocation6 + $0x40] sm:$0xf]
        %v483 = vld [vmem:[#allocation6 + $0x44] sm:$0xf]
        %v484 = vld [vmem:[#allocation6 + $0x48] sm:$0xf]
        %v485 = vld [vmem:[#allocation6 + $0x4c] sm:$0xf]
        %v486 = vld [vmem:[#allocation6 + $0x50] sm:$0xf]
        %v487 = vld [vmem:[#allocation6 + $0x54] sm:$0xf]
        %v488 = vld [vmem:[#allocation6 + $0x58] sm:$0xf]
        %v489 = vld [vmem:[#allocation6 + $0x5c] sm:$0xf]
        %v490 = vld [vmem:[#allocation6 + $0x60] sm:$0xf]
        %v491 = vld [vmem:[#allocation6 + $0x64] sm:$0xf]
        %v492 = vld [vmem:[#allocation6 + $0x68] sm:$0xf]
        %v493 = vld [vmem:[#allocation6 + $0x6c] sm:$0xf]
        %v494 = vld [vmem:[#allocation6 + $0x70] sm:$0xf]
        %v495 = vld [vmem:[#allocation6 + $0x74] sm:$0xf]
        %v496 = vld [vmem:[#allocation6 + $0x78] sm:$0xf]
        %v497 = vld [vmem:[#allocation6 + $0x7c] sm:$0xf]
        %v498 = vld [vmem:[#allocation6 + $0x80] sm:$0xf]
        %v499 = vld [vmem:[#allocation6 + $0x84] sm:$0xf]
        %v500 = vld [vmem:[#allocation6 + $0x88] sm:$0xf]
        %v501 = vld [vmem:[#allocation6 + $0x8c] sm:$0xf]
        %v502 = vld [vmem:[#allocation6 + $0x90] sm:$0xf]
        %v503 = vld [vmem:[#allocation6 + $0x94] sm:$0xf]
        %v504 = vld [vmem:[#allocation6 + $0x98] sm:$0xf]
        %v505 = vld [vmem:[#allocation6 + $0x9c] sm:$0xf]
        %v506 = vld [vmem:[#allocation6 + $0xa0] sm:$0xf]
        %v507 = vld [vmem:[#allocation6 + $0xa4] sm:$0xf]
        %v508 = vld [vmem:[#allocation6 + $0xa8] sm:$0xf]
        %v509 = vld [vmem:[#allocation6 + $0xac] sm:$0xf]
        %v510 = vld [vmem:[#allocation6 + $0xb0] sm:$0xf]
        %v511 = vld [vmem:[#allocation6 + $0xb4] sm:$0xf]
        %v512 = vld [vmem:[#allocation6 + $0xb8] sm:$0xf]
        %v513 = vld [vmem:[#allocation6 + $0xbc] sm:$0xf]
        %v514 = vld [vmem:[#allocation6 + $0xc0] sm:$0xf]
        %v515 = vld [vmem:[#allocation6 + $0xc4] sm:$0xf]
        %v516 = vld [vmem:[#allocation6 + $0xc8] sm:$0xf]
        %v517 = vld [vmem:[#allocation6 + $0xcc] sm:$0xf]
        %v518 = vld [vmem:[#allocation6 + $0xd0] sm:$0xf]
        %v519 = vld [vmem:[#allocation6 + $0xd4] sm:$0xf]
        %v520 = vld [vmem:[#allocation6 + $0xd8] sm:$0xf]
        %v521 = vld [vmem:[#allocation6 + $0xdc] sm:$0xf]
        %v522 = vld [vmem:[#allocation6 + $0xe0] sm:$0xf]
        %v523 = vld [vmem:[#allocation6 + $0xe4] sm:$0xf]
        %v524 = vld [vmem:[#allocation6 + $0xe8] sm:$0xf]
        %v525 = vld [vmem:[#allocation6 + $0xec] sm:$0xf]
        %v526 = vld [vmem:[#allocation6 + $0xf0] sm:$0xf]
        %v527 = vld [vmem:[#allocation6 + $0xf4] sm:$0xf]
        %v528 = vld [vmem:[#allocation6 + $0xf8] sm:$0xf]
        %v529 = vld [vmem:[#allocation6 + $0xfc] sm:$0xf]
        %v530 = vld [vmem:[#allocation6 + $0x100] sm:$0xf]
        %v531 = vld [vmem:[#allocation6 + $0x104] sm:$0xf]
        %v532 = vld [vmem:[#allocation6 + $0x108] sm:$0xf]
        %v533 = vld [vmem:[#allocation6 + $0x10c] sm:$0xf]
        %v534 = vld [vmem:[#allocation6 + $0x110] sm:$0xf]
        %v535 = vld [vmem:[#allocation6 + $0x114] sm:$0xf]
        %v536 = vld [vmem:[#allocation6 + $0x118] sm:$0xf]
        %v537 = vld [vmem:[#allocation6 + $0x11c] sm:$0xf]
        %v538 = vld [vmem:[#allocation6 + $0x120] sm:$0xf]
        %v539 = vld [vmem:[#allocation6 + $0x124] sm:$0xf]
        %v540 = vld [vmem:[#allocation6 + $0x128] sm:$0xf]
        %v541 = vld [vmem:[#allocation6 + $0x12c] sm:$0xf]
        %v542 = vld [vmem:[#allocation6 + $0x130] sm:$0xf]
        %v543 = vld [vmem:[#allocation6 + $0x134] sm:$0xf]
        %v544 = vld [vmem:[#allocation6 + $0x138] sm:$0xf]
        %v545 = vld [vmem:[#allocation6 + $0x13c] sm:$0xf]
        %v546 = vld [vmem:[#allocation6 + $0x140] sm:$0xf]
        %v547 = vld [vmem:[#allocation6 + $0x144] sm:$0xf]
        %v548 = vld [vmem:[#allocation6 + $0x148] sm:$0xf]
        %v549 = vld [vmem:[#allocation6 + $0x14c] sm:$0xf]
        %v550 = vld [vmem:[#allocation6 + $0x150] sm:$0xf]
        %v551 = vld [vmem:[#allocation6 + $0x154] sm:$0xf]
        %v552 = vld [vmem:[#allocation6 + $0x158] sm:$0xf]
        %v553 = vld [vmem:[#allocation6 + $0x15c] sm:$0xf]
        %v554 = vld [vmem:[#allocation6 + $0x160] sm:$0xf]
        %v555 = vld [vmem:[#allocation6 + $0x164] sm:$0xf]
        %v556 = vld [vmem:[#allocation6 + $0x168] sm:$0xf]
        %v557 = vld [vmem:[#allocation6 + $0x16c] sm:$0xf]
        %v558 = vld [vmem:[#allocation6 + $0x170] sm:$0xf]
        %v559 = vld [vmem:[#allocation6 + $0x174] sm:$0xf]
        %v560 = vld [vmem:[#allocation6 + $0x178] sm:$0xf]
        %v561 = vld [vmem:[#allocation6 + $0x17c] sm:$0xf]
        %v562 = vld [vmem:[#allocation6 + $0x180] sm:$0xf]
        %v563 = vld [vmem:[#allocation6 + $0x184] sm:$0xf]
        %v564 = vld [vmem:[#allocation6 + $0x188] sm:$0xf]
        %v565 = vld [vmem:[#allocation6 + $0x18c] sm:$0xf]
        %v566 = vld [vmem:[#allocation6 + $0x190] sm:$0xf]
        %v567 = vld [vmem:[#allocation6 + $0x194] sm:$0xf]
        %v568 = vld [vmem:[#allocation6 + $0x198] sm:$0xf]
        %v569 = vld [vmem:[#allocation6 + $0x19c] sm:$0xf]
        %v570 = vld [vmem:[#allocation6 + $0x1a0] sm:$0xf]
        %v571 = vld [vmem:[#allocation6 + $0x1a4] sm:$0xf]
        %v572 = vld [vmem:[#allocation6 + $0x1a8] sm:$0xf]
        %v573 = vld [vmem:[#allocation6 + $0x1ac] sm:$0xf]
        %v574 = vld [vmem:[#allocation6 + $0x1b0] sm:$0xf]
        %v575 = vld [vmem:[#allocation6 + $0x1b4] sm:$0xf]
        %v576 = vld [vmem:[#allocation6 + $0x1b8] sm:$0xf]
        %v577 = vld [vmem:[#allocation6 + $0x1bc] sm:$0xf]
        %v578 = vld [vmem:[#allocation6 + $0x1c0] sm:$0xf]
        %v579 = vld [vmem:[#allocation6 + $0x1c4] sm:$0xf]
        %v580 = vld [vmem:[#allocation6 + $0x1c8] sm:$0xf]
        %v581 = vld [vmem:[#allocation6 + $0x1cc] sm:$0xf]
        %v582 = vld [vmem:[#allocation6 + $0x1d0] sm:$0xf]
        %v583 = vld [vmem:[#allocation6 + $0x1d4] sm:$0xf]
        %v584 = vld [vmem:[#allocation6 + $0x1d8] sm:$0xf]
        %v585 = vld [vmem:[#allocation6 + $0x1dc] sm:$0xf]
        %v586 = vld [vmem:[#allocation6 + $0x1e0] sm:$0xf]
        %v587 = vld [vmem:[#allocation6 + $0x1e4] sm:$0xf]
        %v588 = vld [vmem:[#allocation6 + $0x1e8] sm:$0xf]
        %v589 = vld [vmem:[#allocation6 + $0x1ec] sm:$0xf]
        %v590 = vld [vmem:[#allocation6 + $0x1f0] sm:$0xf]
        %v591 = vld [vmem:[#allocation6 + $0x1f4] sm:$0xf]
        %v592 = vld [vmem:[#allocation6 + $0x1f8] sm:$0xf]
        %v593 = vld [vmem:[#allocation6 + $0x1fc] sm:$0xf]
        %v594 = vld [vmem:[#allocation6 + $0x200] sm:$0xf]
        %v595 = vld [vmem:[#allocation6 + $0x204] sm:$0xf]
        %v596 = vld [vmem:[#allocation6 + $0x208] sm:$0xf]
        %v597 = vld [vmem:[#allocation6 + $0x20c] sm:$0xf]
        %v598 = vld [vmem:[#allocation6 + $0x210] sm:$0xf]
        %v599 = vld [vmem:[#allocation6 + $0x214] sm:$0xf]
        %v600 = vld [vmem:[#allocation6 + $0x218] sm:$0xf]
        %v601 = vld [vmem:[#allocation6 + $0x21c] sm:$0xf]
        %v602 = vld [vmem:[#allocation6 + $0x220] sm:$0xf]
        %v603 = vld [vmem:[#allocation6 + $0x224] sm:$0xf]
        %v604 = vld [vmem:[#allocation6 + $0x228] sm:$0xf]
        %v605 = vld [vmem:[#allocation6 + $0x22c] sm:$0xf]
        %v606 = vld [vmem:[#allocation6 + $0x230] sm:$0xf]
        %v607 = vld [vmem:[#allocation6 + $0x234] sm:$0xf]
        %v608 = vld [vmem:[#allocation6 + $0x238] sm:$0xf]
        %v609 = vld [vmem:[#allocation6 + $0x23c] sm:$0xf]
        %v610 = vld [vmem:[#allocation6 + $0x240] sm:$0xf]
        %v611 = vld [vmem:[#allocation6 + $0x244] sm:$0xf]
        %v612 = vld [vmem:[#allocation6 + $0x248] sm:$0xf]
        %v613 = vld [vmem:[#allocation6 + $0x24c] sm:$0xf]
        %v614 = vld [vmem:[#allocation6 + $0x250] sm:$0xf]
        %v615 = vld [vmem:[#allocation6 + $0x254] sm:$0xf]
        %v616 = vld [vmem:[#allocation6 + $0x258] sm:$0xf]
        %v617 = vld [vmem:[#allocation6 + $0x25c] sm:$0xf]
        %v618 = vld [vmem:[#allocation6 + $0x260] sm:$0xf]
        %v619 = vld [vmem:[#allocation6 + $0x264] sm:$0xf]
        %v620 = vld [vmem:[#allocation6 + $0x268] sm:$0xf]
        %v621 = vld [vmem:[#allocation6 + $0x26c] sm:$0xf]
        %v622 = vld [vmem:[#allocation6 + $0x270] sm:$0xf]
        %v623 = vld [vmem:[#allocation6 + $0x274] sm:$0xf]
        %v624 = vld [vmem:[#allocation6 + $0x278] sm:$0xf]
        %v625 = vld [vmem:[#allocation6 + $0x27c] sm:$0xf]
        %v626 = vld [vmem:[#allocation6 + $0x280] sm:$0xf]
        %v627 = vld [vmem:[#allocation6 + $0x284] sm:$0xf]
        %v628 = vld [vmem:[#allocation6 + $0x288] sm:$0xf]
        %v629 = vld [vmem:[#allocation6 + $0x28c] sm:$0xf]
        %v630 = vld [vmem:[#allocation6 + $0x290] sm:$0xf]
        %v631 = vld [vmem:[#allocation6 + $0x294] sm:$0xf]
        %v632 = vld [vmem:[#allocation6 + $0x298] sm:$0xf]
        %v633 = vld [vmem:[#allocation6 + $0x29c] sm:$0xf]
        %v634 = vld [vmem:[#allocation6 + $0x2a0] sm:$0xf]
        %v635 = vld [vmem:[#allocation6 + $0x2a4] sm:$0xf]
        %v636 = vld [vmem:[#allocation6 + $0x2a8] sm:$0xf]
        %v637 = vld [vmem:[#allocation6 + $0x2ac] sm:$0xf]
        %v638 = vld [vmem:[#allocation6 + $0x2b0] sm:$0xf]
        %v639 = vld [vmem:[#allocation6 + $0x2b4] sm:$0xf]
        %v640 = vld [vmem:[#allocation6 + $0x2b8] sm:$0xf]
        %v641 = vld [vmem:[#allocation6 + $0x2bc] sm:$0xf]
        %v642 = vld [vmem:[#allocation6 + $0x2c0] sm:$0xf]
        %v643 = vld [vmem:[#allocation6 + $0x2c4] sm:$0xf]
        %v644 = vld [vmem:[#allocation6 + $0x2c8] sm:$0xf]
        %v645 = vld [vmem:[#allocation6 + $0x2cc] sm:$0xf]
        %v646 = vld [vmem:[#allocation6 + $0x2d0] sm:$0xf]
        %v647 = vld [vmem:[#allocation6 + $0x2d4] sm:$0xf]
        %v648 = vld [vmem:[#allocation6 + $0x2d8] sm:$0xf]
        %v649 = vld [vmem:[#allocation6 + $0x2dc] sm:$0xf]
        %v650 = vld [vmem:[#allocation6 + $0x2e0] sm:$0xf]
        %v651 = vld [vmem:[#allocation6 + $0x2e4] sm:$0xf]
        %v652 = vld [vmem:[#allocation6 + $0x2e8] sm:$0xf]
        %v653 = vld [vmem:[#allocation6 + $0x2ec] sm:$0xf]
        %v654 = vld [vmem:[#allocation6 + $0x2f0] sm:$0xf]
        %v655 = vld [vmem:[#allocation6 + $0x2f4] sm:$0xf]
        %v656 = vld [vmem:[#allocation6 + $0x2f8] sm:$0xf]
        %v657 = vld [vmem:[#allocation6 + $0x2fc] sm:$0xf]
        %v658 = vld [vmem:[#allocation6 + $0x300] sm:$0xf]
        %v659 = vld [vmem:[#allocation6 + $0x304] sm:$0xf]
        %v660 = vld [vmem:[#allocation6 + $0x308] sm:$0xf]
        %v661 = vld [vmem:[#allocation6 + $0x30c] sm:$0xf]
        %v662 = vld [vmem:[#allocation6 + $0x310] sm:$0xf]
        %v663 = vld [vmem:[#allocation6 + $0x314] sm:$0xf]
        %v664 = vld [vmem:[#allocation6 + $0x318] sm:$0xf]
        %v665 = vld [vmem:[#allocation6 + $0x31c] sm:$0xf]
        %v666 = vld [vmem:[#allocation6 + $0x320] sm:$0xf]
        %v667 = vld [vmem:[#allocation6 + $0x324] sm:$0xf]
        %v668 = vld [vmem:[#allocation6 + $0x328] sm:$0xf]
        %v669 = vld [vmem:[#allocation6 + $0x32c] sm:$0xf]
        %v670 = vld [vmem:[#allocation6 + $0x330] sm:$0xf]
        %v671 = vld [vmem:[#allocation6 + $0x334] sm:$0xf]
        %v672 = vld [vmem:[#allocation6 + $0x338] sm:$0xf]
        %v673 = vld [vmem:[#allocation6 + $0x33c] sm:$0xf]
        %v674 = vld [vmem:[#allocation6 + $0x340] sm:$0xf]
        %v675 = vld [vmem:[#allocation6 + $0x344] sm:$0xf]
        %v676 = vld [vmem:[#allocation6 + $0x348] sm:$0xf]
        %v677 = vld [vmem:[#allocation6 + $0x34c] sm:$0xf]
        %v678 = vld [vmem:[#allocation6 + $0x350] sm:$0xf]
        %v679 = vld [vmem:[#allocation6 + $0x354] sm:$0xf]
        %v680 = vld [vmem:[#allocation6 + $0x358] sm:$0xf]
        %v681 = vld [vmem:[#allocation6 + $0x35c] sm:$0xf]
        %v682 = vld [vmem:[#allocation6 + $0x360] sm:$0xf]
        %v683 = vld [vmem:[#allocation6 + $0x364] sm:$0xf]
        %v684 = vld [vmem:[#allocation6 + $0x368] sm:$0xf]
        %v685 = vld [vmem:[#allocation6 + $0x36c] sm:$0xf]
        %v686 = vld [vmem:[#allocation6 + $0x370] sm:$0xf]
        %v687 = vld [vmem:[#allocation6 + $0x374] sm:$0xf]
        %v688 = vld [vmem:[#allocation6 + $0x378] sm:$0xf]
        %v689 = vld [vmem:[#allocation6 + $0x37c] sm:$0xf]
        %v690 = vld [vmem:[#allocation6 + $0x380] sm:$0xf]
        %v691 = vld [vmem:[#allocation6 + $0x384] sm:$0xf]
        %v692 = vld [vmem:[#allocation6 + $0x388] sm:$0xf]
        %v693 = vld [vmem:[#allocation6 + $0x38c] sm:$0xf]
        %v694 = vld [vmem:[#allocation6 + $0x390] sm:$0xf]
        %v695 = vld [vmem:[#allocation6 + $0x394] sm:$0xf]
        %v696 = vld [vmem:[#allocation6 + $0x398] sm:$0xf]
        %v697 = vld [vmem:[#allocation6 + $0x39c] sm:$0xf]
        %v698 = vld [vmem:[#allocation6 + $0x3a0] sm:$0xf]
        %v699 = vld [vmem:[#allocation6 + $0x3a4] sm:$0xf]
        %v700 = vld [vmem:[#allocation6 + $0x3a8] sm:$0xf]
        %v701 = vld [vmem:[#allocation6 + $0x3ac] sm:$0xf]
        %v702 = vld [vmem:[#allocation6 + $0x3b0] sm:$0xf]
        %v703 = vld [vmem:[#allocation6 + $0x3b4] sm:$0xf]
        %v704 = vld [vmem:[#allocation6 + $0x3b8] sm:$0xf]
        %v705 = vld [vmem:[#allocation6 + $0x3bc] sm:$0xf]
        %v706 = vld [vmem:[%s2] sm:$0x1]
        %v707 = vld [vmem:[#allocation2] sm:$0xc0]
        %v708 = vld [vmem:[#allocation2 + $0x8] sm:$0xc0]
        %v709 = vld [vmem:[#allocation2 + $0x10] sm:$0xc0]
        %v710 = vld [vmem:[#allocation2 + $0x18] sm:$0x3f]
        %v711 = vld [vmem:[#allocation2 + $0x20] sm:$0x3f]
        %v712 = vld [vmem:[#allocation2 + $0x28] sm:$0x3f]
        %v713 = vld [vmem:[#allocation2 + $0x18] sm:$0x7f]
        %v714 = vld [vmem:[#allocation2 + $0x20] sm:$0x7f]
        %v715 = vld [vmem:[#allocation2 + $0x28] sm:$0x7f]
        %v716 = vld [vmem:[#allocation2] sm:$0x80]
        %v717 = vld [vmem:[#allocation2 + $0x8] sm:$0x80]
        %v718 = vld [vmem:[#allocation2 + $0x10] sm:$0x80]
        %v719 = vld [vmem:[#allocation2 + $0x18] sm:$0xff]
        %v720 = vld [vmem:[#allocation2 + $0x20] sm:$0xff]
        %v721 = vld [vmem:[#allocation2 + $0x28] sm:$0xff]
        %vm722 = vsmask.f32 7424
        %v724 = vshrl.u32 %v707, 16
        %v726 = vshll.u32 %v707, 16
        %v728 = vrot.slane %v726, 1
        %v729 = vor.u32 %v724, %v728
        %v731 = vshll.u32 %v713, 16
        %v733 = vrot.slane %v731, 1
        %v734 = vsel %vm722, %v729, %v733
        %v736 = vshrl.u32 %v708, 16
        %v738 = vshll.u32 %v708, 16
        %v740 = vrot.slane %v738, 1
        %v741 = vor.u32 %v736, %v740
        %v743 = vshll.u32 %v714, 16
        %v745 = vrot.slane %v743, 1
        %v746 = vsel %vm722, %v741, %v745
        %v748 = vshrl.u32 %v709, 16
        %v750 = vshll.u32 %v709, 16
        %v752 = vrot.slane %v750, 1
        %v753 = vor.u32 %v748, %v752
        %v755 = vshll.u32 %v715, 16
        %v757 = vrot.slane %v755, 1
        %v758 = vsel %vm722, %v753, %v757
        %v759 = vshrl.u32 %v713, 16
        %v761 = vor.u32 %v759, %v733
        %v762 = vshrl.u32 %v714, 16
        %v764 = vor.u32 %v762, %v745
        %v765 = vshrl.u32 %v715, 16
        %v767 = vor.u32 %v765, %v757
        %vm774 = vcmask 1046528
        %v775 = vrot.slane %v716, 1
        %v776 = vrot.slane %v713, 1
        %v777 = vsel %vm774, %v775, %v776
        %v778 = vrot.slane %v717, 1
        %v779 = vrot.slane %v714, 1
        %v780 = vsel %vm774, %v778, %v779
        %v781 = vrot.slane %v718, 1
        %v782 = vrot.slane %v715, 1
        %v783 = vsel %vm774, %v781, %v782
        %vm784 = vsmask.f32 6400
        %v786 = vshrl.u32 %v716, 16
        %v788 = vrot.slane %v786, 1
        %v790 = vshrl.u32 %v719, 16
        %v792 = vrot.slane %v790, 1
        %v793 = vshll.u32 %v719, 16
        %v795 = vrot.slane %v793, 2
        %v796 = vor.u32 %v792, %v795
        %v797 = vsel %vm784, %v788, %v796
        %v799 = vshrl.u32 %v717, 16
        %v801 = vrot.slane %v799, 1
        %v803 = vshrl.u32 %v720, 16
        %v805 = vrot.slane %v803, 1
        %v806 = vshll.u32 %v720, 16
        %v808 = vrot.slane %v806, 2
        %v809 = vor.u32 %v805, %v808
        %v810 = vsel %vm784, %v801, %v809
        %v812 = vshrl.u32 %v718, 16
        %v814 = vrot.slane %v812, 1
        %v816 = vshrl.u32 %v721, 16
        %v818 = vrot.slane %v816, 1
        %v819 = vshll.u32 %v721, 16
        %v821 = vrot.slane %v819, 2
        %v822 = vor.u32 %v818, %v821
        %v823 = vsel %vm784, %v814, %v822
        %v827 = vrot.slane %v719, 2
        %v828 = vrot.slane %v720, 2
        %v829 = vrot.slane %v721, 2
        %v831 = vlaneseq
        %v832 = vshrl.u32 %v831, 7
        %v833 = vsub.s32 0, %v832
        %v834 = vrot.slane %v706, %v833
        %vm842 = vcmask 1041408
        %v843 = vrot.slane %v707, 6
        %v844 = vrot.slane %v710, 6
        %v845 = vsel %vm842, %v843, %v844
        %v846 = vrot.slane %v708, 6
        %v847 = vrot.slane %v711, 6
        %v848 = vsel %vm842, %v846, %v847
        %v849 = vrot.slane %v709, 6
        %v850 = vrot.slane %v712, 6
        %v851 = vsel %vm842, %v849, %v850
        %v852 = vrot.slane %v734, 6
        %v853 = vrot.slane %v761, 6
        %v854 = vsel %vm842, %v852, %v853
        %v855 = vrot.slane %v746, 6
        %v856 = vrot.slane %v764, 6
        %v857 = vsel %vm842, %v855, %v856
        %v858 = vrot.slane %v758, 6
        %v859 = vrot.slane %v767, 6
        %v860 = vsel %vm842, %v858, %v859
        %v861 = vrot.slane %v777, 6
        %v862 = vrot.slane %v776, 6
        %v863 = vsel %vm842, %v861, %v862
        %v864 = vrot.slane %v780, 6
        %v865 = vrot.slane %v779, 6
        %v866 = vsel %vm842, %v864, %v865
        %v867 = vrot.slane %v783, 6
        %v868 = vrot.slane %v782, 6
        %v869 = vsel %vm842, %v867, %v868
        %v870 = vrot.slane %v797, 6
        %v871 = vrot.slane %v796, 6
        %v872 = vsel %vm842, %v870, %v871
        %v873 = vrot.slane %v810, 6
        %v874 = vrot.slane %v809, 6
        %v875 = vsel %vm842, %v873, %v874
        %v876 = vrot.slane %v823, 6
        %v877 = vrot.slane %v822, 6
        %v878 = vsel %vm842, %v876, %v877
        %v879 = vrot.slane %v827, 6
        %v880 = vsel %vm842, %v879, %v879
        %v881 = vrot.slane %v828, 6
        %v882 = vsel %vm842, %v881, %v881
        %v883 = vrot.slane %v829, 6
        %v884 = vsel %vm842, %v883, %v883
        %v1140 = vunpack.c.l.b16 %v466
        %v1141 = vunpack.c.l.b16 %v467
        %v1142 = vunpack.c.l.b16 %v468
        %v1143 = vunpack.c.l.b16 %v469
        %v1144 = vunpack.c.l.b16 %v470
        %v1145 = vunpack.c.l.b16 %v471
        %v1146 = vunpack.c.l.b16 %v472
        %v1147 = vunpack.c.l.b16 %v473
        %v1148 = vunpack.c.l.b16 %v474
        %v1149 = vunpack.c.l.b16 %v475
        %v1150 = vunpack.c.l.b16 %v476
        %v1151 = vunpack.c.l.b16 %v477
        %v1152 = vunpack.c.l.b16 %v478
        %v1153 = vunpack.c.l.b16 %v479
        %v1154 = vunpack.c.l.b16 %v480
        %v1155 = vunpack.c.l.b16 %v481
        %v1156 = vunpack.c.l.b16 %v482
        %v1157 = vunpack.c.l.b16 %v483
        %v1158 = vunpack.c.l.b16 %v484
        %v1159 = vunpack.c.l.b16 %v485
        %v1160 = vunpack.c.l.b16 %v486
        %v1161 = vunpack.c.l.b16 %v487
        %v1162 = vunpack.c.l.b16 %v488
        %v1163 = vunpack.c.l.b16 %v489
        %v1164 = vunpack.c.l.b16 %v490
        %v1165 = vunpack.c.l.b16 %v491
        %v1166 = vunpack.c.l.b16 %v492
        %v1167 = vunpack.c.l.b16 %v493
        %v1168 = vunpack.c.l.b16 %v494
        %v1169 = vunpack.c.l.b16 %v495
        %v1170 = vunpack.c.l.b16 %v496
        %v1171 = vunpack.c.l.b16 %v497
        %v1172 = vunpack.c.l.b16 %v498
        %v1173 = vunpack.c.l.b16 %v499
        %v1174 = vunpack.c.l.b16 %v500
        %v1175 = vunpack.c.l.b16 %v501
        %v1176 = vunpack.c.l.b16 %v502
        %v1177 = vunpack.c.l.b16 %v503
        %v1178 = vunpack.c.l.b16 %v504
        %v1179 = vunpack.c.l.b16 %v505
        %v1180 = vunpack.c.l.b16 %v506
        %v1181 = vunpack.c.l.b16 %v507
        %v1182 = vunpack.c.l.b16 %v508
        %v1183 = vunpack.c.l.b16 %v509
        %v1184 = vunpack.c.l.b16 %v510
        %v1185 = vunpack.c.l.b16 %v511
        %v1186 = vunpack.c.l.b16 %v512
        %v1187 = vunpack.c.l.b16 %v513
        %v1188 = vunpack.c.l.b16 %v514
        %v1189 = vunpack.c.l.b16 %v515
        %v1190 = vunpack.c.l.b16 %v516
        %v1191 = vunpack.c.l.b16 %v517
        %v1192 = vunpack.c.l.b16 %v518
        %v1193 = vunpack.c.l.b16 %v519
        %v1194 = vunpack.c.l.b16 %v520
        %v1195 = vunpack.c.l.b16 %v521
        %v1196 = vunpack.c.l.b16 %v522
        %v1197 = vunpack.c.l.b16 %v523
        %v1198 = vunpack.c.l.b16 %v524
        %v1199 = vunpack.c.l.b16 %v525
        %v1200 = vunpack.c.l.b16 %v526
        %v1201 = vunpack.c.l.b16 %v527
        %v1202 = vunpack.c.l.b16 %v528
        %v1203 = vunpack.c.l.b16 %v529
        %v1204 = vunpack.c.l.b16 %v530
        %v1205 = vunpack.c.l.b16 %v531
        %v1206 = vunpack.c.l.b16 %v532
        %v1207 = vunpack.c.l.b16 %v533
        %v1208 = vunpack.c.l.b16 %v534
        %v1209 = vunpack.c.l.b16 %v535
        %v1210 = vunpack.c.l.b16 %v536
        %v1211 = vunpack.c.l.b16 %v537
        %v1212 = vunpack.c.l.b16 %v538
        %v1213 = vunpack.c.l.b16 %v539
        %v1214 = vunpack.c.l.b16 %v540
        %v1215 = vunpack.c.l.b16 %v541
        %v1216 = vunpack.c.l.b16 %v542
        %v1217 = vunpack.c.l.b16 %v543
        %v1218 = vunpack.c.l.b16 %v544
        %v1219 = vunpack.c.l.b16 %v545
        %v1220 = vunpack.c.l.b16 %v546
        %v1221 = vunpack.c.l.b16 %v547
        %v1222 = vunpack.c.l.b16 %v548
        %v1223 = vunpack.c.l.b16 %v549
        %v1224 = vunpack.c.l.b16 %v550
        %v1225 = vunpack.c.l.b16 %v551
        %v1226 = vunpack.c.l.b16 %v552
        %v1227 = vunpack.c.l.b16 %v553
        %v1228 = vunpack.c.l.b16 %v554
        %v1229 = vunpack.c.l.b16 %v555
        %v1230 = vunpack.c.l.b16 %v556
        %v1231 = vunpack.c.l.b16 %v557
        %v1232 = vunpack.c.l.b16 %v558
        %v1233 = vunpack.c.l.b16 %v559
        %v1234 = vunpack.c.l.b16 %v560
        %v1235 = vunpack.c.l.b16 %v561
        %v1236 = vunpack.c.l.b16 %v562
        %v1237 = vunpack.c.l.b16 %v563
        %v1238 = vunpack.c.l.b16 %v564
        %v1239 = vunpack.c.l.b16 %v565
        %v1240 = vunpack.c.l.b16 %v566
        %v1241 = vunpack.c.l.b16 %v567
        %v1242 = vunpack.c.l.b16 %v568
        %v1243 = vunpack.c.l.b16 %v569
        %v1244 = vunpack.c.l.b16 %v570
        %v1245 = vunpack.c.l.b16 %v571
        %v1246 = vunpack.c.l.b16 %v572
        %v1247 = vunpack.c.l.b16 %v573
        %v1248 = vunpack.c.l.b16 %v574
        %v1249 = vunpack.c.l.b16 %v575
        %v1250 = vunpack.c.l.b16 %v576
        %v1251 = vunpack.c.l.b16 %v577
        %v1252 = vunpack.c.l.b16 %v578
        %v1253 = vunpack.c.l.b16 %v579
        %v1254 = vunpack.c.l.b16 %v580
        %v1255 = vunpack.c.l.b16 %v581
        %v1256 = vunpack.c.l.b16 %v582
        %v1257 = vunpack.c.l.b16 %v583
        %v1258 = vunpack.c.l.b16 %v584
        %v1259 = vunpack.c.l.b16 %v585
        %v1260 = vunpack.c.l.b16 %v586
        %v1261 = vunpack.c.l.b16 %v587
        %v1262 = vunpack.c.l.b16 %v588
        %v1263 = vunpack.c.l.b16 %v589
        %v1264 = vunpack.c.l.b16 %v590
        %v1265 = vunpack.c.l.b16 %v591
        %v1266 = vunpack.c.l.b16 %v592
        %v1267 = vunpack.c.l.b16 %v593
        %v1268 = vunpack.c.l.b16 %v594
        %v1269 = vunpack.c.l.b16 %v595
        %v1270 = vunpack.c.l.b16 %v596
        %v1271 = vunpack.c.l.b16 %v597
        %v1272 = vunpack.c.l.b16 %v598
        %v1273 = vunpack.c.l.b16 %v599
        %v1274 = vunpack.c.l.b16 %v600
        %v1275 = vunpack.c.l.b16 %v601
        %v1276 = vunpack.c.l.b16 %v602
        %v1277 = vunpack.c.l.b16 %v603
        %v1278 = vunpack.c.l.b16 %v604
        %v1279 = vunpack.c.l.b16 %v605
        %v1280 = vunpack.c.l.b16 %v606
        %v1281 = vunpack.c.l.b16 %v607
        %v1282 = vunpack.c.l.b16 %v608
        %v1283 = vunpack.c.l.b16 %v609
        %v1284 = vunpack.c.l.b16 %v610
        %v1285 = vunpack.c.l.b16 %v611
        %v1286 = vunpack.c.l.b16 %v612
        %v1287 = vunpack.c.l.b16 %v613
        %v1288 = vunpack.c.l.b16 %v614
        %v1289 = vunpack.c.l.b16 %v615
        %v1290 = vunpack.c.l.b16 %v616
        %v1291 = vunpack.c.l.b16 %v617
        %v1292 = vunpack.c.l.b16 %v618
        %v1293 = vunpack.c.l.b16 %v619
        %v1294 = vunpack.c.l.b16 %v620
        %v1295 = vunpack.c.l.b16 %v621
        %v1296 = vunpack.c.l.b16 %v622
        %v1297 = vunpack.c.l.b16 %v623
        %v1298 = vunpack.c.l.b16 %v624
        %v1299 = vunpack.c.l.b16 %v625
        %v1300 = vunpack.c.l.b16 %v626
        %v1301 = vunpack.c.l.b16 %v627
        %v1302 = vunpack.c.l.b16 %v628
        %v1303 = vunpack.c.l.b16 %v629
        %v1304 = vunpack.c.l.b16 %v630
        %v1305 = vunpack.c.l.b16 %v631
        %v1306 = vunpack.c.l.b16 %v632
        %v1307 = vunpack.c.l.b16 %v633
        %v1308 = vunpack.c.l.b16 %v634
        %v1309 = vunpack.c.l.b16 %v635
        %v1310 = vunpack.c.l.b16 %v636
        %v1311 = vunpack.c.l.b16 %v637
        %v1312 = vunpack.c.l.b16 %v638
        %v1313 = vunpack.c.l.b16 %v639
        %v1314 = vunpack.c.l.b16 %v640
        %v1315 = vunpack.c.l.b16 %v641
        %v1316 = vunpack.c.l.b16 %v642
        %v1317 = vunpack.c.l.b16 %v643
        %v1318 = vunpack.c.l.b16 %v644
        %v1319 = vunpack.c.l.b16 %v645
        %v1320 = vunpack.c.l.b16 %v646
        %v1321 = vunpack.c.l.b16 %v647
        %v1322 = vunpack.c.l.b16 %v648
        %v1323 = vunpack.c.l.b16 %v649
        %v1324 = vunpack.c.l.b16 %v650
        %v1325 = vunpack.c.l.b16 %v651
        %v1326 = vunpack.c.l.b16 %v652
        %v1327 = vunpack.c.l.b16 %v653
        %v1328 = vunpack.c.l.b16 %v654
        %v1329 = vunpack.c.l.b16 %v655
        %v1330 = vunpack.c.l.b16 %v656
        %v1331 = vunpack.c.l.b16 %v657
        %v1332 = vunpack.c.l.b16 %v658
        %v1333 = vunpack.c.l.b16 %v659
        %v1334 = vunpack.c.l.b16 %v660
        %v1335 = vunpack.c.l.b16 %v661
        %v1336 = vunpack.c.l.b16 %v662
        %v1337 = vunpack.c.l.b16 %v663
        %v1338 = vunpack.c.l.b16 %v664
        %v1339 = vunpack.c.l.b16 %v665
        %v1340 = vunpack.c.l.b16 %v666
        %v1341 = vunpack.c.l.b16 %v667
        %v1342 = vunpack.c.l.b16 %v668
        %v1343 = vunpack.c.l.b16 %v669
        %v1344 = vunpack.c.l.b16 %v670
        %v1345 = vunpack.c.l.b16 %v671
        %v1346 = vunpack.c.l.b16 %v672
        %v1347 = vunpack.c.l.b16 %v673
        %v1348 = vunpack.c.l.b16 %v674
        %v1349 = vunpack.c.l.b16 %v675
        %v1350 = vunpack.c.l.b16 %v676
        %v1351 = vunpack.c.l.b16 %v677
        %v1352 = vunpack.c.l.b16 %v678
        %v1353 = vunpack.c.l.b16 %v679
        %v1354 = vunpack.c.l.b16 %v680
        %v1355 = vunpack.c.l.b16 %v681
        %v1356 = vunpack.c.l.b16 %v682
        %v1357 = vunpack.c.l.b16 %v683
        %v1358 = vunpack.c.l.b16 %v684
        %v1359 = vunpack.c.l.b16 %v685
        %v1360 = vunpack.c.l.b16 %v686
        %v1361 = vunpack.c.l.b16 %v687
        %v1362 = vunpack.c.l.b16 %v688
        %v1363 = vunpack.c.l.b16 %v689
        %v1364 = vunpack.c.l.b16 %v690
        %v1365 = vunpack.c.l.b16 %v691
        %v1366 = vunpack.c.l.b16 %v692
        %v1367 = vunpack.c.l.b16 %v693
        %v1368 = vunpack.c.l.b16 %v694
        %v1369 = vunpack.c.l.b16 %v695
        %v1370 = vunpack.c.l.b16 %v696
        %v1371 = vunpack.c.l.b16 %v697
        %v1372 = vunpack.c.l.b16 %v698
        %v1373 = vunpack.c.l.b16 %v699
        %v1374 = vunpack.c.l.b16 %v700
        %v1375 = vunpack.c.l.b16 %v701
        %v1376 = vunpack.c.l.b16 %v702
        %v1377 = vunpack.c.l.b16 %v703
        %v1378 = vunpack.c.l.b16 %v704
        %v1379 = vunpack.c.l.b16 %v705
        %v1380 = vpack.c.b16 %v1141, %v1140
        %v1381 = vpack.c.b16 %v1143, %v1142
        %v1382 = vpack.c.b16 %v1145, %v1144
        %v1383 = vpack.c.b16 %v1147, %v1146
        %v1384 = vpack.c.b16 %v1149, %v1148
        %v1385 = vpack.c.b16 %v1151, %v1150
        %v1386 = vpack.c.b16 %v1153, %v1152
        %v1387 = vpack.c.b16 %v1155, %v1154
        %v1388 = vpack.c.b16 %v1157, %v1156
        %v1389 = vpack.c.b16 %v1159, %v1158
        %v1390 = vpack.c.b16 %v1161, %v1160
        %v1391 = vpack.c.b16 %v1163, %v1162
        %v1392 = vpack.c.b16 %v1165, %v1164
        %v1393 = vpack.c.b16 %v1167, %v1166
        %v1394 = vpack.c.b16 %v1169, %v1168
        %v1395 = vpack.c.b16 %v1171, %v1170
        %v1396 = vpack.c.b16 %v1173, %v1172
        %v1397 = vpack.c.b16 %v1175, %v1174
        %v1398 = vpack.c.b16 %v1177, %v1176
        %v1399 = vpack.c.b16 %v1179, %v1178
        %v1400 = vpack.c.b16 %v1181, %v1180
        %v1401 = vpack.c.b16 %v1183, %v1182
        %v1402 = vpack.c.b16 %v1185, %v1184
        %v1403 = vpack.c.b16 %v1187, %v1186
        %v1404 = vpack.c.b16 %v1189, %v1188
        %v1405 = vpack.c.b16 %v1191, %v1190
        %v1406 = vpack.c.b16 %v1193, %v1192
        %v1407 = vpack.c.b16 %v1195, %v1194
        %v1408 = vpack.c.b16 %v1197, %v1196
        %v1409 = vpack.c.b16 %v1199, %v1198
        %v1410 = vpack.c.b16 %v1201, %v1200
        %v1411 = vpack.c.b16 %v1203, %v1202
        %v1412 = vpack.c.b16 %v1205, %v1204
        %v1413 = vpack.c.b16 %v1207, %v1206
        %v1414 = vpack.c.b16 %v1209, %v1208
        %v1415 = vpack.c.b16 %v1211, %v1210
        %v1416 = vpack.c.b16 %v1213, %v1212
        %v1417 = vpack.c.b16 %v1215, %v1214
        %v1418 = vpack.c.b16 %v1217, %v1216
        %v1419 = vpack.c.b16 %v1219, %v1218
        %v1420 = vpack.c.b16 %v1221, %v1220
        %v1421 = vpack.c.b16 %v1223, %v1222
        %v1422 = vpack.c.b16 %v1225, %v1224
        %v1423 = vpack.c.b16 %v1227, %v1226
        %v1424 = vpack.c.b16 %v1229, %v1228
        %v1425 = vpack.c.b16 %v1231, %v1230
        %v1426 = vpack.c.b16 %v1233, %v1232
        %v1427 = vpack.c.b16 %v1235, %v1234
        %v1428 = vpack.c.b16 %v1237, %v1236
        %v1429 = vpack.c.b16 %v1239, %v1238
        %v1430 = vpack.c.b16 %v1241, %v1240
        %v1431 = vpack.c.b16 %v1243, %v1242
        %v1432 = vpack.c.b16 %v1245, %v1244
        %v1433 = vpack.c.b16 %v1247, %v1246
        %v1434 = vpack.c.b16 %v1249, %v1248
        %v1435 = vpack.c.b16 %v1251, %v1250
        %v1436 = vpack.c.b16 %v1253, %v1252
        %v1437 = vpack.c.b16 %v1255, %v1254
        %v1438 = vpack.c.b16 %v1257, %v1256
        %v1439 = vpack.c.b16 %v1259, %v1258
        %v1440 = vpack.c.b16 %v1261, %v1260
        %v1441 = vpack.c.b16 %v1263, %v1262
        %v1442 = vpack.c.b16 %v1265, %v1264
        %v1443 = vpack.c.b16 %v1267, %v1266
        %v1444 = vpack.c.b16 %v1269, %v1268
        %v1445 = vpack.c.b16 %v1271, %v1270
        %v1446 = vpack.c.b16 %v1273, %v1272
        %v1447 = vpack.c.b16 %v1275, %v1274
        %v1448 = vpack.c.b16 %v1277, %v1276
        %v1449 = vpack.c.b16 %v1279, %v1278
        %v1450 = vpack.c.b16 %v1281, %v1280
        %v1451 = vpack.c.b16 %v1283, %v1282
        %v1452 = vpack.c.b16 %v1285, %v1284
        %v1453 = vpack.c.b16 %v1287, %v1286
        %v1454 = vpack.c.b16 %v1289, %v1288
        %v1455 = vpack.c.b16 %v1291, %v1290
        %v1456 = vpack.c.b16 %v1293, %v1292
        %v1457 = vpack.c.b16 %v1295, %v1294
        %v1458 = vpack.c.b16 %v1297, %v1296
        %v1459 = vpack.c.b16 %v1299, %v1298
        %v1460 = vpack.c.b16 %v1301, %v1300
        %v1461 = vpack.c.b16 %v1303, %v1302
        %v1462 = vpack.c.b16 %v1305, %v1304
        %v1463 = vpack.c.b16 %v1307, %v1306
        %v1464 = vpack.c.b16 %v1309, %v1308
        %v1465 = vpack.c.b16 %v1311, %v1310
        %v1466 = vpack.c.b16 %v1313, %v1312
        %v1467 = vpack.c.b16 %v1315, %v1314
        %v1468 = vpack.c.b16 %v1317, %v1316
        %v1469 = vpack.c.b16 %v1319, %v1318
        %v1470 = vpack.c.b16 %v1321, %v1320
        %v1471 = vpack.c.b16 %v1323, %v1322
        %v1472 = vpack.c.b16 %v1325, %v1324
        %v1473 = vpack.c.b16 %v1327, %v1326
        %v1474 = vpack.c.b16 %v1329, %v1328
        %v1475 = vpack.c.b16 %v1331, %v1330
        %v1476 = vpack.c.b16 %v1333, %v1332
        %v1477 = vpack.c.b16 %v1335, %v1334
        %v1478 = vpack.c.b16 %v1337, %v1336
        %v1479 = vpack.c.b16 %v1339, %v1338
        %v1480 = vpack.c.b16 %v1341, %v1340
        %v1481 = vpack.c.b16 %v1343, %v1342
        %v1482 = vpack.c.b16 %v1345, %v1344
        %v1483 = vpack.c.b16 %v1347, %v1346
        %v1484 = vpack.c.b16 %v1349, %v1348
        %v1485 = vpack.c.b16 %v1351, %v1350
        %v1486 = vpack.c.b16 %v1353, %v1352
        %v1487 = vpack.c.b16 %v1355, %v1354
        %v1488 = vpack.c.b16 %v1357, %v1356
        %v1489 = vpack.c.b16 %v1359, %v1358
        %v1490 = vpack.c.b16 %v1361, %v1360
        %v1491 = vpack.c.b16 %v1363, %v1362
        %v1492 = vpack.c.b16 %v1365, %v1364
        %v1493 = vpack.c.b16 %v1367, %v1366
        %v1494 = vpack.c.b16 %v1369, %v1368
        %v1495 = vpack.c.b16 %v1371, %v1370
        %v1496 = vpack.c.b16 %v1373, %v1372
        %v1497 = vpack.c.b16 %v1375, %v1374
        %v1498 = vpack.c.b16 %v1377, %v1376
        %v1499 = vpack.c.b16 %v1379, %v1378
        %1620 = vmatprep.subr.bf16.mxu0 0
        %1621 = vmatpush1.bf16.msra.mxu0 %v1380
        %1622 = vmatprep.subr.bf16.mxu0 0
        %1623 = vmatpush1.bf16.msra.mxu0 %v1381
        %1624 = vmatprep.subr.bf16.mxu0 0
        %1625 = vmatpush1.bf16.msra.mxu0 %v1382
        %1626 = vmatprep.subr.bf16.mxu0 0
        %1627 = vmatpush1.bf16.msra.mxu0 %v1383
        %1628 = vmatprep.subr.bf16.mxu0 0
        %1629 = vmatpush1.bf16.msra.mxu0 %v1384
        %1630 = vmatprep.subr.bf16.mxu0 0
        %1631 = vmatpush1.bf16.msra.mxu0 %v1385
        %1632 = vmatprep.subr.bf16.mxu0 0
        %1633 = vmatpush1.bf16.msra.mxu0 %v1386
        %1634 = vmatprep.subr.bf16.mxu0 0
        %1635 = vmatpush1.bf16.msra.mxu0 %v1387
        %1636 = vmatprep.subr.bf16.mxu0 0
        %1637 = vmatpush1.bf16.msra.mxu0 %v1388
        %1638 = vmatprep.subr.bf16.mxu0 0
        %1639 = vmatpush1.bf16.msra.mxu0 %v1389
        %1640 = vmatprep.subr.bf16.mxu0 0
        %1641 = vmatpush1.bf16.msra.mxu0 %v1390
        %1642 = vmatprep.subr.bf16.mxu0 0
        %1643 = vmatpush1.bf16.msra.mxu0 %v1391
        %1644 = vmatprep.subr.bf16.mxu0 0
        %1645 = vmatpush1.bf16.msra.mxu0 %v1392
        %1646 = vmatprep.subr.bf16.mxu0 0
        %1647 = vmatpush1.bf16.msra.mxu0 %v1393
        %1648 = vmatprep.subr.bf16.mxu0 0
        %1649 = vmatpush1.bf16.msra.mxu0 %v1394
        %1650 = vmatprep.subr.bf16.mxu0 0
        %1651 = vmatpush1.bf16.msra.mxu0 %v1395
        %1652 = vmatprep.mubr.bf16.mxu0 %v848
        %1653 = vmatmul.mubr.bf16.gmra.mrb[0].mxu0 %v845
        %v1654 = vpop.f32.mrb[0].mxu0
        %v1655 = vadd.f32 %v834, %v1654
        %v1656 = vpop.f32.mrb[0].mxu0
        %v1657 = vpop.f32.mrb[0].mxu0
        %v1658 = vadd.f32 %v834, %v1657
        %v1659 = vpop.f32.mrb[0].mxu0
        %1660 = vdwg.mxu0
        %1661 = vmatprep.subr.bf16.mxu0 0
        %1662 = vmatpush1.bf16.msra.mxu0 %v1396
        %1663 = vmatprep.subr.bf16.mxu0 0
        %1664 = vmatpush1.bf16.msra.mxu0 %v1397
        %1665 = vmatprep.subr.bf16.mxu0 0
        %1666 = vmatpush1.bf16.msra.mxu0 %v1398
        %1667 = vmatprep.subr.bf16.mxu0 0
        %1668 = vmatpush1.bf16.msra.mxu0 %v1399
        %1669 = vmatprep.subr.bf16.mxu0 0
        %1670 = vmatpush1.bf16.msra.mxu0 %v1400
        %1671 = vmatprep.subr.bf16.mxu0 0
        %1672 = vmatpush1.bf16.msra.mxu0 %v1401
        %1673 = vmatprep.subr.bf16.mxu0 0
        %1674 = vmatpush1.bf16.msra.mxu0 %v1402
        %1675 = vmatprep.subr.bf16.mxu0 0
        %1676 = vmatpush1.bf16.msra.mxu0 %v1403
        %1677 = vmatprep.subr.bf16.mxu0 0
        %1678 = vmatpush1.bf16.msra.mxu0 %v1404
        %1679 = vmatprep.subr.bf16.mxu0 0
        %1680 = vmatpush1.bf16.msra.mxu0 %v1405
        %1681 = vmatprep.subr.bf16.mxu0 0
        %1682 = vmatpush1.bf16.msra.mxu0 %v1406
        %1683 = vmatprep.subr.bf16.mxu0 0
        %1684 = vmatpush1.bf16.msra.mxu0 %v1407
        %1685 = vmatprep.subr.bf16.mxu0 0
        %1686 = vmatpush1.bf16.msra.mxu0 %v1408
        %1687 = vmatprep.subr.bf16.mxu0 0
        %1688 = vmatpush1.bf16.msra.mxu0 %v1409
        %1689 = vmatprep.subr.bf16.mxu0 0
        %1690 = vmatpush1.bf16.msra.mxu0 %v1410
        %1691 = vmatprep.subr.bf16.mxu0 0
        %1692 = vmatpush1.bf16.msra.mxu0 %v1411
        %1693 = vmatprep.mubr.bf16.mxu0 %v854
        %1694 = vmatmul.mubr.bf16.gmra.mrb[0].mxu0 %v851
        %v1695 = vpop.f32.mrb[0].mxu0
        %v1696 = vadd.f32 %v1655, %v1695
        %v1697 = vpop.f32.mrb[0].mxu0
        %v1698 = vpop.f32.mrb[0].mxu0
        %v1699 = vadd.f32 %v1658, %v1698
        %v1700 = vpop.f32.mrb[0].mxu0
        %1701 = vdwg.mxu0
        %1702 = vmatprep.subr.bf16.mxu0 0
        %1703 = vmatpush1.bf16.msra.mxu0 %v1412
        %1704 = vmatprep.subr.bf16.mxu0 0
        %1705 = vmatpush1.bf16.msra.mxu0 %v1413
        %1706 = vmatprep.subr.bf16.mxu0 0
        %1707 = vmatpush1.bf16.msra.mxu0 %v1414
        %1708 = vmatprep.subr.bf16.mxu0 0
        %1709 = vmatpush1.bf16.msra.mxu0 %v1415
        %1710 = vmatprep.subr.bf16.mxu0 0
        %1711 = vmatpush1.bf16.msra.mxu0 %v1416
        %1712 = vmatprep.subr.bf16.mxu0 0
        %1713 = vmatpush1.bf16.msra.mxu0 %v1417
        %1714 = vmatprep.subr.bf16.mxu0 0
        %1715 = vmatpush1.bf16.msra.mxu0 %v1418
        %1716 = vmatprep.subr.bf16.mxu0 0
        %1717 = vmatpush1.bf16.msra.mxu0 %v1419
        %1718 = vmatprep.subr.bf16.mxu0 0
        %1719 = vmatpush1.bf16.msra.mxu0 %v1420
        %1720 = vmatprep.subr.bf16.mxu0 0
        %1721 = vmatpush1.bf16.msra.mxu0 %v1421
        %1722 = vmatprep.subr.bf16.mxu0 0
        %1723 = vmatpush1.bf16.msra.mxu0 %v1422
        %1724 = vmatprep.subr.bf16.mxu0 0
        %1725 = vmatpush1.bf16.msra.mxu0 %v1423
        %1726 = vmatprep.subr.bf16.mxu0 0
        %1727 = vmatpush1.bf16.msra.mxu0 %v1424
        %1728 = vmatprep.subr.bf16.mxu0 0
        %1729 = vmatpush1.bf16.msra.mxu0 %v1425
        %1730 = vmatprep.subr.bf16.mxu0 0
        %1731 = vmatpush1.bf16.msra.mxu0 %v1426
        %1732 = vmatprep.subr.bf16.mxu0 0
        %1733 = vmatpush1.bf16.msra.mxu0 %v1427
        %1734 = vmatprep.mubr.bf16.mxu0 %v860
        %1735 = vmatmul.mubr.bf16.gmra.mrb[0].mxu0 %v857
        %v1736 = vpop.f32.mrb[0].mxu0
        %v1737 = vadd.f32 %v1696, %v1736
        %v1738 = vpop.f32.mrb[0].mxu0
        %v1739 = vpop.f32.mrb[0].mxu0
        %v1740 = vadd.f32 %v1699, %v1739
        %v1741 = vpop.f32.mrb[0].mxu0
        %1742 = vdwg.mxu0
        %1743 = vmatprep.subr.bf16.mxu0 0
        %1744 = vmatpush1.bf16.msra.mxu0 %v1428
        %1745 = vmatprep.subr.bf16.mxu0 0
        %1746 = vmatpush1.bf16.msra.mxu0 %v1429
        %1747 = vmatprep.subr.bf16.mxu0 0
        %1748 = vmatpush1.bf16.msra.mxu0 %v1430
        %1749 = vmatprep.subr.bf16.mxu0 0
        %1750 = vmatpush1.bf16.msra.mxu0 %v1431
        %1751 = vmatprep.subr.bf16.mxu0 0
        %1752 = vmatpush1.bf16.msra.mxu0 %v1432
        %1753 = vmatprep.subr.bf16.mxu0 0
        %1754 = vmatpush1.bf16.msra.mxu0 %v1433
        %1755 = vmatprep.subr.bf16.mxu0 0
        %1756 = vmatpush1.bf16.msra.mxu0 %v1434
        %1757 = vmatprep.subr.bf16.mxu0 0
        %1758 = vmatpush1.bf16.msra.mxu0 %v1435
        %1759 = vmatprep.subr.bf16.mxu0 0
        %1760 = vmatpush1.bf16.msra.mxu0 %v1436
        %1761 = vmatprep.subr.bf16.mxu0 0
        %1762 = vmatpush1.bf16.msra.mxu0 %v1437
        %1763 = vmatprep.subr.bf16.mxu0 0
        %1764 = vmatpush1.bf16.msra.mxu0 %v1438
        %1765 = vmatprep.subr.bf16.mxu0 0
        %1766 = vmatpush1.bf16.msra.mxu0 %v1439
        %1767 = vmatprep.subr.bf16.mxu0 0
        %1768 = vmatpush1.bf16.msra.mxu0 %v1440
        %1769 = vmatprep.subr.bf16.mxu0 0
        %1770 = vmatpush1.bf16.msra.mxu0 %v1441
        %1771 = vmatprep.subr.bf16.mxu0 0
        %1772 = vmatpush1.bf16.msra.mxu0 %v1442
        %1773 = vmatprep.subr.bf16.mxu0 0
        %1774 = vmatpush1.bf16.msra.mxu0 %v1443
        %1775 = vmatprep.mubr.bf16.mxu0 %v866
        %1776 = vmatmul.mubr.bf16.gmra.mrb[0].mxu0 %v863
        %v1777 = vpop.f32.mrb[0].mxu0
        %v1778 = vadd.f32 %v1737, %v1777
        %v1779 = vpop.f32.mrb[0].mxu0
        %v1780 = vpop.f32.mrb[0].mxu0
        %v1781 = vadd.f32 %v1740, %v1780
        %v1782 = vpop.f32.mrb[0].mxu0
        %1783 = vdwg.mxu0
        %1784 = vmatprep.subr.bf16.mxu0 0
        %1785 = vmatpush1.bf16.msra.mxu0 %v1444
        %1786 = vmatprep.subr.bf16.mxu0 0
        %1787 = vmatpush1.bf16.msra.mxu0 %v1445
        %1788 = vmatprep.subr.bf16.mxu0 0
        %1789 = vmatpush1.bf16.msra.mxu0 %v1446
        %1790 = vmatprep.subr.bf16.mxu0 0
        %1791 = vmatpush1.bf16.msra.mxu0 %v1447
        %1792 = vmatprep.subr.bf16.mxu0 0
        %1793 = vmatpush1.bf16.msra.mxu0 %v1448
        %1794 = vmatprep.subr.bf16.mxu0 0
        %1795 = vmatpush1.bf16.msra.mxu0 %v1449
        %1796 = vmatprep.subr.bf16.mxu0 0
        %1797 = vmatpush1.bf16.msra.mxu0 %v1450
        %1798 = vmatprep.subr.bf16.mxu0 0
        %1799 = vmatpush1.bf16.msra.mxu0 %v1451
        %1800 = vmatprep.subr.bf16.mxu0 0
        %1801 = vmatpush1.bf16.msra.mxu0 %v1452
        %1802 = vmatprep.subr.bf16.mxu0 0
        %1803 = vmatpush1.bf16.msra.mxu0 %v1453
        %1804 = vmatprep.subr.bf16.mxu0 0
        %1805 = vmatpush1.bf16.msra.mxu0 %v1454
        %1806 = vmatprep.subr.bf16.mxu0 0
        %1807 = vmatpush1.bf16.msra.mxu0 %v1455
        %1808 = vmatprep.subr.bf16.mxu0 0
        %1809 = vmatpush1.bf16.msra.mxu0 %v1456
        %1810 = vmatprep.subr.bf16.mxu0 0
        %1811 = vmatpush1.bf16.msra.mxu0 %v1457
        %1812 = vmatprep.subr.bf16.mxu0 0
        %1813 = vmatpush1.bf16.msra.mxu0 %v1458
        %1814 = vmatprep.subr.bf16.mxu0 0
        %1815 = vmatpush1.bf16.msra.mxu0 %v1459
        %1816 = vmatprep.mubr.bf16.mxu0 %v872
        %1817 = vmatmul.mubr.bf16.gmra.mrb[0].mxu0 %v869
        %v1818 = vpop.f32.mrb[0].mxu0
        %v1819 = vadd.f32 %v1778, %v1818
        %v1820 = vpop.f32.mrb[0].mxu0
        %v1821 = vpop.f32.mrb[0].mxu0
        %v1822 = vadd.f32 %v1781, %v1821
        %v1823 = vpop.f32.mrb[0].mxu0
        %1824 = vdwg.mxu0
        %1825 = vmatprep.subr.bf16.mxu0 0
        %1826 = vmatpush1.bf16.msra.mxu0 %v1460
        %1827 = vmatprep.subr.bf16.mxu0 0
        %1828 = vmatpush1.bf16.msra.mxu0 %v1461
        %1829 = vmatprep.subr.bf16.mxu0 0
        %1830 = vmatpush1.bf16.msra.mxu0 %v1462
        %1831 = vmatprep.subr.bf16.mxu0 0
        %1832 = vmatpush1.bf16.msra.mxu0 %v1463
        %1833 = vmatprep.subr.bf16.mxu0 0
        %1834 = vmatpush1.bf16.msra.mxu0 %v1464
        %1835 = vmatprep.subr.bf16.mxu0 0
        %1836 = vmatpush1.bf16.msra.mxu0 %v1465
        %1837 = vmatprep.subr.bf16.mxu0 0
        %1838 = vmatpush1.bf16.msra.mxu0 %v1466
        %1839 = vmatprep.subr.bf16.mxu0 0
        %1840 = vmatpush1.bf16.msra.mxu0 %v1467
        %1841 = vmatprep.subr.bf16.mxu0 0
        %1842 = vmatpush1.bf16.msra.mxu0 %v1468
        %1843 = vmatprep.subr.bf16.mxu0 0
        %1844 = vmatpush1.bf16.msra.mxu0 %v1469
        %1845 = vmatprep.subr.bf16.mxu0 0
        %1846 = vmatpush1.bf16.msra.mxu0 %v1470
        %1847 = vmatprep.subr.bf16.mxu0 0
        %1848 = vmatpush1.bf16.msra.mxu0 %v1471
        %1849 = vmatprep.subr.bf16.mxu0 0
        %1850 = vmatpush1.bf16.msra.mxu0 %v1472
        %1851 = vmatprep.subr.bf16.mxu0 0
        %1852 = vmatpush1.bf16.msra.mxu0 %v1473
        %1853 = vmatprep.subr.bf16.mxu0 0
        %1854 = vmatpush1.bf16.msra.mxu0 %v1474
        %1855 = vmatprep.subr.bf16.mxu0 0
        %1856 = vmatpush1.bf16.msra.mxu0 %v1475
        %1857 = vmatprep.mubr.bf16.mxu0 %v878
        %1858 = vmatmul.mubr.bf16.gmra.mrb[0].mxu0 %v875
        %v1859 = vpop.f32.mrb[0].mxu0
        %v1860 = vadd.f32 %v1819, %v1859
        %v1861 = vpop.f32.mrb[0].mxu0
        %v1862 = vpop.f32.mrb[0].mxu0
        %v1863 = vadd.f32 %v1822, %v1862
        %v1864 = vpop.f32.mrb[0].mxu0
        %1865 = vdwg.mxu0
        %1866 = vmatprep.subr.bf16.mxu0 0
        %1867 = vmatpush1.bf16.msra.mxu0 %v1476
        %1868 = vmatprep.subr.bf16.mxu0 0
        %1869 = vmatpush1.bf16.msra.mxu0 %v1477
        %1870 = vmatprep.subr.bf16.mxu0 0
        %1871 = vmatpush1.bf16.msra.mxu0 %v1478
        %1872 = vmatprep.subr.bf16.mxu0 0
        %1873 = vmatpush1.bf16.msra.mxu0 %v1479
        %1874 = vmatprep.subr.bf16.mxu0 0
        %1875 = vmatpush1.bf16.msra.mxu0 %v1480
        %1876 = vmatprep.subr.bf16.mxu0 0
        %1877 = vmatpush1.bf16.msra.mxu0 %v1481
        %1878 = vmatprep.subr.bf16.mxu0 0
        %1879 = vmatpush1.bf16.msra.mxu0 %v1482
        %1880 = vmatprep.subr.bf16.mxu0 0
        %1881 = vmatpush1.bf16.msra.mxu0 %v1483
        %1882 = vmatprep.subr.bf16.mxu0 0
        %1883 = vmatpush1.bf16.msra.mxu0 %v1484
        %1884 = vmatprep.subr.bf16.mxu0 0
        %1885 = vmatpush1.bf16.msra.mxu0 %v1485
        %1886 = vmatprep.subr.bf16.mxu0 0
        %1887 = vmatpush1.bf16.msra.mxu0 %v1486
        %1888 = vmatprep.subr.bf16.mxu0 0
        %1889 = vmatpush1.bf16.msra.mxu0 %v1487
        %1890 = vmatprep.subr.bf16.mxu0 0
        %1891 = vmatpush1.bf16.msra.mxu0 %v1488
        %1892 = vmatprep.subr.bf16.mxu0 0
        %1893 = vmatpush1.bf16.msra.mxu0 %v1489
        %1894 = vmatprep.subr.bf16.mxu0 0
        %1895 = vmatpush1.bf16.msra.mxu0 %v1490
        %1896 = vmatprep.subr.bf16.mxu0 0
        %1897 = vmatpush1.bf16.msra.mxu0 %v1491
        %1898 = vmatprep.mubr.bf16.mxu0 %v882
        %1899 = vmatmul.mubr.bf16.gmra.mrb[0].mxu0 %v880
        %v1900 = vpop.f32.mrb[0].mxu0
        %v1901 = vadd.f32 %v1860, %v1900
        %v1902 = vpop.f32.mrb[0].mxu0
        %v1903 = vpop.f32.mrb[0].mxu0
        %v1904 = vadd.f32 %v1863, %v1903
        %v1905 = vpop.f32.mrb[0].mxu0
        %1906 = vdwg.mxu0
        %1907 = vmatprep.subr.bf16.mxu0 0
        %1908 = vmatpush1.bf16.msra.mxu0 %v1492
        %1909 = vmatprep.subr.bf16.mxu0 0
        %1910 = vmatpush1.bf16.msra.mxu0 %v1493
        %1911 = vmatprep.subr.bf16.mxu0 0
        %1912 = vmatpush1.bf16.msra.mxu0 %v1494
        %1913 = vmatprep.subr.bf16.mxu0 0
        %1914 = vmatpush1.bf16.msra.mxu0 %v1495
        %1915 = vmatprep.subr.bf16.mxu0 0
        %1916 = vmatpush1.bf16.msra.mxu0 %v1496
        %1917 = vmatprep.subr.bf16.mxu0 0
        %1918 = vmatpush1.bf16.msra.mxu0 %v1497
        %1919 = vmatprep.subr.bf16.mxu0 0
        %1920 = vmatpush1.bf16.msra.mxu0 %v1498
        %1921 = vmatprep.subr.bf16.mxu0 0
        %1922 = vmatpush1.bf16.msra.mxu0 %v1499
        %1923 = vmatprep.subr.bf16.mxu0 0
        %1924 = vmatpush1.bf16.msra.mxu0 0
        %1925 = vmatprep.subr.bf16.mxu0 0
        %1926 = vmatpush1.bf16.msra.mxu0 0
        %1927 = vmatprep.subr.bf16.mxu0 0
        %1928 = vmatpush1.bf16.msra.mxu0 0
        %1929 = vmatprep.subr.bf16.mxu0 0
        %1930 = vmatpush1.bf16.msra.mxu0 0
        %1931 = vmatprep.subr.bf16.mxu0 0
        %1932 = vmatpush1.bf16.msra.mxu0 0
        %1933 = vmatprep.subr.bf16.mxu0 0
        %1934 = vmatpush1.bf16.msra.mxu0 0
        %1935 = vmatprep.subr.bf16.mxu0 0
        %1936 = vmatpush1.bf16.msra.mxu0 0
        %1937 = vmatprep.subr.bf16.mxu0 0
        %1938 = vmatpush1.bf16.msra.mxu0 0
        %1939 = vmatprep.mubr.bf16.mxu0 0
        %1940 = vmatmul.mubr.bf16.gmra.mrb[0].mxu0 %v884
        %v1941 = vpop.f32.mrb[0].mxu0
        %v1942 = vadd.f32 %v1901, %v1941
        %v1943 = vpop.f32.mrb[0].mxu0
        %v1944 = vpop.f32.mrb[0].mxu0
        %v1945 = vadd.f32 %v1904, %v1944
        %v1946 = vpop.f32.mrb[0].mxu0
        %1947 = vdwg.mxu0
        %v1948 = vmax.f32 %v1942, 0.0
        %v1949 = vmax.f32 %v1945, 0.0
        %v1950 = vpack.c.bf16 %v1949, %v1948
        %1951 = vst [vmem:[#allocation3 + $0x40] sm:$0xff] %v1950
        %v1952 = vld [vmem:[#allocation8] sm:$0xf]
        %v1953 = vld [vmem:[#allocation8 + $0x4] sm:$0xf]
        %v1954 = vld [vmem:[#allocation8 + $0x8] sm:$0xf]
        %v1955 = vld [vmem:[#allocation8 + $0xc] sm:$0xf]
        %v1956 = vld [vmem:[#allocation8 + $0x10] sm:$0xf]
        %v1957 = vld [vmem:[#allocation8 + $0x14] sm:$0xf]
        %v1958 = vld [vmem:[#allocation8 + $0x18] sm:$0xf]
        %v1959 = vld [vmem:[#allocation8 + $0x1c] sm:$0xf]
        %v1960 = vld [vmem:[#allocation8 + $0x20] sm:$0xf]
        %v1961 = vld [vmem:[#allocation8 + $0x24] sm:$0xf]
        %v1962 = vld [vmem:[#allocation8 + $0x28] sm:$0xf]
        %v1963 = vld [vmem:[#allocation8 + $0x2c] sm:$0xf]
        %v1964 = vld [vmem:[#allocation8 + $0x30] sm:$0xf]
        %v1965 = vld [vmem:[#allocation8 + $0x34] sm:$0xf]
        %v1966 = vld [vmem:[#allocation8 + $0x38] sm:$0xf]
        %v1967 = vld [vmem:[#allocation8 + $0x3c] sm:$0xf]
        %v1968 = vld [vmem:[#allocation8 + $0x40] sm:$0xf]
        %v1969 = vld [vmem:[#allocation8 + $0x44] sm:$0xf]
        %v1970 = vld [vmem:[#allocation8 + $0x48] sm:$0xf]
        %v1971 = vld [vmem:[#allocation8 + $0x4c] sm:$0xf]
        %v1972 = vld [vmem:[#allocation8 + $0x50] sm:$0xf]
        %v1973 = vld [vmem:[#allocation8 + $0x54] sm:$0xf]
        %v1974 = vld [vmem:[#allocation8 + $0x58] sm:$0xf]
        %v1975 = vld [vmem:[#allocation8 + $0x5c] sm:$0xf]
        %v1976 = vld [vmem:[#allocation8 + $0x60] sm:$0xf]
        %v1977 = vld [vmem:[#allocation8 + $0x64] sm:$0xf]
        %v1978 = vld [vmem:[#allocation8 + $0x68] sm:$0xf]
        %v1979 = vld [vmem:[#allocation8 + $0x6c] sm:$0xf]
        %v1980 = vld [vmem:[#allocation8 + $0x70] sm:$0xf]
        %v1981 = vld [vmem:[#allocation8 + $0x74] sm:$0xf]
        %v1982 = vld [vmem:[#allocation8 + $0x78] sm:$0xf]
        %v1983 = vld [vmem:[#allocation8 + $0x7c] sm:$0xf]
        %v1984 = vld [vmem:[#allocation8 + $0x80] sm:$0xf]
        %v1985 = vld [vmem:[#allocation8 + $0x84] sm:$0xf]
        %v1986 = vld [vmem:[#allocation8 + $0x88] sm:$0xf]
        %v1987 = vld [vmem:[#allocation8 + $0x8c] sm:$0xf]
        %v1988 = vld [vmem:[#allocation8 + $0x90] sm:$0xf]
        %v1989 = vld [vmem:[#allocation8 + $0x94] sm:$0xf]
        %v1990 = vld [vmem:[#allocation8 + $0x98] sm:$0xf]
        %v1991 = vld [vmem:[#allocation8 + $0x9c] sm:$0xf]
        %v1992 = vld [vmem:[#allocation8 + $0xa0] sm:$0xf]
        %v1993 = vld [vmem:[#allocation8 + $0xa4] sm:$0xf]
        %v1994 = vld [vmem:[#allocation8 + $0xa8] sm:$0xf]
        %v1995 = vld [vmem:[#allocation8 + $0xac] sm:$0xf]
        %v1996 = vld [vmem:[#allocation8 + $0xb0] sm:$0xf]
        %v1997 = vld [vmem:[#allocation8 + $0xb4] sm:$0xf]
        %v1998 = vld [vmem:[#allocation8 + $0xb8] sm:$0xf]
        %v1999 = vld [vmem:[#allocation8 + $0xbc] sm:$0xf]
        %v2000 = vld [vmem:[#allocation8 + $0xc0] sm:$0xf]
        %v2001 = vld [vmem:[#allocation8 + $0xc4] sm:$0xf]
        %v2002 = vld [vmem:[#allocation8 + $0xc8] sm:$0xf]
        %v2003 = vld [vmem:[#allocation8 + $0xcc] sm:$0xf]
        %v2004 = vld [vmem:[#allocation8 + $0xd0] sm:$0xf]
        %v2005 = vld [vmem:[#allocation8 + $0xd4] sm:$0xf]
        %v2006 = vld [vmem:[#allocation8 + $0xd8] sm:$0xf]
        %v2007 = vld [vmem:[#allocation8 + $0xdc] sm:$0xf]
        %v2008 = vld [vmem:[#allocation8 + $0xe0] sm:$0xf]
        %v2009 = vld [vmem:[#allocation8 + $0xe4] sm:$0xf]
        %v2010 = vld [vmem:[#allocation8 + $0xe8] sm:$0xf]
        %v2011 = vld [vmem:[#allocation8 + $0xec] sm:$0xf]
        %v2012 = vld [vmem:[#allocation8 + $0xf0] sm:$0xf]
        %v2013 = vld [vmem:[#allocation8 + $0xf4] sm:$0xf]
        %v2014 = vld [vmem:[#allocation8 + $0xf8] sm:$0xf]
        %v2015 = vld [vmem:[#allocation8 + $0xfc] sm:$0xf]
        %v2016 = vld [vmem:[#allocation8 + $0x100] sm:$0xf]
        %v2017 = vld [vmem:[#allocation8 + $0x104] sm:$0xf]
        %v2018 = vld [vmem:[#allocation8 + $0x108] sm:$0xf]
        %v2019 = vld [vmem:[#allocation8 + $0x10c] sm:$0xf]
        %v2020 = vld [vmem:[#allocation8 + $0x110] sm:$0xf]
        %v2021 = vld [vmem:[#allocation8 + $0x114] sm:$0xf]
        %v2022 = vld [vmem:[#allocation8 + $0x118] sm:$0xf]
        %v2023 = vld [vmem:[#allocation8 + $0x11c] sm:$0xf]
        %v2024 = vld [vmem:[#allocation8 + $0x120] sm:$0xf]
        %v2025 = vld [vmem:[#allocation8 + $0x124] sm:$0xf]
        %v2026 = vld [vmem:[#allocation8 + $0x128] sm:$0xf]
        %v2027 = vld [vmem:[#allocation8 + $0x12c] sm:$0xf]
        %v2028 = vld [vmem:[#allocation8 + $0x130] sm:$0xf]
        %v2029 = vld [vmem:[#allocation8 + $0x134] sm:$0xf]
        %v2030 = vld [vmem:[#allocation8 + $0x138] sm:$0xf]
        %v2031 = vld [vmem:[#allocation8 + $0x13c] sm:$0xf]
        %v2032 = vld [vmem:[%s4] sm:$0x1]
        %v2033 = vld [vmem:[#allocation3 + $0x38] sm:$0xf0]
        %v2034 = vld [vmem:[#allocation3 + $0x40] sm:$0xf]
        %v2035 = vld [vmem:[#allocation3 + $0x38] sm:$0xe0]
        %v2036 = vld [vmem:[#allocation3 + $0x40] sm:$0x1f]
        %v2037 = vld [vmem:[#allocation3 + $0x38] sm:$0xc0]
        %v2038 = vld [vmem:[#allocation3 + $0x40] sm:$0x3f]
        %v2039 = vld [vmem:[#allocation3 + $0x38] sm:$0x80]
        %v2040 = vld [vmem:[#allocation3 + $0x40] sm:$0x7f]
        %v2041 = vld [vmem:[#allocation3 + $0x40] sm:$0xff]
        %v2044 = vrot.slane %v2035, 1
        %v2045 = vrot.slane %v2036, 1
        %v2046 = vsel %vm774, %v2044, %v2045
        %vm2049 = vcmask 1045504
        %v2050 = vrot.slane %v2037, 2
        %v2051 = vrot.slane %v2038, 2
        %v2052 = vsel %vm2049, %v2050, %v2051
        %vm2055 = vcmask 1044480
        %v2056 = vrot.slane %v2039, 3
        %v2057 = vrot.slane %v2040, 3
        %v2058 = vsel %vm2055, %v2056, %v2057
        %v2060 = vrot.slane %v2041, 4
        %v2061 = vlaneseq
        %v2062 = vshrl.u32 %v2061, 7
        %v2063 = vsub.s32 0, %v2062
        %v2064 = vrot.slane %v2032, %v2063
        %vm2067 = vcmask 1043456
        %v2068 = vrot.slane %v2033, 4
        %v2069 = vrot.slane %v2034, 4
        %v2070 = vsel %vm2067, %v2068, %v2069
        %v2071 = vrot.slane %v2046, 4
        %v2072 = vrot.slane %v2045, 4
        %v2073 = vsel %vm2067, %v2071, %v2072
        %v2074 = vrot.slane %v2052, 4
        %v2075 = vrot.slane %v2051, 4
        %v2076 = vsel %vm2067, %v2074, %v2075
        %v2077 = vrot.slane %v2058, 4
        %v2078 = vrot.slane %v2057, 4
        %v2079 = vsel %vm2067, %v2077, %v2078
        %v2080 = vrot.slane %v2060, 4
        %v2081 = vsel %vm2067, %v2080, %v2080
        %v2167 = vunpack.c.l.b16 %v1952
        %v2168 = vunpack.c.l.b16 %v1953
        %v2169 = vunpack.c.l.b16 %v1954
        %v2170 = vunpack.c.l.b16 %v1955
        %v2171 = vunpack.c.l.b16 %v1956
        %v2172 = vunpack.c.l.b16 %v1957
        %v2173 = vunpack.c.l.b16 %v1958
        %v2174 = vunpack.c.l.b16 %v1959
        %v2175 = vunpack.c.l.b16 %v1960
        %v2176 = vunpack.c.l.b16 %v1961
        %v2177 = vunpack.c.l.b16 %v1962
        %v2178 = vunpack.c.l.b16 %v1963
        %v2179 = vunpack.c.l.b16 %v1964
        %v2180 = vunpack.c.l.b16 %v1965
        %v2181 = vunpack.c.l.b16 %v1966
        %v2182 = vunpack.c.l.b16 %v1967
        %v2183 = vunpack.c.l.b16 %v1968
        %v2184 = vunpack.c.l.b16 %v1969
        %v2185 = vunpack.c.l.b16 %v1970
        %v2186 = vunpack.c.l.b16 %v1971
        %v2187 = vunpack.c.l.b16 %v1972
        %v2188 = vunpack.c.l.b16 %v1973
        %v2189 = vunpack.c.l.b16 %v1974
        %v2190 = vunpack.c.l.b16 %v1975
        %v2191 = vunpack.c.l.b16 %v1976
        %v2192 = vunpack.c.l.b16 %v1977
        %v2193 = vunpack.c.l.b16 %v1978
        %v2194 = vunpack.c.l.b16 %v1979
        %v2195 = vunpack.c.l.b16 %v1980
        %v2196 = vunpack.c.l.b16 %v1981
        %v2197 = vunpack.c.l.b16 %v1982
        %v2198 = vunpack.c.l.b16 %v1983
        %v2199 = vunpack.c.l.b16 %v1984
        %v2200 = vunpack.c.l.b16 %v1985
        %v2201 = vunpack.c.l.b16 %v1986
        %v2202 = vunpack.c.l.b16 %v1987
        %v2203 = vunpack.c.l.b16 %v1988
        %v2204 = vunpack.c.l.b16 %v1989
        %v2205 = vunpack.c.l.b16 %v1990
        %v2206 = vunpack.c.l.b16 %v1991
        %v2207 = vunpack.c.l.b16 %v1992
        %v2208 = vunpack.c.l.b16 %v1993
        %v2209 = vunpack.c.l.b16 %v1994
        %v2210 = vunpack.c.l.b16 %v1995
        %v2211 = vunpack.c.l.b16 %v1996
        %v2212 = vunpack.c.l.b16 %v1997
        %v2213 = vunpack.c.l.b16 %v1998
        %v2214 = vunpack.c.l.b16 %v1999
        %v2215 = vunpack.c.l.b16 %v2000
        %v2216 = vunpack.c.l.b16 %v2001
        %v2217 = vunpack.c.l.b16 %v2002
        %v2218 = vunpack.c.l.b16 %v2003
        %v2219 = vunpack.c.l.b16 %v2004
        %v2220 = vunpack.c.l.b16 %v2005
        %v2221 = vunpack.c.l.b16 %v2006
        %v2222 = vunpack.c.l.b16 %v2007
        %v2223 = vunpack.c.l.b16 %v2008
        %v2224 = vunpack.c.l.b16 %v2009
        %v2225 = vunpack.c.l.b16 %v2010
        %v2226 = vunpack.c.l.b16 %v2011
        %v2227 = vunpack.c.l.b16 %v2012
        %v2228 = vunpack.c.l.b16 %v2013
        %v2229 = vunpack.c.l.b16 %v2014
        %v2230 = vunpack.c.l.b16 %v2015
        %v2231 = vunpack.c.l.b16 %v2016
        %v2232 = vunpack.c.l.b16 %v2017
        %v2233 = vunpack.c.l.b16 %v2018
        %v2234 = vunpack.c.l.b16 %v2019
        %v2235 = vunpack.c.l.b16 %v2020
        %v2236 = vunpack.c.l.b16 %v2021
        %v2237 = vunpack.c.l.b16 %v2022
        %v2238 = vunpack.c.l.b16 %v2023
        %v2239 = vunpack.c.l.b16 %v2024
        %v2240 = vunpack.c.l.b16 %v2025
        %v2241 = vunpack.c.l.b16 %v2026
        %v2242 = vunpack.c.l.b16 %v2027
        %v2243 = vunpack.c.l.b16 %v2028
        %v2244 = vunpack.c.l.b16 %v2029
        %v2245 = vunpack.c.l.b16 %v2030
        %v2246 = vunpack.c.l.b16 %v2031
        %v2247 = vpack.c.b16 %v2168, %v2167
        %v2248 = vpack.c.b16 %v2170, %v2169
        %v2249 = vpack.c.b16 %v2172, %v2171
        %v2250 = vpack.c.b16 %v2174, %v2173
        %v2251 = vpack.c.b16 %v2176, %v2175
        %v2252 = vpack.c.b16 %v2178, %v2177
        %v2253 = vpack.c.b16 %v2180, %v2179
        %v2254 = vpack.c.b16 %v2182, %v2181
        %v2255 = vpack.c.b16 %v2184, %v2183
        %v2256 = vpack.c.b16 %v2186, %v2185
        %v2257 = vpack.c.b16 %v2188, %v2187
        %v2258 = vpack.c.b16 %v2190, %v2189
        %v2259 = vpack.c.b16 %v2192, %v2191
        %v2260 = vpack.c.b16 %v2194, %v2193
        %v2261 = vpack.c.b16 %v2196, %v2195
        %v2262 = vpack.c.b16 %v2198, %v2197
        %v2263 = vpack.c.b16 %v2200, %v2199
        %v2264 = vpack.c.b16 %v2202, %v2201
        %v2265 = vpack.c.b16 %v2204, %v2203
        %v2266 = vpack.c.b16 %v2206, %v2205
        %v2267 = vpack.c.b16 %v2208, %v2207
        %v2268 = vpack.c.b16 %v2210, %v2209
        %v2269 = vpack.c.b16 %v2212, %v2211
        %v2270 = vpack.c.b16 %v2214, %v2213
        %v2271 = vpack.c.b16 %v2216, %v2215
        %v2272 = vpack.c.b16 %v2218, %v2217
        %v2273 = vpack.c.b16 %v2220, %v2219
        %v2274 = vpack.c.b16 %v2222, %v2221
        %v2275 = vpack.c.b16 %v2224, %v2223
        %v2276 = vpack.c.b16 %v2226, %v2225
        %v2277 = vpack.c.b16 %v2228, %v2227
        %v2278 = vpack.c.b16 %v2230, %v2229
        %v2279 = vpack.c.b16 %v2232, %v2231
        %v2280 = vpack.c.b16 %v2234, %v2233
        %v2281 = vpack.c.b16 %v2236, %v2235
        %v2282 = vpack.c.b16 %v2238, %v2237
        %v2283 = vpack.c.b16 %v2240, %v2239
        %v2284 = vpack.c.b16 %v2242, %v2241
        %v2285 = vpack.c.b16 %v2244, %v2243
        %v2286 = vpack.c.b16 %v2246, %v2245
        %2327 = vmatprep.subr.bf16.mxu0 0
        %2328 = vmatpush1.bf16.msra.mxu0 %v2247
        %2329 = vmatprep.subr.bf16.mxu0 0
        %2330 = vmatpush1.bf16.msra.mxu0 %v2248
        %2331 = vmatprep.subr.bf16.mxu0 0
        %2332 = vmatpush1.bf16.msra.mxu0 %v2249
        %2333 = vmatprep.subr.bf16.mxu0 0
        %2334 = vmatpush1.bf16.msra.mxu0 %v2250
        %2335 = vmatprep.subr.bf16.mxu0 0
        %2336 = vmatpush1.bf16.msra.mxu0 %v2251
        %2337 = vmatprep.subr.bf16.mxu0 0
        %2338 = vmatpush1.bf16.msra.mxu0 %v2252
        %2339 = vmatprep.subr.bf16.mxu0 0
        %2340 = vmatpush1.bf16.msra.mxu0 %v2253
        %2341 = vmatprep.subr.bf16.mxu0 0
        %2342 = vmatpush1.bf16.msra.mxu0 %v2254
        %2343 = vmatprep.subr.bf16.mxu0 0
        %2344 = vmatpush1.bf16.msra.mxu0 %v2255
        %2345 = vmatprep.subr.bf16.mxu0 0
        %2346 = vmatpush1.bf16.msra.mxu0 %v2256
        %2347 = vmatprep.subr.bf16.mxu0 0
        %2348 = vmatpush1.bf16.msra.mxu0 %v2257
        %2349 = vmatprep.subr.bf16.mxu0 0
        %2350 = vmatpush1.bf16.msra.mxu0 %v2258
        %2351 = vmatprep.subr.bf16.mxu0 0
        %2352 = vmatpush1.bf16.msra.mxu0 %v2259
        %2353 = vmatprep.subr.bf16.mxu0 0
        %2354 = vmatpush1.bf16.msra.mxu0 %v2260
        %2355 = vmatprep.subr.bf16.mxu0 0
        %2356 = vmatpush1.bf16.msra.mxu0 %v2261
        %2357 = vmatprep.subr.bf16.mxu0 0
        %2358 = vmatpush1.bf16.msra.mxu0 %v2262
        %2359 = vmatprep.mubr.bf16.mxu0 %v2073
        %2360 = vmatmul.mubr.bf16.gmra.mrb[0].mxu0 %v2070
        %v2361 = vpop.f32.mrb[0].mxu0
        %v2362 = vadd.f32 %v2064, %v2361
        %v2363 = vpop.f32.mrb[0].mxu0
        %v2364 = vpop.f32.mrb[0].mxu0
        %v2365 = vadd.f32 %v2064, %v2364
        %v2366 = vpop.f32.mrb[0].mxu0
        %2367 = vdwg.mxu0
        %2368 = vmatprep.subr.bf16.mxu0 0
        %2369 = vmatpush1.bf16.msra.mxu0 %v2263
        %2370 = vmatprep.subr.bf16.mxu0 0
        %2371 = vmatpush1.bf16.msra.mxu0 %v2264
        %2372 = vmatprep.subr.bf16.mxu0 0
        %2373 = vmatpush1.bf16.msra.mxu0 %v2265
        %2374 = vmatprep.subr.bf16.mxu0 0
        %2375 = vmatpush1.bf16.msra.mxu0 %v2266
        %2376 = vmatprep.subr.bf16.mxu0 0
        %2377 = vmatpush1.bf16.msra.mxu0 %v2267
        %2378 = vmatprep.subr.bf16.mxu0 0
        %2379 = vmatpush1.bf16.msra.mxu0 %v2268
        %2380 = vmatprep.subr.bf16.mxu0 0
        %2381 = vmatpush1.bf16.msra.mxu0 %v2269
        %2382 = vmatprep.subr.bf16.mxu0 0
        %2383 = vmatpush1.bf16.msra.mxu0 %v2270
        %2384 = vmatprep.subr.bf16.mxu0 0
        %2385 = vmatpush1.bf16.msra.mxu0 %v2271
        %2386 = vmatprep.subr.bf16.mxu0 0
        %2387 = vmatpush1.bf16.msra.mxu0 %v2272
        %2388 = vmatprep.subr.bf16.mxu0 0
        %2389 = vmatpush1.bf16.msra.mxu0 %v2273
        %2390 = vmatprep.subr.bf16.mxu0 0
        %2391 = vmatpush1.bf16.msra.mxu0 %v2274
        %2392 = vmatprep.subr.bf16.mxu0 0
        %2393 = vmatpush1.bf16.msra.mxu0 %v2275
        %2394 = vmatprep.subr.bf16.mxu0 0
        %2395 = vmatpush1.bf16.msra.mxu0 %v2276
        %2396 = vmatprep.subr.bf16.mxu0 0
        %2397 = vmatpush1.bf16.msra.mxu0 %v2277
        %2398 = vmatprep.subr.bf16.mxu0 0
        %2399 = vmatpush1.bf16.msra.mxu0 %v2278
        %2400 = vmatprep.mubr.bf16.mxu0 %v2079
        %2401 = vmatmul.mubr.bf16.gmra.mrb[0].mxu0 %v2076
        %v2402 = vpop.f32.mrb[0].mxu0
        %v2403 = vadd.f32 %v2362, %v2402
        %v2404 = vpop.f32.mrb[0].mxu0
        %v2405 = vpop.f32.mrb[0].mxu0
        %v2406 = vadd.f32 %v2365, %v2405
        %v2407 = vpop.f32.mrb[0].mxu0
        %2408 = vdwg.mxu0
        %2409 = vmatprep.subr.bf16.mxu0 0
        %2410 = vmatpush1.bf16.msra.mxu0 %v2279
        %2411 = vmatprep.subr.bf16.mxu0 0
        %2412 = vmatpush1.bf16.msra.mxu0 %v2280
        %2413 = vmatprep.subr.bf16.mxu0 0
        %2414 = vmatpush1.bf16.msra.mxu0 %v2281
        %2415 = vmatprep.subr.bf16.mxu0 0
        %2416 = vmatpush1.bf16.msra.mxu0 %v2282
        %2417 = vmatprep.subr.bf16.mxu0 0
        %2418 = vmatpush1.bf16.msra.mxu0 %v2283
        %2419 = vmatprep.subr.bf16.mxu0 0
        %2420 = vmatpush1.bf16.msra.mxu0 %v2284
        %2421 = vmatprep.subr.bf16.mxu0 0
        %2422 = vmatpush1.bf16.msra.mxu0 %v2285
        %2423 = vmatprep.subr.bf16.mxu0 0
        %2424 = vmatpush1.bf16.msra.mxu0 %v2286
        %2425 = vmatprep.subr.bf16.mxu0 0
        %2426 = vmatpush1.bf16.msra.mxu0 0
        %2427 = vmatprep.subr.bf16.mxu0 0
        %2428 = vmatpush1.bf16.msra.mxu0 0
        %2429 = vmatprep.subr.bf16.mxu0 0
        %2430 = vmatpush1.bf16.msra.mxu0 0
        %2431 = vmatprep.subr.bf16.mxu0 0
        %2432 = vmatpush1.bf16.msra.mxu0 0
        %2433 = vmatprep.subr.bf16.mxu0 0
        %2434 = vmatpush1.bf16.msra.mxu0 0
        %2435 = vmatprep.subr.bf16.mxu0 0
        %2436 = vmatpush1.bf16.msra.mxu0 0
        %2437 = vmatprep.subr.bf16.mxu0 0
        %2438 = vmatpush1.bf16.msra.mxu0 0
        %2439 = vmatprep.subr.bf16.mxu0 0
        %2440 = vmatpush1.bf16.msra.mxu0 0
        %2441 = vmatprep.mubr.bf16.mxu0 0
        %2442 = vmatmul.mubr.bf16.gmra.mrb[0].mxu0 %v2081
        %v2443 = vpop.f32.mrb[0].mxu0
        %v2444 = vadd.f32 %v2403, %v2443
        %v2445 = vpop.f32.mrb[0].mxu0
        %v2446 = vpop.f32.mrb[0].mxu0
        %v2447 = vadd.f32 %v2406, %v2446
        %v2448 = vpop.f32.mrb[0].mxu0
        %2449 = vdwg.mxu0
        %v2450 = vmax.f32 %v2444, 0.0
        %v2451 = vmax.f32 %v2447, 0.0
        %v2452 = vpack.c.bf16 %v2451, %v2450
        %2453 = vst [vmem:[#allocation4 + $0x80] sm:$0xff] %v2452
        %s2454 = scalar_lea.vmem [#allocation8], 320
        %v2455 = vld [vmem:[%s2454] sm:$0xf]
        %v2456 = vld [vmem:[%s2454 + $0x4] sm:$0xf]
        %v2457 = vld [vmem:[%s2454 + $0x8] sm:$0xf]
        %v2458 = vld [vmem:[%s2454 + $0xc] sm:$0xf]
        %v2459 = vld [vmem:[%s2454 + $0x10] sm:$0xf]
        %v2460 = vld [vmem:[%s2454 + $0x14] sm:$0xf]
        %v2461 = vld [vmem:[%s2454 + $0x18] sm:$0xf]
        %v2462 = vld [vmem:[%s2454 + $0x1c] sm:$0xf]
        %v2463 = vld [vmem:[%s2454 + $0x20] sm:$0xf]
        %v2464 = vld [vmem:[%s2454 + $0x24] sm:$0xf]
        %v2465 = vld [vmem:[%s2454 + $0x28] sm:$0xf]
        %v2466 = vld [vmem:[%s2454 + $0x2c] sm:$0xf]
        %v2467 = vld [vmem:[%s2454 + $0x30] sm:$0xf]
        %v2468 = vld [vmem:[%s2454 + $0x34] sm:$0xf]
        %v2469 = vld [vmem:[%s2454 + $0x38] sm:$0xf]
        %v2470 = vld [vmem:[%s2454 + $0x3c] sm:$0xf]
        %v2471 = vld [vmem:[%s2454 + $0x40] sm:$0xf]
        %v2472 = vld [vmem:[%s2454 + $0x44] sm:$0xf]
        %v2473 = vld [vmem:[%s2454 + $0x48] sm:$0xf]
        %v2474 = vld [vmem:[%s2454 + $0x4c] sm:$0xf]
        %v2475 = vld [vmem:[%s2454 + $0x50] sm:$0xf]
        %v2476 = vld [vmem:[%s2454 + $0x54] sm:$0xf]
        %v2477 = vld [vmem:[%s2454 + $0x58] sm:$0xf]
        %v2478 = vld [vmem:[%s2454 + $0x5c] sm:$0xf]
        %v2479 = vld [vmem:[%s2454 + $0x60] sm:$0xf]
        %v2480 = vld [vmem:[%s2454 + $0x64] sm:$0xf]
        %v2481 = vld [vmem:[%s2454 + $0x68] sm:$0xf]
        %v2482 = vld [vmem:[%s2454 + $0x6c] sm:$0xf]
        %v2483 = vld [vmem:[%s2454 + $0x70] sm:$0xf]
        %v2484 = vld [vmem:[%s2454 + $0x74] sm:$0xf]
        %v2485 = vld [vmem:[%s2454 + $0x78] sm:$0xf]
        %v2486 = vld [vmem:[%s2454 + $0x7c] sm:$0xf]
        %v2487 = vld [vmem:[%s2454 + $0x80] sm:$0xf]
        %v2488 = vld [vmem:[%s2454 + $0x84] sm:$0xf]
        %v2489 = vld [vmem:[%s2454 + $0x88] sm:$0xf]
        %v2490 = vld [vmem:[%s2454 + $0x8c] sm:$0xf]
        %v2491 = vld [vmem:[%s2454 + $0x90] sm:$0xf]
        %v2492 = vld [vmem:[%s2454 + $0x94] sm:$0xf]
        %v2493 = vld [vmem:[%s2454 + $0x98] sm:$0xf]
        %v2494 = vld [vmem:[%s2454 + $0x9c] sm:$0xf]
        %v2495 = vld [vmem:[%s2454 + $0xa0] sm:$0xf]
        %v2496 = vld [vmem:[%s2454 + $0xa4] sm:$0xf]
        %v2497 = vld [vmem:[%s2454 + $0xa8] sm:$0xf]
        %v2498 = vld [vmem:[%s2454 + $0xac] sm:$0xf]
        %v2499 = vld [vmem:[%s2454 + $0xb0] sm:$0xf]
        %v2500 = vld [vmem:[%s2454 + $0xb4] sm:$0xf]
        %v2501 = vld [vmem:[%s2454 + $0xb8] sm:$0xf]
        %v2502 = vld [vmem:[%s2454 + $0xbc] sm:$0xf]
        %v2503 = vld [vmem:[%s2454 + $0xc0] sm:$0xf]
        %v2504 = vld [vmem:[%s2454 + $0xc4] sm:$0xf]
        %v2505 = vld [vmem:[%s2454 + $0xc8] sm:$0xf]
        %v2506 = vld [vmem:[%s2454 + $0xcc] sm:$0xf]
        %v2507 = vld [vmem:[%s2454 + $0xd0] sm:$0xf]
        %v2508 = vld [vmem:[%s2454 + $0xd4] sm:$0xf]
        %v2509 = vld [vmem:[%s2454 + $0xd8] sm:$0xf]
        %v2510 = vld [vmem:[%s2454 + $0xdc] sm:$0xf]
        %v2511 = vld [vmem:[%s2454 + $0xe0] sm:$0xf]
        %v2512 = vld [vmem:[%s2454 + $0xe4] sm:$0xf]
        %v2513 = vld [vmem:[%s2454 + $0xe8] sm:$0xf]
        %v2514 = vld [vmem:[%s2454 + $0xec] sm:$0xf]
        %v2515 = vld [vmem:[%s2454 + $0xf0] sm:$0xf]
        %v2516 = vld [vmem:[%s2454 + $0xf4] sm:$0xf]
        %v2517 = vld [vmem:[%s2454 + $0xf8] sm:$0xf]
        %v2518 = vld [vmem:[%s2454 + $0xfc] sm:$0xf]
        %v2519 = vld [vmem:[%s2454 + $0x100] sm:$0xf]
        %v2520 = vld [vmem:[%s2454 + $0x104] sm:$0xf]
        %v2521 = vld [vmem:[%s2454 + $0x108] sm:$0xf]
        %v2522 = vld [vmem:[%s2454 + $0x10c] sm:$0xf]
        %v2523 = vld [vmem:[%s2454 + $0x110] sm:$0xf]
        %v2524 = vld [vmem:[%s2454 + $0x114] sm:$0xf]
        %v2525 = vld [vmem:[%s2454 + $0x118] sm:$0xf]
        %v2526 = vld [vmem:[%s2454 + $0x11c] sm:$0xf]
        %v2527 = vld [vmem:[%s2454 + $0x120] sm:$0xf]
        %v2528 = vld [vmem:[%s2454 + $0x124] sm:$0xf]
        %v2529 = vld [vmem:[%s2454 + $0x128] sm:$0xf]
        %v2530 = vld [vmem:[%s2454 + $0x12c] sm:$0xf]
        %v2531 = vld [vmem:[%s2454 + $0x130] sm:$0xf]
        %v2532 = vld [vmem:[%s2454 + $0x134] sm:$0xf]
        %v2533 = vld [vmem:[%s2454 + $0x138] sm:$0xf]
        %v2534 = vld [vmem:[%s2454 + $0x13c] sm:$0xf]
        %v2535 = vld [vmem:[%s4 + $0x1] sm:$0x1]
        %v2536 = vld [vmem:[#allocation4 + $0x78] sm:$0xff]
        %v2537 = vld [vmem:[#allocation4 + $0x78] sm:$0xfc]
        %v2538 = vld [vmem:[#allocation4 + $0x80] sm:$0x3]
        %v2539 = vld [vmem:[#allocation4 + $0x78] sm:$0xf0]
        %v2540 = vld [vmem:[#allocation4 + $0x80] sm:$0xf]
        %v2541 = vld [vmem:[#allocation4 + $0x78] sm:$0xc0]
        %v2542 = vld [vmem:[#allocation4 + $0x80] sm:$0x3f]
        %v2543 = vld [vmem:[#allocation4 + $0x80] sm:$0xff]
        %v2546 = vrot.slane %v2537, 2
        %v2547 = vrot.slane %v2538, 2
        %v2548 = vsel %vm2049, %v2546, %v2547
        %v2552 = vrot.slane %v2539, 4
        %v2553 = vrot.slane %v2540, 4
        %v2554 = vsel %vm2067, %v2552, %v2553
        %v2558 = vrot.slane %v2541, 6
        %v2559 = vrot.slane %v2542, 6
        %v2560 = vsel %vm842, %v2558, %v2559
        %v2562 = vlaneseq
        %v2563 = vshrl.u32 %v2562, 7
        %v2564 = vsub.s32 0, %v2563
        %v2565 = vrot.slane %v2535, %v2564
        %v2646 = vunpack.c.l.b16 %v2455
        %v2647 = vunpack.c.l.b16 %v2456
        %v2648 = vunpack.c.l.b16 %v2457
        %v2649 = vunpack.c.l.b16 %v2458
        %v2650 = vunpack.c.l.b16 %v2459
        %v2651 = vunpack.c.l.b16 %v2460
        %v2652 = vunpack.c.l.b16 %v2461
        %v2653 = vunpack.c.l.b16 %v2462
        %v2654 = vunpack.c.l.b16 %v2463
        %v2655 = vunpack.c.l.b16 %v2464
        %v2656 = vunpack.c.l.b16 %v2465
        %v2657 = vunpack.c.l.b16 %v2466
        %v2658 = vunpack.c.l.b16 %v2467
        %v2659 = vunpack.c.l.b16 %v2468
        %v2660 = vunpack.c.l.b16 %v2469
        %v2661 = vunpack.c.l.b16 %v2470
        %v2662 = vunpack.c.l.b16 %v2471
        %v2663 = vunpack.c.l.b16 %v2472
        %v2664 = vunpack.c.l.b16 %v2473
        %v2665 = vunpack.c.l.b16 %v2474
        %v2666 = vunpack.c.l.b16 %v2475
        %v2667 = vunpack.c.l.b16 %v2476
        %v2668 = vunpack.c.l.b16 %v2477
        %v2669 = vunpack.c.l.b16 %v2478
        %v2670 = vunpack.c.l.b16 %v2479
        %v2671 = vunpack.c.l.b16 %v2480
        %v2672 = vunpack.c.l.b16 %v2481
        %v2673 = vunpack.c.l.b16 %v2482
        %v2674 = vunpack.c.l.b16 %v2483
        %v2675 = vunpack.c.l.b16 %v2484
        %v2676 = vunpack.c.l.b16 %v2485
        %v2677 = vunpack.c.l.b16 %v2486
        %v2678 = vunpack.c.l.b16 %v2487
        %v2679 = vunpack.c.l.b16 %v2488
        %v2680 = vunpack.c.l.b16 %v2489
        %v2681 = vunpack.c.l.b16 %v2490
        %v2682 = vunpack.c.l.b16 %v2491
        %v2683 = vunpack.c.l.b16 %v2492
        %v2684 = vunpack.c.l.b16 %v2493
        %v2685 = vunpack.c.l.b16 %v2494
        %v2686 = vunpack.c.l.b16 %v2495
        %v2687 = vunpack.c.l.b16 %v2496
        %v2688 = vunpack.c.l.b16 %v2497
        %v2689 = vunpack.c.l.b16 %v2498
        %v2690 = vunpack.c.l.b16 %v2499
        %v2691 = vunpack.c.l.b16 %v2500
        %v2692 = vunpack.c.l.b16 %v2501
        %v2693 = vunpack.c.l.b16 %v2502
        %v2694 = vunpack.c.l.b16 %v2503
        %v2695 = vunpack.c.l.b16 %v2504
        %v2696 = vunpack.c.l.b16 %v2505
        %v2697 = vunpack.c.l.b16 %v2506
        %v2698 = vunpack.c.l.b16 %v2507
        %v2699 = vunpack.c.l.b16 %v2508
        %v2700 = vunpack.c.l.b16 %v2509
        %v2701 = vunpack.c.l.b16 %v2510
        %v2702 = vunpack.c.l.b16 %v2511
        %v2703 = vunpack.c.l.b16 %v2512
        %v2704 = vunpack.c.l.b16 %v2513
        %v2705 = vunpack.c.l.b16 %v2514
        %v2706 = vunpack.c.l.b16 %v2515
        %v2707 = vunpack.c.l.b16 %v2516
        %v2708 = vunpack.c.l.b16 %v2517
        %v2709 = vunpack.c.l.b16 %v2518
        %v2710 = vunpack.c.l.b16 %v2519
        %v2711 = vunpack.c.l.b16 %v2520
        %v2712 = vunpack.c.l.b16 %v2521
        %v2713 = vunpack.c.l.b16 %v2522
        %v2714 = vunpack.c.l.b16 %v2523
        %v2715 = vunpack.c.l.b16 %v2524
        %v2716 = vunpack.c.l.b16 %v2525
        %v2717 = vunpack.c.l.b16 %v2526
        %v2718 = vunpack.c.l.b16 %v2527
        %v2719 = vunpack.c.l.b16 %v2528
        %v2720 = vunpack.c.l.b16 %v2529
        %v2721 = vunpack.c.l.b16 %v2530
        %v2722 = vunpack.c.l.b16 %v2531
        %v2723 = vunpack.c.l.b16 %v2532
        %v2724 = vunpack.c.l.b16 %v2533
        %v2725 = vunpack.c.l.b16 %v2534
        %v2726 = vpack.c.b16 %v2647, %v2646
        %v2727 = vpack.c.b16 %v2649, %v2648
        %v2728 = vpack.c.b16 %v2651, %v2650
        %v2729 = vpack.c.b16 %v2653, %v2652
        %v2730 = vpack.c.b16 %v2655, %v2654
        %v2731 = vpack.c.b16 %v2657, %v2656
        %v2732 = vpack.c.b16 %v2659, %v2658
        %v2733 = vpack.c.b16 %v2661, %v2660
        %v2734 = vpack.c.b16 %v2663, %v2662
        %v2735 = vpack.c.b16 %v2665, %v2664
        %v2736 = vpack.c.b16 %v2667, %v2666
        %v2737 = vpack.c.b16 %v2669, %v2668
        %v2738 = vpack.c.b16 %v2671, %v2670
        %v2739 = vpack.c.b16 %v2673, %v2672
        %v2740 = vpack.c.b16 %v2675, %v2674
        %v2741 = vpack.c.b16 %v2677, %v2676
        %v2742 = vpack.c.b16 %v2679, %v2678
        %v2743 = vpack.c.b16 %v2681, %v2680
        %v2744 = vpack.c.b16 %v2683, %v2682
        %v2745 = vpack.c.b16 %v2685, %v2684
        %v2746 = vpack.c.b16 %v2687, %v2686
        %v2747 = vpack.c.b16 %v2689, %v2688
        %v2748 = vpack.c.b16 %v2691, %v2690
        %v2749 = vpack.c.b16 %v2693, %v2692
        %v2750 = vpack.c.b16 %v2695, %v2694
        %v2751 = vpack.c.b16 %v2697, %v2696
        %v2752 = vpack.c.b16 %v2699, %v2698
        %v2753 = vpack.c.b16 %v2701, %v2700
        %v2754 = vpack.c.b16 %v2703, %v2702
        %v2755 = vpack.c.b16 %v2705, %v2704
        %v2756 = vpack.c.b16 %v2707, %v2706
        %v2757 = vpack.c.b16 %v2709, %v2708
        %v2758 = vpack.c.b16 %v2711, %v2710
        %v2759 = vpack.c.b16 %v2713, %v2712
        %v2760 = vpack.c.b16 %v2715, %v2714
        %v2761 = vpack.c.b16 %v2717, %v2716
        %v2762 = vpack.c.b16 %v2719, %v2718
        %v2763 = vpack.c.b16 %v2721, %v2720
        %v2764 = vpack.c.b16 %v2723, %v2722
        %v2765 = vpack.c.b16 %v2725, %v2724
        %2806 = vmatprep.subr.bf16.mxu0 0
        %2807 = vmatpush1.bf16.msra.mxu0 %v2726
        %2808 = vmatprep.subr.bf16.mxu0 0
        %2809 = vmatpush1.bf16.msra.mxu0 %v2727
        %2810 = vmatprep.subr.bf16.mxu0 0
        %2811 = vmatpush1.bf16.msra.mxu0 %v2728
        %2812 = vmatprep.subr.bf16.mxu0 0
        %2813 = vmatpush1.bf16.msra.mxu0 %v2729
        %2814 = vmatprep.subr.bf16.mxu0 0
        %2815 = vmatpush1.bf16.msra.mxu0 %v2730
        %2816 = vmatprep.subr.bf16.mxu0 0
        %2817 = vmatpush1.bf16.msra.mxu0 %v2731
        %2818 = vmatprep.subr.bf16.mxu0 0
        %2819 = vmatpush1.bf16.msra.mxu0 %v2732
        %2820 = vmatprep.subr.bf16.mxu0 0
        %2821 = vmatpush1.bf16.msra.mxu0 %v2733
        %2822 = vmatprep.subr.bf16.mxu0 0
        %2823 = vmatpush1.bf16.msra.mxu0 %v2734
        %2824 = vmatprep.subr.bf16.mxu0 0
        %2825 = vmatpush1.bf16.msra.mxu0 %v2735
        %2826 = vmatprep.subr.bf16.mxu0 0
        %2827 = vmatpush1.bf16.msra.mxu0 %v2736
        %2828 = vmatprep.subr.bf16.mxu0 0
        %2829 = vmatpush1.bf16.msra.mxu0 %v2737
        %2830 = vmatprep.subr.bf16.mxu0 0
        %2831 = vmatpush1.bf16.msra.mxu0 %v2738
        %2832 = vmatprep.subr.bf16.mxu0 0
        %2833 = vmatpush1.bf16.msra.mxu0 %v2739
        %2834 = vmatprep.subr.bf16.mxu0 0
        %2835 = vmatpush1.bf16.msra.mxu0 %v2740
        %2836 = vmatprep.subr.bf16.mxu0 0
        %2837 = vmatpush1.bf16.msra.mxu0 %v2741
        %2838 = vmatprep.mubr.bf16.mxu0 %v2548
        %2839 = vmatmul.mubr.bf16.gmra.mrb[0].mxu0 %v2536
        %v2840 = vpop.f32.mrb[0].mxu0
        %v2841 = vadd.f32 %v2565, %v2840
        %v2842 = vpop.f32.mrb[0].mxu0
        %v2843 = vpop.f32.mrb[0].mxu0
        %v2844 = vadd.f32 %v2565, %v2843
        %v2845 = vpop.f32.mrb[0].mxu0
        %2846 = vdwg.mxu0
        %2847 = vmatprep.subr.bf16.mxu0 0
        %2848 = vmatpush1.bf16.msra.mxu0 %v2742
        %2849 = vmatprep.subr.bf16.mxu0 0
        %2850 = vmatpush1.bf16.msra.mxu0 %v2743
        %2851 = vmatprep.subr.bf16.mxu0 0
        %2852 = vmatpush1.bf16.msra.mxu0 %v2744
        %2853 = vmatprep.subr.bf16.mxu0 0
        %2854 = vmatpush1.bf16.msra.mxu0 %v2745
        %2855 = vmatprep.subr.bf16.mxu0 0
        %2856 = vmatpush1.bf16.msra.mxu0 %v2746
        %2857 = vmatprep.subr.bf16.mxu0 0
        %2858 = vmatpush1.bf16.msra.mxu0 %v2747
        %2859 = vmatprep.subr.bf16.mxu0 0
        %2860 = vmatpush1.bf16.msra.mxu0 %v2748
        %2861 = vmatprep.subr.bf16.mxu0 0
        %2862 = vmatpush1.bf16.msra.mxu0 %v2749
        %2863 = vmatprep.subr.bf16.mxu0 0
        %2864 = vmatpush1.bf16.msra.mxu0 %v2750
        %2865 = vmatprep.subr.bf16.mxu0 0
        %2866 = vmatpush1.bf16.msra.mxu0 %v2751
        %2867 = vmatprep.subr.bf16.mxu0 0
        %2868 = vmatpush1.bf16.msra.mxu0 %v2752
        %2869 = vmatprep.subr.bf16.mxu0 0
        %2870 = vmatpush1.bf16.msra.mxu0 %v2753
        %2871 = vmatprep.subr.bf16.mxu0 0
        %2872 = vmatpush1.bf16.msra.mxu0 %v2754
        %2873 = vmatprep.subr.bf16.mxu0 0
        %2874 = vmatpush1.bf16.msra.mxu0 %v2755
        %2875 = vmatprep.subr.bf16.mxu0 0
        %2876 = vmatpush1.bf16.msra.mxu0 %v2756
        %2877 = vmatprep.subr.bf16.mxu0 0
        %2878 = vmatpush1.bf16.msra.mxu0 %v2757
        %2879 = vmatprep.mubr.bf16.mxu0 %v2560
        %2880 = vmatmul.mubr.bf16.gmra.mrb[0].mxu0 %v2554
        %v2881 = vpop.f32.mrb[0].mxu0
        %v2882 = vadd.f32 %v2841, %v2881
        %v2883 = vpop.f32.mrb[0].mxu0
        %v2884 = vpop.f32.mrb[0].mxu0
        %v2885 = vadd.f32 %v2844, %v2884
        %v2886 = vpop.f32.mrb[0].mxu0
        %2887 = vdwg.mxu0
        %2888 = vmatprep.subr.bf16.mxu0 0
        %2889 = vmatpush1.bf16.msra.mxu0 %v2758
        %2890 = vmatprep.subr.bf16.mxu0 0
        %2891 = vmatpush1.bf16.msra.mxu0 %v2759
        %2892 = vmatprep.subr.bf16.mxu0 0
        %2893 = vmatpush1.bf16.msra.mxu0 %v2760
        %2894 = vmatprep.subr.bf16.mxu0 0
        %2895 = vmatpush1.bf16.msra.mxu0 %v2761
        %2896 = vmatprep.subr.bf16.mxu0 0
        %2897 = vmatpush1.bf16.msra.mxu0 %v2762
        %2898 = vmatprep.subr.bf16.mxu0 0
        %2899 = vmatpush1.bf16.msra.mxu0 %v2763
        %2900 = vmatprep.subr.bf16.mxu0 0
        %2901 = vmatpush1.bf16.msra.mxu0 %v2764
        %2902 = vmatprep.subr.bf16.mxu0 0
        %2903 = vmatpush1.bf16.msra.mxu0 %v2765
        %2904 = vmatprep.subr.bf16.mxu0 0
        %2905 = vmatpush1.bf16.msra.mxu0 0
        %2906 = vmatprep.subr.bf16.mxu0 0
        %2907 = vmatpush1.bf16.msra.mxu0 0
        %2908 = vmatprep.subr.bf16.mxu0 0
        %2909 = vmatpush1.bf16.msra.mxu0 0
        %2910 = vmatprep.subr.bf16.mxu0 0
        %2911 = vmatpush1.bf16.msra.mxu0 0
        %2912 = vmatprep.subr.bf16.mxu0 0
        %2913 = vmatpush1.bf16.msra.mxu0 0
        %2914 = vmatprep.subr.bf16.mxu0 0
        %2915 = vmatpush1.bf16.msra.mxu0 0
        %2916 = vmatprep.subr.bf16.mxu0 0
        %2917 = vmatpush1.bf16.msra.mxu0 0
        %2918 = vmatprep.subr.bf16.mxu0 0
        %2919 = vmatpush1.bf16.msra.mxu0 0
        %2920 = vmatprep.mubr.bf16.mxu0 0
        %2921 = vmatmul.mubr.bf16.gmra.mrb[0].mxu0 %v2543
        %v2922 = vpop.f32.mrb[0].mxu0
        %v2923 = vadd.f32 %v2882, %v2922
        %v2924 = vpop.f32.mrb[0].mxu0
        %v2925 = vpop.f32.mrb[0].mxu0
        %v2926 = vadd.f32 %v2885, %v2925
        %v2927 = vpop.f32.mrb[0].mxu0
        %2928 = vdwg.mxu0
        %v2929 = vmax.f32 %v2923, 0.0
        %v2930 = vmax.f32 %v2926, 0.0
        %v2931 = vpack.c.bf16 %v2930, %v2929
        %2932 = vst [vmem:[#allocation3 + $0x40] sm:$0xff] %v2931
        %s2933 = scalar_lea.vmem [#allocation8], 640
        %v2934 = vld [vmem:[%s2933] sm:$0xf]
        %v2935 = vld [vmem:[%s2933 + $0x4] sm:$0xf]
        %v2936 = vld [vmem:[%s2933 + $0x8] sm:$0xf]
        %v2937 = vld [vmem:[%s2933 + $0xc] sm:$0xf]
        %v2938 = vld [vmem:[%s2933 + $0x10] sm:$0xf]
        %v2939 = vld [vmem:[%s2933 + $0x14] sm:$0xf]
        %v2940 = vld [vmem:[%s2933 + $0x18] sm:$0xf]
        %v2941 = vld [vmem:[%s2933 + $0x1c] sm:$0xf]
        %v2942 = vld [vmem:[%s2933 + $0x20] sm:$0xf]
        %v2943 = vld [vmem:[%s2933 + $0x24] sm:$0xf]
        %v2944 = vld [vmem:[%s2933 + $0x28] sm:$0xf]
        %v2945 = vld [vmem:[%s2933 + $0x2c] sm:$0xf]
        %v2946 = vld [vmem:[%s2933 + $0x30] sm:$0xf]
        %v2947 = vld [vmem:[%s2933 + $0x34] sm:$0xf]
        %v2948 = vld [vmem:[%s2933 + $0x38] sm:$0xf]
        %v2949 = vld [vmem:[%s2933 + $0x3c] sm:$0xf]
        %v2950 = vld [vmem:[%s2933 + $0x40] sm:$0xf]
        %v2951 = vld [vmem:[%s2933 + $0x44] sm:$0xf]
        %v2952 = vld [vmem:[%s2933 + $0x48] sm:$0xf]
        %v2953 = vld [vmem:[%s2933 + $0x4c] sm:$0xf]
        %v2954 = vld [vmem:[%s2933 + $0x50] sm:$0xf]
        %v2955 = vld [vmem:[%s2933 + $0x54] sm:$0xf]
        %v2956 = vld [vmem:[%s2933 + $0x58] sm:$0xf]
        %v2957 = vld [vmem:[%s2933 + $0x5c] sm:$0xf]
        %v2958 = vld [vmem:[%s2933 + $0x60] sm:$0xf]
        %v2959 = vld [vmem:[%s2933 + $0x64] sm:$0xf]
        %v2960 = vld [vmem:[%s2933 + $0x68] sm:$0xf]
        %v2961 = vld [vmem:[%s2933 + $0x6c] sm:$0xf]
        %v2962 = vld [vmem:[%s2933 + $0x70] sm:$0xf]
        %v2963 = vld [vmem:[%s2933 + $0x74] sm:$0xf]
        %v2964 = vld [vmem:[%s2933 + $0x78] sm:$0xf]
        %v2965 = vld [vmem:[%s2933 + $0x7c] sm:$0xf]
        %v2966 = vld [vmem:[%s2933 + $0x80] sm:$0xf]
        %v2967 = vld [vmem:[%s2933 + $0x84] sm:$0xf]
        %v2968 = vld [vmem:[%s2933 + $0x88] sm:$0xf]
        %v2969 = vld [vmem:[%s2933 + $0x8c] sm:$0xf]
        %v2970 = vld [vmem:[%s2933 + $0x90] sm:$0xf]
        %v2971 = vld [vmem:[%s2933 + $0x94] sm:$0xf]
        %v2972 = vld [vmem:[%s2933 + $0x98] sm:$0xf]
        %v2973 = vld [vmem:[%s2933 + $0x9c] sm:$0xf]
        %v2974 = vld [vmem:[%s2933 + $0xa0] sm:$0xf]
        %v2975 = vld [vmem:[%s2933 + $0xa4] sm:$0xf]
        %v2976 = vld [vmem:[%s2933 + $0xa8] sm:$0xf]
        %v2977 = vld [vmem:[%s2933 + $0xac] sm:$0xf]
        %v2978 = vld [vmem:[%s2933 + $0xb0] sm:$0xf]
        %v2979 = vld [vmem:[%s2933 + $0xb4] sm:$0xf]
        %v2980 = vld [vmem:[%s2933 + $0xb8] sm:$0xf]
        %v2981 = vld [vmem:[%s2933 + $0xbc] sm:$0xf]
        %v2982 = vld [vmem:[%s2933 + $0xc0] sm:$0xf]
        %v2983 = vld [vmem:[%s2933 + $0xc4] sm:$0xf]
        %v2984 = vld [vmem:[%s2933 + $0xc8] sm:$0xf]
        %v2985 = vld [vmem:[%s2933 + $0xcc] sm:$0xf]
        %v2986 = vld [vmem:[%s2933 + $0xd0] sm:$0xf]
        %v2987 = vld [vmem:[%s2933 + $0xd4] sm:$0xf]
        %v2988 = vld [vmem:[%s2933 + $0xd8] sm:$0xf]
        %v2989 = vld [vmem:[%s2933 + $0xdc] sm:$0xf]
        %v2990 = vld [vmem:[%s2933 + $0xe0] sm:$0xf]
        %v2991 = vld [vmem:[%s2933 + $0xe4] sm:$0xf]
        %v2992 = vld [vmem:[%s2933 + $0xe8] sm:$0xf]
        %v2993 = vld [vmem:[%s2933 + $0xec] sm:$0xf]
        %v2994 = vld [vmem:[%s2933 + $0xf0] sm:$0xf]
        %v2995 = vld [vmem:[%s2933 + $0xf4] sm:$0xf]
        %v2996 = vld [vmem:[%s2933 + $0xf8] sm:$0xf]
        %v2997 = vld [vmem:[%s2933 + $0xfc] sm:$0xf]
        %v2998 = vld [vmem:[%s2933 + $0x100] sm:$0xf]
        %v2999 = vld [vmem:[%s2933 + $0x104] sm:$0xf]
        %v3000 = vld [vmem:[%s2933 + $0x108] sm:$0xf]
        %v3001 = vld [vmem:[%s2933 + $0x10c] sm:$0xf]
        %v3002 = vld [vmem:[%s2933 + $0x110] sm:$0xf]
        %v3003 = vld [vmem:[%s2933 + $0x114] sm:$0xf]
        %v3004 = vld [vmem:[%s2933 + $0x118] sm:$0xf]
        %v3005 = vld [vmem:[%s2933 + $0x11c] sm:$0xf]
        %v3006 = vld [vmem:[%s2933 + $0x120] sm:$0xf]
        %v3007 = vld [vmem:[%s2933 + $0x124] sm:$0xf]
        %v3008 = vld [vmem:[%s2933 + $0x128] sm:$0xf]
        %v3009 = vld [vmem:[%s2933 + $0x12c] sm:$0xf]
        %v3010 = vld [vmem:[%s2933 + $0x130] sm:$0xf]
        %v3011 = vld [vmem:[%s2933 + $0x134] sm:$0xf]
        %v3012 = vld [vmem:[%s2933 + $0x138] sm:$0xf]
        %v3013 = vld [vmem:[%s2933 + $0x13c] sm:$0xf]
        %v3014 = vld [vmem:[%s4 + $0x2] sm:$0x1]
        %v3015 = vld [vmem:[#allocation3 + $0x30] sm:$0xff]
        %v3016 = vld [vmem:[#allocation3 + $0x30] sm:$0xf0]
        %v3017 = vld [vmem:[#allocation3 + $0x38] sm:$0xf]
        %v3018 = vld [vmem:[#allocation3 + $0x38] sm:$0xff]
        %v3019 = vld [vmem:[#allocation3 + $0x38] sm:$0xf0]
        %v3020 = vld [vmem:[#allocation3 + $0x40] sm:$0xf]
        %v3021 = vld [vmem:[#allocation3 + $0x40] sm:$0xff]
        %v3024 = vrot.slane %v3016, 4
        %v3025 = vrot.slane %v3017, 4
        %v3026 = vsel %vm2067, %v3024, %v3025
        %v3030 = vrot.slane %v3019, 4
        %v3031 = vrot.slane %v3020, 4
        %v3032 = vsel %vm2067, %v3030, %v3031
        %v3034 = vlaneseq
        %v3035 = vshrl.u32 %v3034, 7
        %v3036 = vsub.s32 0, %v3035
        %v3037 = vrot.slane %v3014, %v3036
        %v3118 = vunpack.c.l.b16 %v2934
        %v3119 = vunpack.c.l.b16 %v2935
        %v3120 = vunpack.c.l.b16 %v2936
        %v3121 = vunpack.c.l.b16 %v2937
        %v3122 = vunpack.c.l.b16 %v2938
        %v3123 = vunpack.c.l.b16 %v2939
        %v3124 = vunpack.c.l.b16 %v2940
        %v3125 = vunpack.c.l.b16 %v2941
        %v3126 = vunpack.c.l.b16 %v2942
        %v3127 = vunpack.c.l.b16 %v2943
        %v3128 = vunpack.c.l.b16 %v2944
        %v3129 = vunpack.c.l.b16 %v2945
        %v3130 = vunpack.c.l.b16 %v2946
        %v3131 = vunpack.c.l.b16 %v2947
        %v3132 = vunpack.c.l.b16 %v2948
        %v3133 = vunpack.c.l.b16 %v2949
        %v3134 = vunpack.c.l.b16 %v2950
        %v3135 = vunpack.c.l.b16 %v2951
        %v3136 = vunpack.c.l.b16 %v2952
        %v3137 = vunpack.c.l.b16 %v2953
        %v3138 = vunpack.c.l.b16 %v2954
        %v3139 = vunpack.c.l.b16 %v2955
        %v3140 = vunpack.c.l.b16 %v2956
        %v3141 = vunpack.c.l.b16 %v2957
        %v3142 = vunpack.c.l.b16 %v2958
        %v3143 = vunpack.c.l.b16 %v2959
        %v3144 = vunpack.c.l.b16 %v2960
        %v3145 = vunpack.c.l.b16 %v2961
        %v3146 = vunpack.c.l.b16 %v2962
        %v3147 = vunpack.c.l.b16 %v2963
        %v3148 = vunpack.c.l.b16 %v2964
        %v3149 = vunpack.c.l.b16 %v2965
        %v3150 = vunpack.c.l.b16 %v2966
        %v3151 = vunpack.c.l.b16 %v2967
        %v3152 = vunpack.c.l.b16 %v2968
        %v3153 = vunpack.c.l.b16 %v2969
        %v3154 = vunpack.c.l.b16 %v2970
        %v3155 = vunpack.c.l.b16 %v2971
        %v3156 = vunpack.c.l.b16 %v2972
        %v3157 = vunpack.c.l.b16 %v2973
        %v3158 = vunpack.c.l.b16 %v2974
        %v3159 = vunpack.c.l.b16 %v2975
        %v3160 = vunpack.c.l.b16 %v2976
        %v3161 = vunpack.c.l.b16 %v2977
        %v3162 = vunpack.c.l.b16 %v2978
        %v3163 = vunpack.c.l.b16 %v2979
        %v3164 = vunpack.c.l.b16 %v2980
        %v3165 = vunpack.c.l.b16 %v2981
        %v3166 = vunpack.c.l.b16 %v2982
        %v3167 = vunpack.c.l.b16 %v2983
        %v3168 = vunpack.c.l.b16 %v2984
        %v3169 = vunpack.c.l.b16 %v2985
        %v3170 = vunpack.c.l.b16 %v2986
        %v3171 = vunpack.c.l.b16 %v2987
        %v3172 = vunpack.c.l.b16 %v2988
        %v3173 = vunpack.c.l.b16 %v2989
        %v3174 = vunpack.c.l.b16 %v2990
        %v3175 = vunpack.c.l.b16 %v2991
        %v3176 = vunpack.c.l.b16 %v2992
        %v3177 = vunpack.c.l.b16 %v2993
        %v3178 = vunpack.c.l.b16 %v2994
        %v3179 = vunpack.c.l.b16 %v2995
        %v3180 = vunpack.c.l.b16 %v2996
        %v3181 = vunpack.c.l.b16 %v2997
        %v3182 = vunpack.c.l.b16 %v2998
        %v3183 = vunpack.c.l.b16 %v2999
        %v3184 = vunpack.c.l.b16 %v3000
        %v3185 = vunpack.c.l.b16 %v3001
        %v3186 = vunpack.c.l.b16 %v3002
        %v3187 = vunpack.c.l.b16 %v3003
        %v3188 = vunpack.c.l.b16 %v3004
        %v3189 = vunpack.c.l.b16 %v3005
        %v3190 = vunpack.c.l.b16 %v3006
        %v3191 = vunpack.c.l.b16 %v3007
        %v3192 = vunpack.c.l.b16 %v3008
        %v3193 = vunpack.c.l.b16 %v3009
        %v3194 = vunpack.c.l.b16 %v3010
        %v3195 = vunpack.c.l.b16 %v3011
        %v3196 = vunpack.c.l.b16 %v3012
        %v3197 = vunpack.c.l.b16 %v3013
        %v3198 = vpack.c.b16 %v3119, %v3118
        %v3199 = vpack.c.b16 %v3121, %v3120
        %v3200 = vpack.c.b16 %v3123, %v3122
        %v3201 = vpack.c.b16 %v3125, %v3124
        %v3202 = vpack.c.b16 %v3127, %v3126
        %v3203 = vpack.c.b16 %v3129, %v3128
        %v3204 = vpack.c.b16 %v3131, %v3130
        %v3205 = vpack.c.b16 %v3133, %v3132
        %v3206 = vpack.c.b16 %v3135, %v3134
        %v3207 = vpack.c.b16 %v3137, %v3136
        %v3208 = vpack.c.b16 %v3139, %v3138
        %v3209 = vpack.c.b16 %v3141, %v3140
        %v3210 = vpack.c.b16 %v3143, %v3142
        %v3211 = vpack.c.b16 %v3145, %v3144
        %v3212 = vpack.c.b16 %v3147, %v3146
        %v3213 = vpack.c.b16 %v3149, %v3148
        %v3214 = vpack.c.b16 %v3151, %v3150
        %v3215 = vpack.c.b16 %v3153, %v3152
        %v3216 = vpack.c.b16 %v3155, %v3154
        %v3217 = vpack.c.b16 %v3157, %v3156
        %v3218 = vpack.c.b16 %v3159, %v3158
        %v3219 = vpack.c.b16 %v3161, %v3160
        %v3220 = vpack.c.b16 %v3163, %v3162
        %v3221 = vpack.c.b16 %v3165, %v3164
        %v3222 = vpack.c.b16 %v3167, %v3166
        %v3223 = vpack.c.b16 %v3169, %v3168
        %v3224 = vpack.c.b16 %v3171, %v3170
        %v3225 = vpack.c.b16 %v3173, %v3172
        %v3226 = vpack.c.b16 %v3175, %v3174
        %v3227 = vpack.c.b16 %v3177, %v3176
        %v3228 = vpack.c.b16 %v3179, %v3178
        %v3229 = vpack.c.b16 %v3181, %v3180
        %v3230 = vpack.c.b16 %v3183, %v3182
        %v3231 = vpack.c.b16 %v3185, %v3184
        %v3232 = vpack.c.b16 %v3187, %v3186
        %v3233 = vpack.c.b16 %v3189, %v3188
        %v3234 = vpack.c.b16 %v3191, %v3190
        %v3235 = vpack.c.b16 %v3193, %v3192
        %v3236 = vpack.c.b16 %v3195, %v3194
        %v3237 = vpack.c.b16 %v3197, %v3196
        %3278 = vmatprep.subr.bf16.mxu0 0
        %3279 = vmatpush1.bf16.msra.mxu0 %v3198
        %3280 = vmatprep.subr.bf16.mxu0 0
        %3281 = vmatpush1.bf16.msra.mxu0 %v3199
        %3282 = vmatprep.subr.bf16.mxu0 0
        %3283 = vmatpush1.bf16.msra.mxu0 %v3200
        %3284 = vmatprep.subr.bf16.mxu0 0
        %3285 = vmatpush1.bf16.msra.mxu0 %v3201
        %3286 = vmatprep.subr.bf16.mxu0 0
        %3287 = vmatpush1.bf16.msra.mxu0 %v3202
        %3288 = vmatprep.subr.bf16.mxu0 0
        %3289 = vmatpush1.bf16.msra.mxu0 %v3203
        %3290 = vmatprep.subr.bf16.mxu0 0
        %3291 = vmatpush1.bf16.msra.mxu0 %v3204
        %3292 = vmatprep.subr.bf16.mxu0 0
        %3293 = vmatpush1.bf16.msra.mxu0 %v3205
        %3294 = vmatprep.subr.bf16.mxu0 0
        %3295 = vmatpush1.bf16.msra.mxu0 %v3206
        %3296 = vmatprep.subr.bf16.mxu0 0
        %3297 = vmatpush1.bf16.msra.mxu0 %v3207
        %3298 = vmatprep.subr.bf16.mxu0 0
        %3299 = vmatpush1.bf16.msra.mxu0 %v3208
        %3300 = vmatprep.subr.bf16.mxu0 0
        %3301 = vmatpush1.bf16.msra.mxu0 %v3209
        %3302 = vmatprep.subr.bf16.mxu0 0
        %3303 = vmatpush1.bf16.msra.mxu0 %v3210
        %3304 = vmatprep.subr.bf16.mxu0 0
        %3305 = vmatpush1.bf16.msra.mxu0 %v3211
        %3306 = vmatprep.subr.bf16.mxu0 0
        %3307 = vmatpush1.bf16.msra.mxu0 %v3212
        %3308 = vmatprep.subr.bf16.mxu0 0
        %3309 = vmatpush1.bf16.msra.mxu0 %v3213
        %3310 = vmatprep.mubr.bf16.mxu0 %v3026
        %3311 = vmatmul.mubr.bf16.gmra.mrb[0].mxu0 %v3015
        %v3312 = vpop.f32.mrb[0].mxu0
        %v3313 = vadd.f32 %v3037, %v3312
        %v3314 = vpop.f32.mrb[0].mxu0
        %v3315 = vpop.f32.mrb[0].mxu0
        %v3316 = vadd.f32 %v3037, %v3315
        %v3317 = vpop.f32.mrb[0].mxu0
        %3318 = vdwg.mxu0
        %3319 = vmatprep.subr.bf16.mxu0 0
        %3320 = vmatpush1.bf16.msra.mxu0 %v3214
        %3321 = vmatprep.subr.bf16.mxu0 0
        %3322 = vmatpush1.bf16.msra.mxu0 %v3215
        %3323 = vmatprep.subr.bf16.mxu0 0
        %3324 = vmatpush1.bf16.msra.mxu0 %v3216
        %3325 = vmatprep.subr.bf16.mxu0 0
        %3326 = vmatpush1.bf16.msra.mxu0 %v3217
        %3327 = vmatprep.subr.bf16.mxu0 0
        %3328 = vmatpush1.bf16.msra.mxu0 %v3218
        %3329 = vmatprep.subr.bf16.mxu0 0
        %3330 = vmatpush1.bf16.msra.mxu0 %v3219
        %3331 = vmatprep.subr.bf16.mxu0 0
        %3332 = vmatpush1.bf16.msra.mxu0 %v3220
        %3333 = vmatprep.subr.bf16.mxu0 0
        %3334 = vmatpush1.bf16.msra.mxu0 %v3221
        %3335 = vmatprep.subr.bf16.mxu0 0
        %3336 = vmatpush1.bf16.msra.mxu0 %v3222
        %3337 = vmatprep.subr.bf16.mxu0 0
        %3338 = vmatpush1.bf16.msra.mxu0 %v3223
        %3339 = vmatprep.subr.bf16.mxu0 0
        %3340 = vmatpush1.bf16.msra.mxu0 %v3224
        %3341 = vmatprep.subr.bf16.mxu0 0
        %3342 = vmatpush1.bf16.msra.mxu0 %v3225
        %3343 = vmatprep.subr.bf16.mxu0 0
        %3344 = vmatpush1.bf16.msra.mxu0 %v3226
        %3345 = vmatprep.subr.bf16.mxu0 0
        %3346 = vmatpush1.bf16.msra.mxu0 %v3227
        %3347 = vmatprep.subr.bf16.mxu0 0
        %3348 = vmatpush1.bf16.msra.mxu0 %v3228
        %3349 = vmatprep.subr.bf16.mxu0 0
        %3350 = vmatpush1.bf16.msra.mxu0 %v3229
        %3351 = vmatprep.mubr.bf16.mxu0 %v3032
        %3352 = vmatmul.mubr.bf16.gmra.mrb[0].mxu0 %v3018
        %v3353 = vpop.f32.mrb[0].mxu0
        %v3354 = vadd.f32 %v3313, %v3353
        %v3355 = vpop.f32.mrb[0].mxu0
        %v3356 = vpop.f32.mrb[0].mxu0
        %v3357 = vadd.f32 %v3316, %v3356
        %v3358 = vpop.f32.mrb[0].mxu0
        %3359 = vdwg.mxu0
        %3360 = vmatprep.subr.bf16.mxu0 0
        %3361 = vmatpush1.bf16.msra.mxu0 %v3230
        %3362 = vmatprep.subr.bf16.mxu0 0
        %3363 = vmatpush1.bf16.msra.mxu0 %v3231
        %3364 = vmatprep.subr.bf16.mxu0 0
        %3365 = vmatpush1.bf16.msra.mxu0 %v3232
        %3366 = vmatprep.subr.bf16.mxu0 0
        %3367 = vmatpush1.bf16.msra.mxu0 %v3233
        %3368 = vmatprep.subr.bf16.mxu0 0
        %3369 = vmatpush1.bf16.msra.mxu0 %v3234
        %3370 = vmatprep.subr.bf16.mxu0 0
        %3371 = vmatpush1.bf16.msra.mxu0 %v3235
        %3372 = vmatprep.subr.bf16.mxu0 0
        %3373 = vmatpush1.bf16.msra.mxu0 %v3236
        %3374 = vmatprep.subr.bf16.mxu0 0
        %3375 = vmatpush1.bf16.msra.mxu0 %v3237
        %3376 = vmatprep.subr.bf16.mxu0 0
        %3377 = vmatpush1.bf16.msra.mxu0 0
        %3378 = vmatprep.subr.bf16.mxu0 0
        %3379 = vmatpush1.bf16.msra.mxu0 0
        %3380 = vmatprep.subr.bf16.mxu0 0
        %3381 = vmatpush1.bf16.msra.mxu0 0
        %3382 = vmatprep.subr.bf16.mxu0 0
        %3383 = vmatpush1.bf16.msra.mxu0 0
        %3384 = vmatprep.subr.bf16.mxu0 0
        %3385 = vmatpush1.bf16.msra.mxu0 0
        %3386 = vmatprep.subr.bf16.mxu0 0
        %3387 = vmatpush1.bf16.msra.mxu0 0
        %3388 = vmatprep.subr.bf16.mxu0 0
        %3389 = vmatpush1.bf16.msra.mxu0 0
        %3390 = vmatprep.subr.bf16.mxu0 0
        %3391 = vmatpush1.bf16.msra.mxu0 0
        %3392 = vmatprep.mubr.bf16.mxu0 0
        %3393 = vmatmul.mubr.bf16.gmra.mrb[0].mxu0 %v3021
        %v3394 = vpop.f32.mrb[0].mxu0
        %v3395 = vadd.f32 %v3354, %v3394
        %v3396 = vpop.f32.mrb[0].mxu0
        %v3397 = vpop.f32.mrb[0].mxu0
        %v3398 = vadd.f32 %v3357, %v3397
        %v3399 = vpop.f32.mrb[0].mxu0
        %3400 = vdwg.mxu0
        %v3401 = vmax.f32 %v3395, 0.0
        %v3402 = vmax.f32 %v3398, 0.0
        %v3403 = vpack.c.bf16 %v3402, %v3401
        %3404 = vst [vmem:[#allocation4 + $0x80] sm:$0xff] %v3403
        %s3405 = scalar_lea.vmem [#allocation8], 960
        %v3406 = vld [vmem:[%s3405] sm:$0xf]
        %v3407 = vld [vmem:[%s3405 + $0x4] sm:$0xf]
        %v3408 = vld [vmem:[%s3405 + $0x8] sm:$0xf]
        %v3409 = vld [vmem:[%s3405 + $0xc] sm:$0xf]
        %v3410 = vld [vmem:[%s3405 + $0x10] sm:$0xf]
        %v3411 = vld [vmem:[%s3405 + $0x14] sm:$0xf]
        %v3412 = vld [vmem:[%s3405 + $0x18] sm:$0xf]
        %v3413 = vld [vmem:[%s3405 + $0x1c] sm:$0xf]
        %v3414 = vld [vmem:[%s3405 + $0x20] sm:$0xf]
        %v3415 = vld [vmem:[%s3405 + $0x24] sm:$0xf]
        %v3416 = vld [vmem:[%s3405 + $0x28] sm:$0xf]
        %v3417 = vld [vmem:[%s3405 + $0x2c] sm:$0xf]
        %v3418 = vld [vmem:[%s3405 + $0x30] sm:$0xf]
        %v3419 = vld [vmem:[%s3405 + $0x34] sm:$0xf]
        %v3420 = vld [vmem:[%s3405 + $0x38] sm:$0xf]
        %v3421 = vld [vmem:[%s3405 + $0x3c] sm:$0xf]
        %v3422 = vld [vmem:[%s3405 + $0x40] sm:$0xf]
        %v3423 = vld [vmem:[%s3405 + $0x44] sm:$0xf]
        %v3424 = vld [vmem:[%s3405 + $0x48] sm:$0xf]
        %v3425 = vld [vmem:[%s3405 + $0x4c] sm:$0xf]
        %v3426 = vld [vmem:[%s3405 + $0x50] sm:$0xf]
        %v3427 = vld [vmem:[%s3405 + $0x54] sm:$0xf]
        %v3428 = vld [vmem:[%s3405 + $0x58] sm:$0xf]
        %v3429 = vld [vmem:[%s3405 + $0x5c] sm:$0xf]
        %v3430 = vld [vmem:[%s3405 + $0x60] sm:$0xf]
        %v3431 = vld [vmem:[%s3405 + $0x64] sm:$0xf]
        %v3432 = vld [vmem:[%s3405 + $0x68] sm:$0xf]
        %v3433 = vld [vmem:[%s3405 + $0x6c] sm:$0xf]
        %v3434 = vld [vmem:[%s3405 + $0x70] sm:$0xf]
        %v3435 = vld [vmem:[%s3405 + $0x74] sm:$0xf]
        %v3436 = vld [vmem:[%s3405 + $0x78] sm:$0xf]
        %v3437 = vld [vmem:[%s3405 + $0x7c] sm:$0xf]
        %v3438 = vld [vmem:[%s3405 + $0x80] sm:$0xf]
        %v3439 = vld [vmem:[%s3405 + $0x84] sm:$0xf]
        %v3440 = vld [vmem:[%s3405 + $0x88] sm:$0xf]
        %v3441 = vld [vmem:[%s3405 + $0x8c] sm:$0xf]
        %v3442 = vld [vmem:[%s3405 + $0x90] sm:$0xf]
        %v3443 = vld [vmem:[%s3405 + $0x94] sm:$0xf]
        %v3444 = vld [vmem:[%s3405 + $0x98] sm:$0xf]
        %v3445 = vld [vmem:[%s3405 + $0x9c] sm:$0xf]
        %v3446 = vld [vmem:[%s3405 + $0xa0] sm:$0xf]
        %v3447 = vld [vmem:[%s3405 + $0xa4] sm:$0xf]
        %v3448 = vld [vmem:[%s3405 + $0xa8] sm:$0xf]
        %v3449 = vld [vmem:[%s3405 + $0xac] sm:$0xf]
        %v3450 = vld [vmem:[%s3405 + $0xb0] sm:$0xf]
        %v3451 = vld [vmem:[%s3405 + $0xb4] sm:$0xf]
        %v3452 = vld [vmem:[%s3405 + $0xb8] sm:$0xf]
        %v3453 = vld [vmem:[%s3405 + $0xbc] sm:$0xf]
        %v3454 = vld [vmem:[%s3405 + $0xc0] sm:$0xf]
        %v3455 = vld [vmem:[%s3405 + $0xc4] sm:$0xf]
        %v3456 = vld [vmem:[%s3405 + $0xc8] sm:$0xf]
        %v3457 = vld [vmem:[%s3405 + $0xcc] sm:$0xf]
        %v3458 = vld [vmem:[%s3405 + $0xd0] sm:$0xf]
        %v3459 = vld [vmem:[%s3405 + $0xd4] sm:$0xf]
        %v3460 = vld [vmem:[%s3405 + $0xd8] sm:$0xf]
        %v3461 = vld [vmem:[%s3405 + $0xdc] sm:$0xf]
        %v3462 = vld [vmem:[%s3405 + $0xe0] sm:$0xf]
        %v3463 = vld [vmem:[%s3405 + $0xe4] sm:$0xf]
        %v3464 = vld [vmem:[%s3405 + $0xe8] sm:$0xf]
        %v3465 = vld [vmem:[%s3405 + $0xec] sm:$0xf]
        %v3466 = vld [vmem:[%s3405 + $0xf0] sm:$0xf]
        %v3467 = vld [vmem:[%s3405 + $0xf4] sm:$0xf]
        %v3468 = vld [vmem:[%s3405 + $0xf8] sm:$0xf]
        %v3469 = vld [vmem:[%s3405 + $0xfc] sm:$0xf]
        %v3470 = vld [vmem:[%s3405 + $0x100] sm:$0xf]
        %v3471 = vld [vmem:[%s3405 + $0x104] sm:$0xf]
        %v3472 = vld [vmem:[%s3405 + $0x108] sm:$0xf]
        %v3473 = vld [vmem:[%s3405 + $0x10c] sm:$0xf]
        %v3474 = vld [vmem:[%s3405 + $0x110] sm:$0xf]
        %v3475 = vld [vmem:[%s3405 + $0x114] sm:$0xf]
        %v3476 = vld [vmem:[%s3405 + $0x118] sm:$0xf]
        %v3477 = vld [vmem:[%s3405 + $0x11c] sm:$0xf]
        %v3478 = vld [vmem:[%s3405 + $0x120] sm:$0xf]
        %v3479 = vld [vmem:[%s3405 + $0x124] sm:$0xf]
        %v3480 = vld [vmem:[%s3405 + $0x128] sm:$0xf]
        %v3481 = vld [vmem:[%s3405 + $0x12c] sm:$0xf]
        %v3482 = vld [vmem:[%s3405 + $0x130] sm:$0xf]
        %v3483 = vld [vmem:[%s3405 + $0x134] sm:$0xf]
        %v3484 = vld [vmem:[%s3405 + $0x138] sm:$0xf]
        %v3485 = vld [vmem:[%s3405 + $0x13c] sm:$0xf]
        %v3486 = vld [vmem:[%s4 + $0x3] sm:$0x1]
        %v3487 = vld [vmem:[#allocation4 + $0x60] sm:$0xff]
        %v3488 = vld [vmem:[#allocation4 + $0x68] sm:$0xff]
        %v3489 = vld [vmem:[#allocation4 + $0x70] sm:$0xff]
        %v3490 = vld [vmem:[#allocation4 + $0x78] sm:$0xff]
        %v3491 = vld [vmem:[#allocation4 + $0x80] sm:$0xff]
        %v3492 = vlaneseq
        %v3493 = vshrl.u32 %v3492, 7
        %v3494 = vsub.s32 0, %v3493
        %v3495 = vrot.slane %v3486, %v3494
        %v3576 = vunpack.c.l.b16 %v3406
        %v3577 = vunpack.c.l.b16 %v3407
        %v3578 = vunpack.c.l.b16 %v3408
        %v3579 = vunpack.c.l.b16 %v3409
        %v3580 = vunpack.c.l.b16 %v3410
        %v3581 = vunpack.c.l.b16 %v3411
        %v3582 = vunpack.c.l.b16 %v3412
        %v3583 = vunpack.c.l.b16 %v3413
        %v3584 = vunpack.c.l.b16 %v3414
        %v3585 = vunpack.c.l.b16 %v3415
        %v3586 = vunpack.c.l.b16 %v3416
        %v3587 = vunpack.c.l.b16 %v3417
        %v3588 = vunpack.c.l.b16 %v3418
        %v3589 = vunpack.c.l.b16 %v3419
        %v3590 = vunpack.c.l.b16 %v3420
        %v3591 = vunpack.c.l.b16 %v3421
        %v3592 = vunpack.c.l.b16 %v3422
        %v3593 = vunpack.c.l.b16 %v3423
        %v3594 = vunpack.c.l.b16 %v3424
        %v3595 = vunpack.c.l.b16 %v3425
        %v3596 = vunpack.c.l.b16 %v3426
        %v3597 = vunpack.c.l.b16 %v3427
        %v3598 = vunpack.c.l.b16 %v3428
        %v3599 = vunpack.c.l.b16 %v3429
        %v3600 = vunpack.c.l.b16 %v3430
        %v3601 = vunpack.c.l.b16 %v3431
        %v3602 = vunpack.c.l.b16 %v3432
        %v3603 = vunpack.c.l.b16 %v3433
        %v3604 = vunpack.c.l.b16 %v3434
        %v3605 = vunpack.c.l.b16 %v3435
        %v3606 = vunpack.c.l.b16 %v3436
        %v3607 = vunpack.c.l.b16 %v3437
        %v3608 = vunpack.c.l.b16 %v3438
        %v3609 = vunpack.c.l.b16 %v3439
        %v3610 = vunpack.c.l.b16 %v3440
        %v3611 = vunpack.c.l.b16 %v3441
        %v3612 = vunpack.c.l.b16 %v3442
        %v3613 = vunpack.c.l.b16 %v3443
        %v3614 = vunpack.c.l.b16 %v3444
        %v3615 = vunpack.c.l.b16 %v3445
        %v3616 = vunpack.c.l.b16 %v3446
        %v3617 = vunpack.c.l.b16 %v3447
        %v3618 = vunpack.c.l.b16 %v3448
        %v3619 = vunpack.c.l.b16 %v3449
        %v3620 = vunpack.c.l.b16 %v3450
        %v3621 = vunpack.c.l.b16 %v3451
        %v3622 = vunpack.c.l.b16 %v3452
        %v3623 = vunpack.c.l.b16 %v3453
        %v3624 = vunpack.c.l.b16 %v3454
        %v3625 = vunpack.c.l.b16 %v3455
        %v3626 = vunpack.c.l.b16 %v3456
        %v3627 = vunpack.c.l.b16 %v3457
        %v3628 = vunpack.c.l.b16 %v3458
        %v3629 = vunpack.c.l.b16 %v3459
        %v3630 = vunpack.c.l.b16 %v3460
        %v3631 = vunpack.c.l.b16 %v3461
        %v3632 = vunpack.c.l.b16 %v3462
        %v3633 = vunpack.c.l.b16 %v3463
        %v3634 = vunpack.c.l.b16 %v3464
        %v3635 = vunpack.c.l.b16 %v3465
        %v3636 = vunpack.c.l.b16 %v3466
        %v3637 = vunpack.c.l.b16 %v3467
        %v3638 = vunpack.c.l.b16 %v3468
        %v3639 = vunpack.c.l.b16 %v3469
        %v3640 = vunpack.c.l.b16 %v3470
        %v3641 = vunpack.c.l.b16 %v3471
        %v3642 = vunpack.c.l.b16 %v3472
        %v3643 = vunpack.c.l.b16 %v3473
        %v3644 = vunpack.c.l.b16 %v3474
        %v3645 = vunpack.c.l.b16 %v3475
        %v3646 = vunpack.c.l.b16 %v3476
        %v3647 = vunpack.c.l.b16 %v3477
        %v3648 = vunpack.c.l.b16 %v3478
        %v3649 = vunpack.c.l.b16 %v3479
        %v3650 = vunpack.c.l.b16 %v3480
        %v3651 = vunpack.c.l.b16 %v3481
        %v3652 = vunpack.c.l.b16 %v3482
        %v3653 = vunpack.c.l.b16 %v3483
        %v3654 = vunpack.c.l.b16 %v3484
        %v3655 = vunpack.c.l.b16 %v3485
        %v3656 = vpack.c.b16 %v3577, %v3576
        %v3657 = vpack.c.b16 %v3579, %v3578
        %v3658 = vpack.c.b16 %v3581, %v3580
        %v3659 = vpack.c.b16 %v3583, %v3582
        %v3660 = vpack.c.b16 %v3585, %v3584
        %v3661 = vpack.c.b16 %v3587, %v3586
        %v3662 = vpack.c.b16 %v3589, %v3588
        %v3663 = vpack.c.b16 %v3591, %v3590
        %v3664 = vpack.c.b16 %v3593, %v3592
        %v3665 = vpack.c.b16 %v3595, %v3594
        %v3666 = vpack.c.b16 %v3597, %v3596
        %v3667 = vpack.c.b16 %v3599, %v3598
        %v3668 = vpack.c.b16 %v3601, %v3600
        %v3669 = vpack.c.b16 %v3603, %v3602
        %v3670 = vpack.c.b16 %v3605, %v3604
        %v3671 = vpack.c.b16 %v3607, %v3606
        %v3672 = vpack.c.b16 %v3609, %v3608
        %v3673 = vpack.c.b16 %v3611, %v3610
        %v3674 = vpack.c.b16 %v3613, %v3612
        %v3675 = vpack.c.b16 %v3615, %v3614
        %v3676 = vpack.c.b16 %v3617, %v3616
        %v3677 = vpack.c.b16 %v3619, %v3618
        %v3678 = vpack.c.b16 %v3621, %v3620
        %v3679 = vpack.c.b16 %v3623, %v3622
        %v3680 = vpack.c.b16 %v3625, %v3624
        %v3681 = vpack.c.b16 %v3627, %v3626
        %v3682 = vpack.c.b16 %v3629, %v3628
        %v3683 = vpack.c.b16 %v3631, %v3630
        %v3684 = vpack.c.b16 %v3633, %v3632
        %v3685 = vpack.c.b16 %v3635, %v3634
        %v3686 = vpack.c.b16 %v3637, %v3636
        %v3687 = vpack.c.b16 %v3639, %v3638
        %v3688 = vpack.c.b16 %v3641, %v3640
        %v3689 = vpack.c.b16 %v3643, %v3642
        %v3690 = vpack.c.b16 %v3645, %v3644
        %v3691 = vpack.c.b16 %v3647, %v3646
        %v3692 = vpack.c.b16 %v3649, %v3648
        %v3693 = vpack.c.b16 %v3651, %v3650
        %v3694 = vpack.c.b16 %v3653, %v3652
        %v3695 = vpack.c.b16 %v3655, %v3654
        %3736 = vmatprep.subr.bf16.mxu0 0
        %3737 = vmatpush1.bf16.msra.mxu0 %v3656
        %3738 = vmatprep.subr.bf16.mxu0 0
        %3739 = vmatpush1.bf16.msra.mxu0 %v3657
        %3740 = vmatprep.subr.bf16.mxu0 0
        %3741 = vmatpush1.bf16.msra.mxu0 %v3658
        %3742 = vmatprep.subr.bf16.mxu0 0
        %3743 = vmatpush1.bf16.msra.mxu0 %v3659
        %3744 = vmatprep.subr.bf16.mxu0 0
        %3745 = vmatpush1.bf16.msra.mxu0 %v3660
        %3746 = vmatprep.subr.bf16.mxu0 0
        %3747 = vmatpush1.bf16.msra.mxu0 %v3661
        %3748 = vmatprep.subr.bf16.mxu0 0
        %3749 = vmatpush1.bf16.msra.mxu0 %v3662
        %3750 = vmatprep.subr.bf16.mxu0 0
        %3751 = vmatpush1.bf16.msra.mxu0 %v3663
        %3752 = vmatprep.subr.bf16.mxu0 0
        %3753 = vmatpush1.bf16.msra.mxu0 %v3664
        %3754 = vmatprep.subr.bf16.mxu0 0
        %3755 = vmatpush1.bf16.msra.mxu0 %v3665
        %3756 = vmatprep.subr.bf16.mxu0 0
        %3757 = vmatpush1.bf16.msra.mxu0 %v3666
        %3758 = vmatprep.subr.bf16.mxu0 0
        %3759 = vmatpush1.bf16.msra.mxu0 %v3667
        %3760 = vmatprep.subr.bf16.mxu0 0
        %3761 = vmatpush1.bf16.msra.mxu0 %v3668
        %3762 = vmatprep.subr.bf16.mxu0 0
        %3763 = vmatpush1.bf16.msra.mxu0 %v3669
        %3764 = vmatprep.subr.bf16.mxu0 0
        %3765 = vmatpush1.bf16.msra.mxu0 %v3670
        %3766 = vmatprep.subr.bf16.mxu0 0
        %3767 = vmatpush1.bf16.msra.mxu0 %v3671
        %3768 = vmatprep.mubr.bf16.mxu0 %v3488
        %3769 = vmatmul.mubr.bf16.gmra.mrb[0].mxu0 %v3487
        %v3770 = vpop.f32.mrb[0].mxu0
        %v3771 = vadd.f32 %v3495, %v3770
        %v3772 = vpop.f32.mrb[0].mxu0
        %v3773 = vpop.f32.mrb[0].mxu0
        %v3774 = vadd.f32 %v3495, %v3773
        %v3775 = vpop.f32.mrb[0].mxu0
        %3776 = vdwg.mxu0
        %3777 = vmatprep.subr.bf16.mxu0 0
        %3778 = vmatpush1.bf16.msra.mxu0 %v3672
        %3779 = vmatprep.subr.bf16.mxu0 0
        %3780 = vmatpush1.bf16.msra.mxu0 %v3673
        %3781 = vmatprep.subr.bf16.mxu0 0
        %3782 = vmatpush1.bf16.msra.mxu0 %v3674
        %3783 = vmatprep.subr.bf16.mxu0 0
        %3784 = vmatpush1.bf16.msra.mxu0 %v3675
        %3785 = vmatprep.subr.bf16.mxu0 0
        %3786 = vmatpush1.bf16.msra.mxu0 %v3676
        %3787 = vmatprep.subr.bf16.mxu0 0
        %3788 = vmatpush1.bf16.msra.mxu0 %v3677
        %3789 = vmatprep.subr.bf16.mxu0 0
        %3790 = vmatpush1.bf16.msra.mxu0 %v3678
        %3791 = vmatprep.subr.bf16.mxu0 0
        %3792 = vmatpush1.bf16.msra.mxu0 %v3679
        %3793 = vmatprep.subr.bf16.mxu0 0
        %3794 = vmatpush1.bf16.msra.mxu0 %v3680
        %3795 = vmatprep.subr.bf16.mxu0 0
        %3796 = vmatpush1.bf16.msra.mxu0 %v3681
        %3797 = vmatprep.subr.bf16.mxu0 0
        %3798 = vmatpush1.bf16.msra.mxu0 %v3682
        %3799 = vmatprep.subr.bf16.mxu0 0
        %3800 = vmatpush1.bf16.msra.mxu0 %v3683
        %3801 = vmatprep.subr.bf16.mxu0 0
        %3802 = vmatpush1.bf16.msra.mxu0 %v3684
        %3803 = vmatprep.subr.bf16.mxu0 0
        %3804 = vmatpush1.bf16.msra.mxu0 %v3685
        %3805 = vmatprep.subr.bf16.mxu0 0
        %3806 = vmatpush1.bf16.msra.mxu0 %v3686
        %3807 = vmatprep.subr.bf16.mxu0 0
        %3808 = vmatpush1.bf16.msra.mxu0 %v3687
        %3809 = vmatprep.mubr.bf16.mxu0 %v3490
        %3810 = vmatmul.mubr.bf16.gmra.mrb[0].mxu0 %v3489
        %v3811 = vpop.f32.mrb[0].mxu0
        %v3812 = vadd.f32 %v3771, %v3811
        %v3813 = vpop.f32.mrb[0].mxu0
        %v3814 = vpop.f32.mrb[0].mxu0
        %v3815 = vadd.f32 %v3774, %v3814
        %v3816 = vpop.f32.mrb[0].mxu0
        %3817 = vdwg.mxu0
        %3818 = vmatprep.subr.bf16.mxu0 0
        %3819 = vmatpush1.bf16.msra.mxu0 %v3688
        %3820 = vmatprep.subr.bf16.mxu0 0
        %3821 = vmatpush1.bf16.msra.mxu0 %v3689
        %3822 = vmatprep.subr.bf16.mxu0 0
        %3823 = vmatpush1.bf16.msra.mxu0 %v3690
        %3824 = vmatprep.subr.bf16.mxu0 0
        %3825 = vmatpush1.bf16.msra.mxu0 %v3691
        %3826 = vmatprep.subr.bf16.mxu0 0
        %3827 = vmatpush1.bf16.msra.mxu0 %v3692
        %3828 = vmatprep.subr.bf16.mxu0 0
        %3829 = vmatpush1.bf16.msra.mxu0 %v3693
        %3830 = vmatprep.subr.bf16.mxu0 0
        %3831 = vmatpush1.bf16.msra.mxu0 %v3694
        %3832 = vmatprep.subr.bf16.mxu0 0
        %3833 = vmatpush1.bf16.msra.mxu0 %v3695
        %3834 = vmatprep.subr.bf16.mxu0 0
        %3835 = vmatpush1.bf16.msra.mxu0 0
        %3836 = vmatprep.subr.bf16.mxu0 0
        %3837 = vmatpush1.bf16.msra.mxu0 0
        %3838 = vmatprep.subr.bf16.mxu0 0
        %3839 = vmatpush1.bf16.msra.mxu0 0
        %3840 = vmatprep.subr.bf16.mxu0 0
        %3841 = vmatpush1.bf16.msra.mxu0 0
        %3842 = vmatprep.subr.bf16.mxu0 0
        %3843 = vmatpush1.bf16.msra.mxu0 0
        %3844 = vmatprep.subr.bf16.mxu0 0
        %3845 = vmatpush1.bf16.msra.mxu0 0
        %3846 = vmatprep.subr.bf16.mxu0 0
        %3847 = vmatpush1.bf16.msra.mxu0 0
        %3848 = vmatprep.subr.bf16.mxu0 0
        %3849 = vmatpush1.bf16.msra.mxu0 0
        %3850 = vmatprep.mubr.bf16.mxu0 0
        %3851 = vmatmul.mubr.bf16.gmra.mrb[0].mxu0 %v3491
        %v3852 = vpop.f32.mrb[0].mxu0
        %v3853 = vadd.f32 %v3812, %v3852
        %v3854 = vpop.f32.mrb[0].mxu0
        %v3855 = vpop.f32.mrb[0].mxu0
        %v3856 = vadd.f32 %v3815, %v3855
        %v3857 = vpop.f32.mrb[0].mxu0
        %3858 = vdwg.mxu0
        %v3859 = vmax.f32 %v3853, 0.0
        %v3860 = vmax.f32 %v3856, 0.0
        %v3861 = vpack.c.bf16 %v3860, %v3859
        %3862 = vst [vmem:[#allocation3 + $0x40] sm:$0xff] %v3861
        %s3863 = scalar_lea.vmem [#allocation8], 1280
        %v3864 = vld [vmem:[%s3863] sm:$0xf]
        %v3865 = vld [vmem:[%s3863 + $0x4] sm:$0xf]
        %v3866 = vld [vmem:[%s3863 + $0x8] sm:$0xf]
        %v3867 = vld [vmem:[%s3863 + $0xc] sm:$0xf]
        %v3868 = vld [vmem:[%s3863 + $0x10] sm:$0xf]
        %v3869 = vld [vmem:[%s3863 + $0x14] sm:$0xf]
        %v3870 = vld [vmem:[%s3863 + $0x18] sm:$0xf]
        %v3871 = vld [vmem:[%s3863 + $0x1c] sm:$0xf]
        %v3872 = vld [vmem:[%s3863 + $0x20] sm:$0xf]
        %v3873 = vld [vmem:[%s3863 + $0x24] sm:$0xf]
        %v3874 = vld [vmem:[%s3863 + $0x28] sm:$0xf]
        %v3875 = vld [vmem:[%s3863 + $0x2c] sm:$0xf]
        %v3876 = vld [vmem:[%s3863 + $0x30] sm:$0xf]
        %v3877 = vld [vmem:[%s3863 + $0x34] sm:$0xf]
        %v3878 = vld [vmem:[%s3863 + $0x38] sm:$0xf]
        %v3879 = vld [vmem:[%s3863 + $0x3c] sm:$0xf]
        %v3880 = vld [vmem:[%s3863 + $0x40] sm:$0xf]
        %v3881 = vld [vmem:[%s3863 + $0x44] sm:$0xf]
        %v3882 = vld [vmem:[%s3863 + $0x48] sm:$0xf]
        %v3883 = vld [vmem:[%s3863 + $0x4c] sm:$0xf]
        %v3884 = vld [vmem:[%s3863 + $0x50] sm:$0xf]
        %v3885 = vld [vmem:[%s3863 + $0x54] sm:$0xf]
        %v3886 = vld [vmem:[%s3863 + $0x58] sm:$0xf]
        %v3887 = vld [vmem:[%s3863 + $0x5c] sm:$0xf]
        %v3888 = vld [vmem:[%s3863 + $0x60] sm:$0xf]
        %v3889 = vld [vmem:[%s3863 + $0x64] sm:$0xf]
        %v3890 = vld [vmem:[%s3863 + $0x68] sm:$0xf]
        %v3891 = vld [vmem:[%s3863 + $0x6c] sm:$0xf]
        %v3892 = vld [vmem:[%s3863 + $0x70] sm:$0xf]
        %v3893 = vld [vmem:[%s3863 + $0x74] sm:$0xf]
        %v3894 = vld [vmem:[%s3863 + $0x78] sm:$0xf]
        %v3895 = vld [vmem:[%s3863 + $0x7c] sm:$0xf]
        %v3896 = vld [vmem:[%s3863 + $0x80] sm:$0xf]
        %v3897 = vld [vmem:[%s3863 + $0x84] sm:$0xf]
        %v3898 = vld [vmem:[%s3863 + $0x88] sm:$0xf]
        %v3899 = vld [vmem:[%s3863 + $0x8c] sm:$0xf]
        %v3900 = vld [vmem:[%s3863 + $0x90] sm:$0xf]
        %v3901 = vld [vmem:[%s3863 + $0x94] sm:$0xf]
        %v3902 = vld [vmem:[%s3863 + $0x98] sm:$0xf]
        %v3903 = vld [vmem:[%s3863 + $0x9c] sm:$0xf]
        %v3904 = vld [vmem:[%s3863 + $0xa0] sm:$0xf]
        %v3905 = vld [vmem:[%s3863 + $0xa4] sm:$0xf]
        %v3906 = vld [vmem:[%s3863 + $0xa8] sm:$0xf]
        %v3907 = vld [vmem:[%s3863 + $0xac] sm:$0xf]
        %v3908 = vld [vmem:[%s3863 + $0xb0] sm:$0xf]
        %v3909 = vld [vmem:[%s3863 + $0xb4] sm:$0xf]
        %v3910 = vld [vmem:[%s3863 + $0xb8] sm:$0xf]
        %v3911 = vld [vmem:[%s3863 + $0xbc] sm:$0xf]
        %v3912 = vld [vmem:[%s3863 + $0xc0] sm:$0xf]
        %v3913 = vld [vmem:[%s3863 + $0xc4] sm:$0xf]
        %v3914 = vld [vmem:[%s3863 + $0xc8] sm:$0xf]
        %v3915 = vld [vmem:[%s3863 + $0xcc] sm:$0xf]
        %v3916 = vld [vmem:[%s3863 + $0xd0] sm:$0xf]
        %v3917 = vld [vmem:[%s3863 + $0xd4] sm:$0xf]
        %v3918 = vld [vmem:[%s3863 + $0xd8] sm:$0xf]
        %v3919 = vld [vmem:[%s3863 + $0xdc] sm:$0xf]
        %v3920 = vld [vmem:[%s3863 + $0xe0] sm:$0xf]
        %v3921 = vld [vmem:[%s3863 + $0xe4] sm:$0xf]
        %v3922 = vld [vmem:[%s3863 + $0xe8] sm:$0xf]
        %v3923 = vld [vmem:[%s3863 + $0xec] sm:$0xf]
        %v3924 = vld [vmem:[%s3863 + $0xf0] sm:$0xf]
        %v3925 = vld [vmem:[%s3863 + $0xf4] sm:$0xf]
        %v3926 = vld [vmem:[%s3863 + $0xf8] sm:$0xf]
        %v3927 = vld [vmem:[%s3863 + $0xfc] sm:$0xf]
        %v3928 = vld [vmem:[%s3863 + $0x100] sm:$0xf]
        %v3929 = vld [vmem:[%s3863 + $0x104] sm:$0xf]
        %v3930 = vld [vmem:[%s3863 + $0x108] sm:$0xf]
        %v3931 = vld [vmem:[%s3863 + $0x10c] sm:$0xf]
        %v3932 = vld [vmem:[%s3863 + $0x110] sm:$0xf]
        %v3933 = vld [vmem:[%s3863 + $0x114] sm:$0xf]
        %v3934 = vld [vmem:[%s3863 + $0x118] sm:$0xf]
        %v3935 = vld [vmem:[%s3863 + $0x11c] sm:$0xf]
        %v3936 = vld [vmem:[%s3863 + $0x120] sm:$0xf]
        %v3937 = vld [vmem:[%s3863 + $0x124] sm:$0xf]
        %v3938 = vld [vmem:[%s3863 + $0x128] sm:$0xf]
        %v3939 = vld [vmem:[%s3863 + $0x12c] sm:$0xf]
        %v3940 = vld [vmem:[%s3863 + $0x130] sm:$0xf]
        %v3941 = vld [vmem:[%s3863 + $0x134] sm:$0xf]
        %v3942 = vld [vmem:[%s3863 + $0x138] sm:$0xf]
        %v3943 = vld [vmem:[%s3863 + $0x13c] sm:$0xf]
        %v3944 = vld [vmem:[%s4 + $0x4] sm:$0x1]
        %v3945 = vld [vmem:[#allocation3] sm:$0xff]
        %v3946 = vld [vmem:[#allocation3 + $0x10] sm:$0xff]
        %v3947 = vld [vmem:[#allocation3 + $0x20] sm:$0xff]
        %v3948 = vld [vmem:[#allocation3 + $0x30] sm:$0xff]
        %v3949 = vld [vmem:[#allocation3 + $0x40] sm:$0xff]
        %v3950 = vlaneseq
        %v3951 = vshrl.u32 %v3950, 7
        %v3952 = vsub.s32 0, %v3951
        %v3953 = vrot.slane %v3944, %v3952
        %v4034 = vunpack.c.l.b16 %v3864
        %v4035 = vunpack.c.l.b16 %v3865
        %v4036 = vunpack.c.l.b16 %v3866
        %v4037 = vunpack.c.l.b16 %v3867
        %v4038 = vunpack.c.l.b16 %v3868
        %v4039 = vunpack.c.l.b16 %v3869
        %v4040 = vunpack.c.l.b16 %v3870
        %v4041 = vunpack.c.l.b16 %v3871
        %v4042 = vunpack.c.l.b16 %v3872
        %v4043 = vunpack.c.l.b16 %v3873
        %v4044 = vunpack.c.l.b16 %v3874
        %v4045 = vunpack.c.l.b16 %v3875
        %v4046 = vunpack.c.l.b16 %v3876
        %v4047 = vunpack.c.l.b16 %v3877
        %v4048 = vunpack.c.l.b16 %v3878
        %v4049 = vunpack.c.l.b16 %v3879
        %v4050 = vunpack.c.l.b16 %v3880
        %v4051 = vunpack.c.l.b16 %v3881
        %v4052 = vunpack.c.l.b16 %v3882
        %v4053 = vunpack.c.l.b16 %v3883
        %v4054 = vunpack.c.l.b16 %v3884
        %v4055 = vunpack.c.l.b16 %v3885
        %v4056 = vunpack.c.l.b16 %v3886
        %v4057 = vunpack.c.l.b16 %v3887
        %v4058 = vunpack.c.l.b16 %v3888
        %v4059 = vunpack.c.l.b16 %v3889
        %v4060 = vunpack.c.l.b16 %v3890
        %v4061 = vunpack.c.l.b16 %v3891
        %v4062 = vunpack.c.l.b16 %v3892
        %v4063 = vunpack.c.l.b16 %v3893
        %v4064 = vunpack.c.l.b16 %v3894
        %v4065 = vunpack.c.l.b16 %v3895
        %v4066 = vunpack.c.l.b16 %v3896
        %v4067 = vunpack.c.l.b16 %v3897
        %v4068 = vunpack.c.l.b16 %v3898
        %v4069 = vunpack.c.l.b16 %v3899
        %v4070 = vunpack.c.l.b16 %v3900
        %v4071 = vunpack.c.l.b16 %v3901
        %v4072 = vunpack.c.l.b16 %v3902
        %v4073 = vunpack.c.l.b16 %v3903
        %v4074 = vunpack.c.l.b16 %v3904
        %v4075 = vunpack.c.l.b16 %v3905
        %v4076 = vunpack.c.l.b16 %v3906
        %v4077 = vunpack.c.l.b16 %v3907
        %v4078 = vunpack.c.l.b16 %v3908
        %v4079 = vunpack.c.l.b16 %v3909
        %v4080 = vunpack.c.l.b16 %v3910
        %v4081 = vunpack.c.l.b16 %v3911
        %v4082 = vunpack.c.l.b16 %v3912
        %v4083 = vunpack.c.l.b16 %v3913
        %v4084 = vunpack.c.l.b16 %v3914
        %v4085 = vunpack.c.l.b16 %v3915
        %v4086 = vunpack.c.l.b16 %v3916
        %v4087 = vunpack.c.l.b16 %v3917
        %v4088 = vunpack.c.l.b16 %v3918
        %v4089 = vunpack.c.l.b16 %v3919
        %v4090 = vunpack.c.l.b16 %v3920
        %v4091 = vunpack.c.l.b16 %v3921
        %v4092 = vunpack.c.l.b16 %v3922
        %v4093 = vunpack.c.l.b16 %v3923
        %v4094 = vunpack.c.l.b16 %v3924
        %v4095 = vunpack.c.l.b16 %v3925
        %v4096 = vunpack.c.l.b16 %v3926
        %v4097 = vunpack.c.l.b16 %v3927
        %v4098 = vunpack.c.l.b16 %v3928
        %v4099 = vunpack.c.l.b16 %v3929
        %v4100 = vunpack.c.l.b16 %v3930
        %v4101 = vunpack.c.l.b16 %v3931
        %v4102 = vunpack.c.l.b16 %v3932
        %v4103 = vunpack.c.l.b16 %v3933
        %v4104 = vunpack.c.l.b16 %v3934
        %v4105 = vunpack.c.l.b16 %v3935
        %v4106 = vunpack.c.l.b16 %v3936
        %v4107 = vunpack.c.l.b16 %v3937
        %v4108 = vunpack.c.l.b16 %v3938
        %v4109 = vunpack.c.l.b16 %v3939
        %v4110 = vunpack.c.l.b16 %v3940
        %v4111 = vunpack.c.l.b16 %v3941
        %v4112 = vunpack.c.l.b16 %v3942
        %v4113 = vunpack.c.l.b16 %v3943
        %v4114 = vpack.c.b16 %v4035, %v4034
        %v4115 = vpack.c.b16 %v4037, %v4036
        %v4116 = vpack.c.b16 %v4039, %v4038
        %v4117 = vpack.c.b16 %v4041, %v4040
        %v4118 = vpack.c.b16 %v4043, %v4042
        %v4119 = vpack.c.b16 %v4045, %v4044
        %v4120 = vpack.c.b16 %v4047, %v4046
        %v4121 = vpack.c.b16 %v4049, %v4048
        %v4122 = vpack.c.b16 %v4051, %v4050
        %v4123 = vpack.c.b16 %v4053, %v4052
        %v4124 = vpack.c.b16 %v4055, %v4054
        %v4125 = vpack.c.b16 %v4057, %v4056
        %v4126 = vpack.c.b16 %v4059, %v4058
        %v4127 = vpack.c.b16 %v4061, %v4060
        %v4128 = vpack.c.b16 %v4063, %v4062
        %v4129 = vpack.c.b16 %v4065, %v4064
        %v4130 = vpack.c.b16 %v4067, %v4066
        %v4131 = vpack.c.b16 %v4069, %v4068
        %v4132 = vpack.c.b16 %v4071, %v4070
        %v4133 = vpack.c.b16 %v4073, %v4072
        %v4134 = vpack.c.b16 %v4075, %v4074
        %v4135 = vpack.c.b16 %v4077, %v4076
        %v4136 = vpack.c.b16 %v4079, %v4078
        %v4137 = vpack.c.b16 %v4081, %v4080
        %v4138 = vpack.c.b16 %v4083, %v4082
        %v4139 = vpack.c.b16 %v4085, %v4084
        %v4140 = vpack.c.b16 %v4087, %v4086
        %v4141 = vpack.c.b16 %v4089, %v4088
        %v4142 = vpack.c.b16 %v4091, %v4090
        %v4143 = vpack.c.b16 %v4093, %v4092
        %v4144 = vpack.c.b16 %v4095, %v4094
        %v4145 = vpack.c.b16 %v4097, %v4096
        %v4146 = vpack.c.b16 %v4099, %v4098
        %v4147 = vpack.c.b16 %v4101, %v4100
        %v4148 = vpack.c.b16 %v4103, %v4102
        %v4149 = vpack.c.b16 %v4105, %v4104
        %v4150 = vpack.c.b16 %v4107, %v4106
        %v4151 = vpack.c.b16 %v4109, %v4108
        %v4152 = vpack.c.b16 %v4111, %v4110
        %v4153 = vpack.c.b16 %v4113, %v4112
        %4194 = vmatprep.subr.bf16.mxu0 0
        %4195 = vmatpush1.bf16.msra.mxu0 %v4114
        %4196 = vmatprep.subr.bf16.mxu0 0
        %4197 = vmatpush1.bf16.msra.mxu0 %v4115
        %4198 = vmatprep.subr.bf16.mxu0 0
        %4199 = vmatpush1.bf16.msra.mxu0 %v4116
        %4200 = vmatprep.subr.bf16.mxu0 0
        %4201 = vmatpush1.bf16.msra.mxu0 %v4117
        %4202 = vmatprep.subr.bf16.mxu0 0
        %4203 = vmatpush1.bf16.msra.mxu0 %v4118
        %4204 = vmatprep.subr.bf16.mxu0 0
        %4205 = vmatpush1.bf16.msra.mxu0 %v4119
        %4206 = vmatprep.subr.bf16.mxu0 0
        %4207 = vmatpush1.bf16.msra.mxu0 %v4120
        %4208 = vmatprep.subr.bf16.mxu0 0
        %4209 = vmatpush1.bf16.msra.mxu0 %v4121
        %4210 = vmatprep.subr.bf16.mxu0 0
        %4211 = vmatpush1.bf16.msra.mxu0 %v4122
        %4212 = vmatprep.subr.bf16.mxu0 0
        %4213 = vmatpush1.bf16.msra.mxu0 %v4123
        %4214 = vmatprep.subr.bf16.mxu0 0
        %4215 = vmatpush1.bf16.msra.mxu0 %v4124
        %4216 = vmatprep.subr.bf16.mxu0 0
        %4217 = vmatpush1.bf16.msra.mxu0 %v4125
        %4218 = vmatprep.subr.bf16.mxu0 0
        %4219 = vmatpush1.bf16.msra.mxu0 %v4126
        %4220 = vmatprep.subr.bf16.mxu0 0
        %4221 = vmatpush1.bf16.msra.mxu0 %v4127
        %4222 = vmatprep.subr.bf16.mxu0 0
        %4223 = vmatpush1.bf16.msra.mxu0 %v4128
        %4224 = vmatprep.subr.bf16.mxu0 0
        %4225 = vmatpush1.bf16.msra.mxu0 %v4129
        %4226 = vmatprep.mubr.bf16.mxu0 %v3946
        %4227 = vmatmul.mubr.bf16.gmra.mrb[0].mxu0 %v3945
        %v4228 = vpop.f32.mrb[0].mxu0
        %v4229 = vadd.f32 %v3953, %v4228
        %v4230 = vpop.f32.mrb[0].mxu0
        %v4231 = vpop.f32.mrb[0].mxu0
        %v4232 = vadd.f32 %v3953, %v4231
        %v4233 = vpop.f32.mrb[0].mxu0
        %4234 = vdwg.mxu0
        %4235 = vmatprep.subr.bf16.mxu0 0
        %4236 = vmatpush1.bf16.msra.mxu0 %v4130
        %4237 = vmatprep.subr.bf16.mxu0 0
        %4238 = vmatpush1.bf16.msra.mxu0 %v4131
        %4239 = vmatprep.subr.bf16.mxu0 0
        %4240 = vmatpush1.bf16.msra.mxu0 %v4132
        %4241 = vmatprep.subr.bf16.mxu0 0
        %4242 = vmatpush1.bf16.msra.mxu0 %v4133
        %4243 = vmatprep.subr.bf16.mxu0 0
        %4244 = vmatpush1.bf16.msra.mxu0 %v4134
        %4245 = vmatprep.subr.bf16.mxu0 0
        %4246 = vmatpush1.bf16.msra.mxu0 %v4135
        %4247 = vmatprep.subr.bf16.mxu0 0
        %4248 = vmatpush1.bf16.msra.mxu0 %v4136
        %4249 = vmatprep.subr.bf16.mxu0 0
        %4250 = vmatpush1.bf16.msra.mxu0 %v4137
        %4251 = vmatprep.subr.bf16.mxu0 0
        %4252 = vmatpush1.bf16.msra.mxu0 %v4138
        %4253 = vmatprep.subr.bf16.mxu0 0
        %4254 = vmatpush1.bf16.msra.mxu0 %v4139
        %4255 = vmatprep.subr.bf16.mxu0 0
        %4256 = vmatpush1.bf16.msra.mxu0 %v4140
        %4257 = vmatprep.subr.bf16.mxu0 0
        %4258 = vmatpush1.bf16.msra.mxu0 %v4141
        %4259 = vmatprep.subr.bf16.mxu0 0
        %4260 = vmatpush1.bf16.msra.mxu0 %v4142
        %4261 = vmatprep.subr.bf16.mxu0 0
        %4262 = vmatpush1.bf16.msra.mxu0 %v4143
        %4263 = vmatprep.subr.bf16.mxu0 0
        %4264 = vmatpush1.bf16.msra.mxu0 %v4144
        %4265 = vmatprep.subr.bf16.mxu0 0
        %4266 = vmatpush1.bf16.msra.mxu0 %v4145
        %4267 = vmatprep.mubr.bf16.mxu0 %v3948
        %4268 = vmatmul.mubr.bf16.gmra.mrb[0].mxu0 %v3947
        %v4269 = vpop.f32.mrb[0].mxu0
        %v4270 = vadd.f32 %v4229, %v4269
        %v4271 = vpop.f32.mrb[0].mxu0
        %v4272 = vpop.f32.mrb[0].mxu0
        %v4273 = vadd.f32 %v4232, %v4272
        %v4274 = vpop.f32.mrb[0].mxu0
        %4275 = vdwg.mxu0
        %4276 = vmatprep.subr.bf16.mxu0 0
        %4277 = vmatpush1.bf16.msra.mxu0 %v4146
        %4278 = vmatprep.subr.bf16.mxu0 0
        %4279 = vmatpush1.bf16.msra.mxu0 %v4147
        %4280 = vmatprep.subr.bf16.mxu0 0
        %4281 = vmatpush1.bf16.msra.mxu0 %v4148
        %4282 = vmatprep.subr.bf16.mxu0 0
        %4283 = vmatpush1.bf16.msra.mxu0 %v4149
        %4284 = vmatprep.subr.bf16.mxu0 0
        %4285 = vmatpush1.bf16.msra.mxu0 %v4150
        %4286 = vmatprep.subr.bf16.mxu0 0
        %4287 = vmatpush1.bf16.msra.mxu0 %v4151
        %4288 = vmatprep.subr.bf16.mxu0 0
        %4289 = vmatpush1.bf16.msra.mxu0 %v4152
        %4290 = vmatprep.subr.bf16.mxu0 0
        %4291 = vmatpush1.bf16.msra.mxu0 %v4153
        %4292 = vmatprep.subr.bf16.mxu0 0
        %4293 = vmatpush1.bf16.msra.mxu0 0
        %4294 = vmatprep.subr.bf16.mxu0 0
        %4295 = vmatpush1.bf16.msra.mxu0 0
        %4296 = vmatprep.subr.bf16.mxu0 0
        %4297 = vmatpush1.bf16.msra.mxu0 0
        %4298 = vmatprep.subr.bf16.mxu0 0
        %4299 = vmatpush1.bf16.msra.mxu0 0
        %4300 = vmatprep.subr.bf16.mxu0 0
        %4301 = vmatpush1.bf16.msra.mxu0 0
        %4302 = vmatprep.subr.bf16.mxu0 0
        %4303 = vmatpush1.bf16.msra.mxu0 0
        %4304 = vmatprep.subr.bf16.mxu0 0
        %4305 = vmatpush1.bf16.msra.mxu0 0
        %4306 = vmatprep.subr.bf16.mxu0 0
        %4307 = vmatpush1.bf16.msra.mxu0 0
        %4308 = vmatprep.mubr.bf16.mxu0 0
        %4309 = vmatmul.mubr.bf16.gmra.mrb[0].mxu0 %v3949
        %v4310 = vpop.f32.mrb[0].mxu0
        %v4311 = vadd.f32 %v4270, %v4310
        %v4312 = vpop.f32.mrb[0].mxu0
        %v4313 = vpop.f32.mrb[0].mxu0
        %v4314 = vadd.f32 %v4273, %v4313
        %v4315 = vpop.f32.mrb[0].mxu0
        %4316 = vdwg.mxu0
        %v4317 = vmax.f32 %v4311, 0.0
        %v4318 = vmax.f32 %v4314, 0.0
        %v4319 = vpack.c.bf16 %v4318, %v4317
        %4320 = vst [vmem:[#allocation4 + $0x80] sm:$0xff] %v4319
        %v4321 = vld [vmem:[#allocation4] sm:$0x80]
        %v4322 = vld [vmem:[#allocation4 + $0x20] sm:$0x80]
        %v4323 = vld [vmem:[#allocation4 + $0x40] sm:$0x80]
        %v4324 = vld [vmem:[#allocation4 + $0x60] sm:$0x80]
        %v4325 = vld [vmem:[#allocation4 + $0x80] sm:$0x80]
        %s4326 = scalar_lea.vmem [#allocation8], 1600
        %v4327 = vld [vmem:[%s4326] sm:$0xf]
        %v4328 = vld [vmem:[%s4326 + $0x4] sm:$0xf]
        %v4329 = vld [vmem:[%s4326 + $0x8] sm:$0xf]
        %v4330 = vld [vmem:[%s4326 + $0xc] sm:$0xf]
        %v4331 = vld [vmem:[%s4326 + $0x10] sm:$0xf]
        %v4332 = vld [vmem:[%s4326 + $0x14] sm:$0xf]
        %v4333 = vld [vmem:[%s4326 + $0x18] sm:$0xf]
        %v4334 = vld [vmem:[%s4326 + $0x1c] sm:$0xf]
        %v4335 = vld [vmem:[%s4326 + $0x20] sm:$0xf]
        %v4336 = vld [vmem:[%s4326 + $0x24] sm:$0xf]
        %v4337 = vld [vmem:[%s4326 + $0x28] sm:$0xf]
        %v4338 = vld [vmem:[%s4326 + $0x2c] sm:$0xf]
        %v4339 = vld [vmem:[%s4326 + $0x30] sm:$0xf]
        %v4340 = vld [vmem:[%s4326 + $0x34] sm:$0xf]
        %v4341 = vld [vmem:[%s4326 + $0x38] sm:$0xf]
        %v4342 = vld [vmem:[%s4326 + $0x3c] sm:$0xf]
        %v4343 = vld [vmem:[%s4326 + $0x40] sm:$0xf]
        %v4344 = vld [vmem:[%s4326 + $0x44] sm:$0xf]
        %v4345 = vld [vmem:[%s4326 + $0x48] sm:$0xf]
        %v4346 = vld [vmem:[%s4326 + $0x4c] sm:$0xf]
        %v4347 = vld [vmem:[%s4326 + $0x50] sm:$0xf]
        %v4348 = vld [vmem:[%s4326 + $0x54] sm:$0xf]
        %v4349 = vld [vmem:[%s4326 + $0x58] sm:$0xf]
        %v4350 = vld [vmem:[%s4326 + $0x5c] sm:$0xf]
        %v4351 = vld [vmem:[%s4326 + $0x60] sm:$0xf]
        %v4352 = vld [vmem:[%s4326 + $0x64] sm:$0xf]
        %v4353 = vld [vmem:[%s4326 + $0x68] sm:$0xf]
        %v4354 = vld [vmem:[%s4326 + $0x6c] sm:$0xf]
        %v4355 = vld [vmem:[%s4326 + $0x70] sm:$0xf]
        %v4356 = vld [vmem:[%s4326 + $0x74] sm:$0xf]
        %v4357 = vld [vmem:[%s4326 + $0x78] sm:$0xf]
        %v4358 = vld [vmem:[%s4326 + $0x7c] sm:$0xf]
        %v4359 = vld [vmem:[%s4326 + $0x80] sm:$0xf]
        %v4360 = vld [vmem:[%s4326 + $0x84] sm:$0xf]
        %v4361 = vld [vmem:[%s4326 + $0x88] sm:$0xf]
        %v4362 = vld [vmem:[%s4326 + $0x8c] sm:$0xf]
        %v4363 = vld [vmem:[%s4326 + $0x90] sm:$0xf]
        %v4364 = vld [vmem:[%s4326 + $0x94] sm:$0xf]
        %v4365 = vld [vmem:[%s4326 + $0x98] sm:$0xf]
        %v4366 = vld [vmem:[%s4326 + $0x9c] sm:$0xf]
        %v4367 = vld [vmem:[%s4326 + $0xa0] sm:$0xf]
        %v4368 = vld [vmem:[%s4326 + $0xa4] sm:$0xf]
        %v4369 = vld [vmem:[%s4326 + $0xa8] sm:$0xf]
        %v4370 = vld [vmem:[%s4326 + $0xac] sm:$0xf]
        %v4371 = vld [vmem:[%s4326 + $0xb0] sm:$0xf]
        %v4372 = vld [vmem:[%s4326 + $0xb4] sm:$0xf]
        %v4373 = vld [vmem:[%s4326 + $0xb8] sm:$0xf]
        %v4374 = vld [vmem:[%s4326 + $0xbc] sm:$0xf]
        %v4375 = vld [vmem:[%s4326 + $0xc0] sm:$0xf]
        %v4376 = vld [vmem:[%s4326 + $0xc4] sm:$0xf]
        %v4377 = vld [vmem:[%s4326 + $0xc8] sm:$0xf]
        %v4378 = vld [vmem:[%s4326 + $0xcc] sm:$0xf]
        %v4379 = vld [vmem:[%s4326 + $0xd0] sm:$0xf]
        %v4380 = vld [vmem:[%s4326 + $0xd4] sm:$0xf]
        %v4381 = vld [vmem:[%s4326 + $0xd8] sm:$0xf]
        %v4382 = vld [vmem:[%s4326 + $0xdc] sm:$0xf]
        %v4383 = vld [vmem:[%s4326 + $0xe0] sm:$0xf]
        %v4384 = vld [vmem:[%s4326 + $0xe4] sm:$0xf]
        %v4385 = vld [vmem:[%s4326 + $0xe8] sm:$0xf]
        %v4386 = vld [vmem:[%s4326 + $0xec] sm:$0xf]
        %v4387 = vld [vmem:[%s4326 + $0xf0] sm:$0xf]
        %v4388 = vld [vmem:[%s4326 + $0xf4] sm:$0xf]
        %v4389 = vld [vmem:[%s4326 + $0xf8] sm:$0xf]
        %v4390 = vld [vmem:[%s4326 + $0xfc] sm:$0xf]
        %v4391 = vld [vmem:[%s4326 + $0x100] sm:$0xf]
        %v4392 = vld [vmem:[%s4326 + $0x104] sm:$0xf]
        %v4393 = vld [vmem:[%s4326 + $0x108] sm:$0xf]
        %v4394 = vld [vmem:[%s4326 + $0x10c] sm:$0xf]
        %v4395 = vld [vmem:[%s4326 + $0x110] sm:$0xf]
        %v4396 = vld [vmem:[%s4326 + $0x114] sm:$0xf]
        %v4397 = vld [vmem:[%s4326 + $0x118] sm:$0xf]
        %v4398 = vld [vmem:[%s4326 + $0x11c] sm:$0xf]
        %v4399 = vld [vmem:[%s4326 + $0x120] sm:$0xf]
        %v4400 = vld [vmem:[%s4326 + $0x124] sm:$0xf]
        %v4401 = vld [vmem:[%s4326 + $0x128] sm:$0xf]
        %v4402 = vld [vmem:[%s4326 + $0x12c] sm:$0xf]
        %v4403 = vld [vmem:[%s4326 + $0x130] sm:$0xf]
        %v4404 = vld [vmem:[%s4326 + $0x134] sm:$0xf]
        %v4405 = vld [vmem:[%s4326 + $0x138] sm:$0xf]
        %v4406 = vld [vmem:[%s4326 + $0x13c] sm:$0xf]
        %v4407 = vld [vmem:[%s4 + $0x5] sm:$0x1]
        %v4409 = vshrl.u32 %v4321, 16
        %v4411 = vrot.slane %v4409, 7
        %v4413 = vshrl.u32 %v4322, 16
        %v4415 = vrot.slane %v4413, 7
        %v4417 = vshrl.u32 %v4323, 16
        %v4419 = vrot.slane %v4417, 7
        %v4421 = vshrl.u32 %v4324, 16
        %v4423 = vrot.slane %v4421, 7
        %v4425 = vshrl.u32 %v4325, 16
        %v4427 = vrot.slane %v4425, 7
        %v4513 = vunpack.c.l.b16 %v4327
        %v4514 = vunpack.c.l.b16 %v4328
        %v4515 = vunpack.c.l.b16 %v4329
        %v4516 = vunpack.c.l.b16 %v4330
        %v4517 = vunpack.c.l.b16 %v4331
        %v4518 = vunpack.c.l.b16 %v4332
        %v4519 = vunpack.c.l.b16 %v4333
        %v4520 = vunpack.c.l.b16 %v4334
        %v4521 = vunpack.c.l.b16 %v4335
        %v4522 = vunpack.c.l.b16 %v4336
        %v4523 = vunpack.c.l.b16 %v4337
        %v4524 = vunpack.c.l.b16 %v4338
        %v4525 = vunpack.c.l.b16 %v4339
        %v4526 = vunpack.c.l.b16 %v4340
        %v4527 = vunpack.c.l.b16 %v4341
        %v4528 = vunpack.c.l.b16 %v4342
        %v4529 = vunpack.c.l.b16 %v4343
        %v4530 = vunpack.c.l.b16 %v4344
        %v4531 = vunpack.c.l.b16 %v4345
        %v4532 = vunpack.c.l.b16 %v4346
        %v4533 = vunpack.c.l.b16 %v4347
        %v4534 = vunpack.c.l.b16 %v4348
        %v4535 = vunpack.c.l.b16 %v4349
        %v4536 = vunpack.c.l.b16 %v4350
        %v4537 = vunpack.c.l.b16 %v4351
        %v4538 = vunpack.c.l.b16 %v4352
        %v4539 = vunpack.c.l.b16 %v4353
        %v4540 = vunpack.c.l.b16 %v4354
        %v4541 = vunpack.c.l.b16 %v4355
        %v4542 = vunpack.c.l.b16 %v4356
        %v4543 = vunpack.c.l.b16 %v4357
        %v4544 = vunpack.c.l.b16 %v4358
        %v4545 = vunpack.c.l.b16 %v4359
        %v4546 = vunpack.c.l.b16 %v4360
        %v4547 = vunpack.c.l.b16 %v4361
        %v4548 = vunpack.c.l.b16 %v4362
        %v4549 = vunpack.c.l.b16 %v4363
        %v4550 = vunpack.c.l.b16 %v4364
        %v4551 = vunpack.c.l.b16 %v4365
        %v4552 = vunpack.c.l.b16 %v4366
        %v4553 = vunpack.c.l.b16 %v4367
        %v4554 = vunpack.c.l.b16 %v4368
        %v4555 = vunpack.c.l.b16 %v4369
        %v4556 = vunpack.c.l.b16 %v4370
        %v4557 = vunpack.c.l.b16 %v4371
        %v4558 = vunpack.c.l.b16 %v4372
        %v4559 = vunpack.c.l.b16 %v4373
        %v4560 = vunpack.c.l.b16 %v4374
        %v4561 = vunpack.c.l.b16 %v4375
        %v4562 = vunpack.c.l.b16 %v4376
        %v4563 = vunpack.c.l.b16 %v4377
        %v4564 = vunpack.c.l.b16 %v4378
        %v4565 = vunpack.c.l.b16 %v4379
        %v4566 = vunpack.c.l.b16 %v4380
        %v4567 = vunpack.c.l.b16 %v4381
        %v4568 = vunpack.c.l.b16 %v4382
        %v4569 = vunpack.c.l.b16 %v4383
        %v4570 = vunpack.c.l.b16 %v4384
        %v4571 = vunpack.c.l.b16 %v4385
        %v4572 = vunpack.c.l.b16 %v4386
        %v4573 = vunpack.c.l.b16 %v4387
        %v4574 = vunpack.c.l.b16 %v4388
        %v4575 = vunpack.c.l.b16 %v4389
        %v4576 = vunpack.c.l.b16 %v4390
        %v4577 = vunpack.c.l.b16 %v4391
        %v4578 = vunpack.c.l.b16 %v4392
        %v4579 = vunpack.c.l.b16 %v4393
        %v4580 = vunpack.c.l.b16 %v4394
        %v4581 = vunpack.c.l.b16 %v4395
        %v4582 = vunpack.c.l.b16 %v4396
        %v4583 = vunpack.c.l.b16 %v4397
        %v4584 = vunpack.c.l.b16 %v4398
        %v4585 = vunpack.c.l.b16 %v4399
        %v4586 = vunpack.c.l.b16 %v4400
        %v4587 = vunpack.c.l.b16 %v4401
        %v4588 = vunpack.c.l.b16 %v4402
        %v4589 = vunpack.c.l.b16 %v4403
        %v4590 = vunpack.c.l.b16 %v4404
        %v4591 = vunpack.c.l.b16 %v4405
        %v4592 = vunpack.c.l.b16 %v4406
        %v4593 = vpack.c.b16 %v4514, %v4513
        %v4594 = vpack.c.b16 %v4516, %v4515
        %v4595 = vpack.c.b16 %v4518, %v4517
        %v4596 = vpack.c.b16 %v4520, %v4519
        %v4597 = vpack.c.b16 %v4522, %v4521
        %v4598 = vpack.c.b16 %v4524, %v4523
        %v4599 = vpack.c.b16 %v4526, %v4525
        %v4600 = vpack.c.b16 %v4528, %v4527
        %v4601 = vpack.c.b16 %v4530, %v4529
        %v4602 = vpack.c.b16 %v4532, %v4531
        %v4603 = vpack.c.b16 %v4534, %v4533
        %v4604 = vpack.c.b16 %v4536, %v4535
        %v4605 = vpack.c.b16 %v4538, %v4537
        %v4606 = vpack.c.b16 %v4540, %v4539
        %v4607 = vpack.c.b16 %v4542, %v4541
        %v4608 = vpack.c.b16 %v4544, %v4543
        %v4609 = vpack.c.b16 %v4546, %v4545
        %v4610 = vpack.c.b16 %v4548, %v4547
        %v4611 = vpack.c.b16 %v4550, %v4549
        %v4612 = vpack.c.b16 %v4552, %v4551
        %v4613 = vpack.c.b16 %v4554, %v4553
        %v4614 = vpack.c.b16 %v4556, %v4555
        %v4615 = vpack.c.b16 %v4558, %v4557
        %v4616 = vpack.c.b16 %v4560, %v4559
        %v4617 = vpack.c.b16 %v4562, %v4561
        %v4618 = vpack.c.b16 %v4564, %v4563
        %v4619 = vpack.c.b16 %v4566, %v4565
        %v4620 = vpack.c.b16 %v4568, %v4567
        %v4621 = vpack.c.b16 %v4570, %v4569
        %v4622 = vpack.c.b16 %v4572, %v4571
        %v4623 = vpack.c.b16 %v4574, %v4573
        %v4624 = vpack.c.b16 %v4576, %v4575
        %v4625 = vpack.c.b16 %v4578, %v4577
        %v4626 = vpack.c.b16 %v4580, %v4579
        %v4627 = vpack.c.b16 %v4582, %v4581
        %v4628 = vpack.c.b16 %v4584, %v4583
        %v4629 = vpack.c.b16 %v4586, %v4585
        %v4630 = vpack.c.b16 %v4588, %v4587
        %v4631 = vpack.c.b16 %v4590, %v4589
        %v4632 = vpack.c.b16 %v4592, %v4591
        %4673 = vmatprep.subr.bf16.mxu0 0
        %4674 = vmatpush1.bf16.msra.mxu0 %v4593
        %4675 = vmatprep.subr.bf16.mxu0 0
        %4676 = vmatpush1.bf16.msra.mxu0 %v4594
        %4677 = vmatprep.subr.bf16.mxu0 0
        %4678 = vmatpush1.bf16.msra.mxu0 %v4595
        %4679 = vmatprep.subr.bf16.mxu0 0
        %4680 = vmatpush1.bf16.msra.mxu0 %v4596
        %4681 = vmatprep.subr.bf16.mxu0 0
        %4682 = vmatpush1.bf16.msra.mxu0 %v4597
        %4683 = vmatprep.subr.bf16.mxu0 0
        %4684 = vmatpush1.bf16.msra.mxu0 %v4598
        %4685 = vmatprep.subr.bf16.mxu0 0
        %4686 = vmatpush1.bf16.msra.mxu0 %v4599
        %4687 = vmatprep.subr.bf16.mxu0 0
        %4688 = vmatpush1.bf16.msra.mxu0 %v4600
        %4689 = vmatprep.subr.bf16.mxu0 0
        %4690 = vmatpush1.bf16.msra.mxu0 %v4601
        %4691 = vmatprep.subr.bf16.mxu0 0
        %4692 = vmatpush1.bf16.msra.mxu0 %v4602
        %4693 = vmatprep.subr.bf16.mxu0 0
        %4694 = vmatpush1.bf16.msra.mxu0 %v4603
        %4695 = vmatprep.subr.bf16.mxu0 0
        %4696 = vmatpush1.bf16.msra.mxu0 %v4604
        %4697 = vmatprep.subr.bf16.mxu0 0
        %4698 = vmatpush1.bf16.msra.mxu0 %v4605
        %4699 = vmatprep.subr.bf16.mxu0 0
        %4700 = vmatpush1.bf16.msra.mxu0 %v4606
        %4701 = vmatprep.subr.bf16.mxu0 0
        %4702 = vmatpush1.bf16.msra.mxu0 %v4607
        %4703 = vmatprep.subr.bf16.mxu0 0
        %4704 = vmatpush1.bf16.msra.mxu0 %v4608
        %4705 = vmatprep.mubr.bf16.mxu0 %v4415
        %4706 = vmatmul.mubr.bf16.gmra.mrb[0].mxu0 %v4411
        %v4707 = vpop.f32.mrb[0].mxu0
        %v4708 = vadd.f32 %v4407, %v4707
        %v4709 = vpop.f32.mrb[0].mxu0
        %v4710 = vpop.f32.mrb[0].mxu0
        %v4711 = vpop.f32.mrb[0].mxu0
        %4712 = vdwg.mxu0
        %4713 = vmatprep.subr.bf16.mxu0 0
        %4714 = vmatpush1.bf16.msra.mxu0 %v4609
        %4715 = vmatprep.subr.bf16.mxu0 0
        %4716 = vmatpush1.bf16.msra.mxu0 %v4610
        %4717 = vmatprep.subr.bf16.mxu0 0
        %4718 = vmatpush1.bf16.msra.mxu0 %v4611
        %4719 = vmatprep.subr.bf16.mxu0 0
        %4720 = vmatpush1.bf16.msra.mxu0 %v4612
        %4721 = vmatprep.subr.bf16.mxu0 0
        %4722 = vmatpush1.bf16.msra.mxu0 %v4613
        %4723 = vmatprep.subr.bf16.mxu0 0
        %4724 = vmatpush1.bf16.msra.mxu0 %v4614
        %4725 = vmatprep.subr.bf16.mxu0 0
        %4726 = vmatpush1.bf16.msra.mxu0 %v4615
        %4727 = vmatprep.subr.bf16.mxu0 0
        %4728 = vmatpush1.bf16.msra.mxu0 %v4616
        %4729 = vmatprep.subr.bf16.mxu0 0
        %4730 = vmatpush1.bf16.msra.mxu0 %v4617
        %4731 = vmatprep.subr.bf16.mxu0 0
        %4732 = vmatpush1.bf16.msra.mxu0 %v4618
        %4733 = vmatprep.subr.bf16.mxu0 0
        %4734 = vmatpush1.bf16.msra.mxu0 %v4619
        %4735 = vmatprep.subr.bf16.mxu0 0
        %4736 = vmatpush1.bf16.msra.mxu0 %v4620
        %4737 = vmatprep.subr.bf16.mxu0 0
        %4738 = vmatpush1.bf16.msra.mxu0 %v4621
        %4739 = vmatprep.subr.bf16.mxu0 0
        %4740 = vmatpush1.bf16.msra.mxu0 %v4622
        %4741 = vmatprep.subr.bf16.mxu0 0
        %4742 = vmatpush1.bf16.msra.mxu0 %v4623
        %4743 = vmatprep.subr.bf16.mxu0 0
        %4744 = vmatpush1.bf16.msra.mxu0 %v4624
        %4745 = vmatprep.mubr.bf16.mxu0 %v4423
        %4746 = vmatmul.mubr.bf16.gmra.mrb[0].mxu0 %v4419
        %v4747 = vpop.f32.mrb[0].mxu0
        %v4748 = vadd.f32 %v4708, %v4747
        %v4749 = vpop.f32.mrb[0].mxu0
        %v4750 = vpop.f32.mrb[0].mxu0
        %v4751 = vpop.f32.mrb[0].mxu0
        %4752 = vdwg.mxu0
        %4753 = vmatprep.subr.bf16.mxu0 0
        %4754 = vmatpush1.bf16.msra.mxu0 %v4625
        %4755 = vmatprep.subr.bf16.mxu0 0
        %4756 = vmatpush1.bf16.msra.mxu0 %v4626
        %4757 = vmatprep.subr.bf16.mxu0 0
        %4758 = vmatpush1.bf16.msra.mxu0 %v4627
        %4759 = vmatprep.subr.bf16.mxu0 0
        %4760 = vmatpush1.bf16.msra.mxu0 %v4628
        %4761 = vmatprep.subr.bf16.mxu0 0
        %4762 = vmatpush1.bf16.msra.mxu0 %v4629
        %4763 = vmatprep.subr.bf16.mxu0 0
        %4764 = vmatpush1.bf16.msra.mxu0 %v4630
        %4765 = vmatprep.subr.bf16.mxu0 0
        %4766 = vmatpush1.bf16.msra.mxu0 %v4631
        %4767 = vmatprep.subr.bf16.mxu0 0
        %4768 = vmatpush1.bf16.msra.mxu0 %v4632
        %4769 = vmatprep.subr.bf16.mxu0 0
        %4770 = vmatpush1.bf16.msra.mxu0 0
        %4771 = vmatprep.subr.bf16.mxu0 0
        %4772 = vmatpush1.bf16.msra.mxu0 0
        %4773 = vmatprep.subr.bf16.mxu0 0
        %4774 = vmatpush1.bf16.msra.mxu0 0
        %4775 = vmatprep.subr.bf16.mxu0 0
        %4776 = vmatpush1.bf16.msra.mxu0 0
        %4777 = vmatprep.subr.bf16.mxu0 0
        %4778 = vmatpush1.bf16.msra.mxu0 0
        %4779 = vmatprep.subr.bf16.mxu0 0
        %4780 = vmatpush1.bf16.msra.mxu0 0
        %4781 = vmatprep.subr.bf16.mxu0 0
        %4782 = vmatpush1.bf16.msra.mxu0 0
        %4783 = vmatprep.subr.bf16.mxu0 0
        %4784 = vmatpush1.bf16.msra.mxu0 0
        %4785 = vmatprep.mubr.bf16.mxu0 0
        %4786 = vmatmul.mubr.bf16.gmra.mrb[0].mxu0 %v4427
        %v4787 = vpop.f32.mrb[0].mxu0
        %v4788 = vadd.f32 %v4748, %v4787
        %v4789 = vpop.f32.mrb[0].mxu0
        %v4790 = vpop.f32.mrb[0].mxu0
        %v4791 = vpop.f32.mrb[0].mxu0
        %4792 = vdwg.mxu0
        %v4793 = vmax.f32 %v4788, 0.0
        %v4794 = vld [vmem:[%s5] sm:$0xff]
        %v4795 = vld [vmem:[%s5 + $0x8] sm:$0xff]
        %v4796 = vld [vmem:[%s5 + $0x10] sm:$0xff]
        %v4797 = vld [vmem:[%s5 + $0x18] sm:$0xff]
        %v4798 = vld [vmem:[%s5 + $0x20] sm:$0xff]
        %v4799 = vld [vmem:[%s5 + $0x28] sm:$0xff]
        %v4800 = vld [vmem:[%s5 + $0x30] sm:$0xff]
        %v4801 = vld [vmem:[%s5 + $0x38] sm:$0xff]
        %v4802 = vld [vmem:[%s5 + $0x40] sm:$0xff]
        %v4803 = vld [vmem:[%s5 + $0x48] sm:$0xff]
        %v4804 = vld [vmem:[%s5 + $0x50] sm:$0xff]
        %v4805 = vld [vmem:[%s5 + $0x58] sm:$0xff]
        %v4806 = vld [vmem:[%s5 + $0x60] sm:$0xff]
        %v4807 = vld [vmem:[%s5 + $0x68] sm:$0xff]
        %v4808 = vld [vmem:[%s5 + $0x70] sm:$0xff]
        %v4809 = vld [vmem:[%s5 + $0x78] sm:$0xff]
        %v4810 = vld [vmem:[%s6] sm:$0x1]
        %4811 = vmatprep.subr.mxu0 0.0
        %4812 = vmatpush1.msra.mxu0 %v4794
        %4813 = vmatprep.subr.mxu0 0.0
        %4814 = vmatpush1.msra.mxu0 %v4795
        %4815 = vmatprep.subr.mxu0 0.0
        %4816 = vmatpush1.msra.mxu0 %v4796
        %4817 = vmatprep.subr.mxu0 0.0
        %4818 = vmatpush1.msra.mxu0 %v4797
        %4819 = vmatprep.subr.mxu0 0.0
        %4820 = vmatpush1.msra.mxu0 %v4798
        %4821 = vmatprep.subr.mxu0 0.0
        %4822 = vmatpush1.msra.mxu0 %v4799
        %4823 = vmatprep.subr.mxu0 0.0
        %4824 = vmatpush1.msra.mxu0 %v4800
        %4825 = vmatprep.subr.mxu0 0.0
        %4826 = vmatpush1.msra.mxu0 %v4801
        %4827 = vmatprep.subr.mxu0 0.0
        %4828 = vmatpush1.msra.mxu0 %v4802
        %4829 = vmatprep.subr.mxu0 0.0
        %4830 = vmatpush1.msra.mxu0 %v4803
        %4831 = vmatprep.subr.mxu0 0.0
        %4832 = vmatpush1.msra.mxu0 %v4804
        %4833 = vmatprep.subr.mxu0 0.0
        %4834 = vmatpush1.msra.mxu0 %v4805
        %4835 = vmatprep.subr.mxu0 0.0
        %4836 = vmatpush1.msra.mxu0 %v4806
        %4837 = vmatprep.subr.mxu0 0.0
        %4838 = vmatpush1.msra.mxu0 %v4807
        %4839 = vmatprep.subr.mxu0 0.0
        %4840 = vmatpush1.msra.mxu0 %v4808
        %4841 = vmatprep.subr.mxu0 0.0
        %4842 = vmatpush1.msra.mxu0 %v4809
        %4843 = vmatprep.subr.mxu0 0.0
        %4844 = vmatpush1.msra.mxu0 0.0
        %4845 = vmatprep.subr.mxu0 0.0
        %4846 = vmatpush1.msra.mxu0 0.0
        %4847 = vmatprep.subr.mxu0 0.0
        %4848 = vmatpush1.msra.mxu0 0.0
        %4849 = vmatprep.subr.mxu0 0.0
        %4850 = vmatpush1.msra.mxu0 0.0
        %4851 = vmatprep.subr.mxu0 0.0
        %4852 = vmatpush1.msra.mxu0 0.0
        %4853 = vmatprep.subr.mxu0 0.0
        %4854 = vmatpush1.msra.mxu0 0.0
        %4855 = vmatprep.subr.mxu0 0.0
        %4856 = vmatpush1.msra.mxu0 0.0
        %4857 = vmatprep.subr.mxu0 0.0
        %4858 = vmatpush1.msra.mxu0 0.0
        %4859 = vmatprep.subr.mxu0 0.0
        %4860 = vmatpush1.msra.mxu0 0.0
        %4861 = vmatprep.subr.mxu0 0.0
        %4862 = vmatpush1.msra.mxu0 0.0
        %4863 = vmatprep.subr.mxu0 0.0
        %4864 = vmatpush1.msra.mxu0 0.0
        %4865 = vmatprep.subr.mxu0 0.0
        %4866 = vmatpush1.msra.mxu0 0.0
        %4867 = vmatprep.subr.mxu0 0.0
        %4868 = vmatpush1.msra.mxu0 0.0
        %4869 = vmatprep.subr.mxu0 0.0
        %4870 = vmatpush1.msra.mxu0 0.0
        %4871 = vmatprep.subr.mxu0 0.0
        %4872 = vmatpush1.msra.mxu0 0.0
        %4873 = vmatprep.subr.mxu0 0.0
        %4874 = vmatpush1.msra.mxu0 0.0
        %4875 = vmatprep.mubr.f32.mxu0 0.0
        %4876 = vmatmul.mubr.f32.gmra.mrb[0].mxu0 %v4793
        %v4877 = vpop.f32.mrb[0].mxu0
        %v4878 = vadd.f32 %v4810, %v4877
        %v4879 = vpop.f32.mrb[0].mxu0
        %4880 = vdwg.mxu0
        %v4881 = vmax.f32 %v4878, 0.0
        %v4882 = vld [vmem:[%s7] sm:$0xff]
        %v4883 = vld [vmem:[%s7 + $0x8] sm:$0xff]
        %v4884 = vld [vmem:[%s7 + $0x10] sm:$0xff]
        %v4885 = vld [vmem:[%s7 + $0x18] sm:$0xff]
        %v4886 = vld [vmem:[%s7 + $0x20] sm:$0xff]
        %v4887 = vld [vmem:[%s7 + $0x28] sm:$0xff]
        %v4888 = vld [vmem:[%s7 + $0x30] sm:$0xff]
        %v4889 = vld [vmem:[%s7 + $0x38] sm:$0xff]
        %v4890 = vld [vmem:[%s8] sm:$0x1]
        %vm4891 = vcmask 523264
        %v4893 = vsel %vm4891, %v4881, 0
        %4895 = vmatprep.subr.mxu0 0.0
        %4896 = vmatpush1.msra.mxu0 %v4882
        %4897 = vmatprep.subr.mxu0 0.0
        %4898 = vmatpush1.msra.mxu0 %v4883
        %4899 = vmatprep.subr.mxu0 0.0
        %4900 = vmatpush1.msra.mxu0 %v4884
        %4901 = vmatprep.subr.mxu0 0.0
        %4902 = vmatpush1.msra.mxu0 %v4885
        %4903 = vmatprep.subr.mxu0 0.0
        %4904 = vmatpush1.msra.mxu0 %v4886
        %4905 = vmatprep.subr.mxu0 0.0
        %4906 = vmatpush1.msra.mxu0 %v4887
        %4907 = vmatprep.subr.mxu0 0.0
        %4908 = vmatpush1.msra.mxu0 %v4888
        %4909 = vmatprep.subr.mxu0 0.0
        %4910 = vmatpush1.msra.mxu0 %v4889
        %4911 = vmatprep.subr.mxu0 0.0
        %4912 = vmatpush1.msra.mxu0 0.0
        %4913 = vmatprep.subr.mxu0 0.0
        %4914 = vmatpush1.msra.mxu0 0.0
        %4915 = vmatprep.subr.mxu0 0.0
        %4916 = vmatpush1.msra.mxu0 0.0
        %4917 = vmatprep.subr.mxu0 0.0
        %4918 = vmatpush1.msra.mxu0 0.0
        %4919 = vmatprep.subr.mxu0 0.0
        %4920 = vmatpush1.msra.mxu0 0.0
        %4921 = vmatprep.subr.mxu0 0.0
        %4922 = vmatpush1.msra.mxu0 0.0
        %4923 = vmatprep.subr.mxu0 0.0
        %4924 = vmatpush1.msra.mxu0 0.0
        %4925 = vmatprep.subr.mxu0 0.0
        %4926 = vmatpush1.msra.mxu0 0.0
        %4927 = vmatprep.subr.mxu0 0.0
        %4928 = vmatpush1.msra.mxu0 0.0
        %4929 = vmatprep.subr.mxu0 0.0
        %4930 = vmatpush1.msra.mxu0 0.0
        %4931 = vmatprep.subr.mxu0 0.0
        %4932 = vmatpush1.msra.mxu0 0.0
        %4933 = vmatprep.subr.mxu0 0.0
        %4934 = vmatpush1.msra.mxu0 0.0
        %4935 = vmatprep.subr.mxu0 0.0
        %4936 = vmatpush1.msra.mxu0 0.0
        %4937 = vmatprep.subr.mxu0 0.0
        %4938 = vmatpush1.msra.mxu0 0.0
        %4939 = vmatprep.subr.mxu0 0.0
        %4940 = vmatpush1.msra.mxu0 0.0
        %4941 = vmatprep.subr.mxu0 0.0
        %4942 = vmatpush1.msra.mxu0 0.0
        %4943 = vmatprep.subr.mxu0 0.0
        %4944 = vmatpush1.msra.mxu0 0.0
        %4945 = vmatprep.subr.mxu0 0.0
        %4946 = vmatpush1.msra.mxu0 0.0
        %4947 = vmatprep.subr.mxu0 0.0
        %4948 = vmatpush1.msra.mxu0 0.0
        %4949 = vmatprep.subr.mxu0 0.0
        %4950 = vmatpush1.msra.mxu0 0.0
        %4951 = vmatprep.subr.mxu0 0.0
        %4952 = vmatpush1.msra.mxu0 0.0
        %4953 = vmatprep.subr.mxu0 0.0
        %4954 = vmatpush1.msra.mxu0 0.0
        %4955 = vmatprep.subr.mxu0 0.0
        %4956 = vmatpush1.msra.mxu0 0.0
        %4957 = vmatprep.subr.mxu0 0.0
        %4958 = vmatpush1.msra.mxu0 0.0
        %4959 = vmatprep.mubr.f32.mxu0 0.0
        %4960 = vmatmul.mubr.f32.gmra.mrb[0].mxu0 %v4893
        %v4961 = vpop.f32.mrb[0].mxu0
        %v4962 = vadd.f32 %v4890, %v4961
        %v4963 = vpop.f32.mrb[0].mxu0
        %4964 = vdwg.mxu0
        %v4965 = vmax.f32 %v4962, 0.0
        %v4966 = vld [vmem:[%s9] sm:$0xff]
        %v4967 = vld [vmem:[%s9 + $0x8] sm:$0xff]
        %v4968 = vld [vmem:[%s9 + $0x10] sm:$0xff]
        %v4969 = vld [vmem:[%s9 + $0x18] sm:$0xff]
        %v4970 = vld [vmem:[#allocation5] sm:$0x1]
        %vm4971 = vcmask 261120
        %v4973 = vsel %vm4971, %v4965, 0
        %4975 = vmatprep.subr.mxu0 0.0
        %4976 = vmatpush1.msra.mxu0 %v4966
        %4977 = vmatprep.subr.mxu0 0.0
        %4978 = vmatpush1.msra.mxu0 %v4967
        %4979 = vmatprep.subr.mxu0 0.0
        %4980 = vmatpush1.msra.mxu0 %v4968
        %4981 = vmatprep.subr.mxu0 0.0
        %4982 = vmatpush1.msra.mxu0 %v4969
        %4983 = vmatprep.subr.mxu0 0.0
        %4984 = vmatpush1.msra.mxu0 0.0
        %4985 = vmatprep.subr.mxu0 0.0
        %4986 = vmatpush1.msra.mxu0 0.0
        %4987 = vmatprep.subr.mxu0 0.0
        %4988 = vmatpush1.msra.mxu0 0.0
        %4989 = vmatprep.subr.mxu0 0.0
        %4990 = vmatpush1.msra.mxu0 0.0
        %4991 = vmatprep.subr.mxu0 0.0
        %4992 = vmatpush1.msra.mxu0 0.0
        %4993 = vmatprep.subr.mxu0 0.0
        %4994 = vmatpush1.msra.mxu0 0.0
        %4995 = vmatprep.subr.mxu0 0.0
        %4996 = vmatpush1.msra.mxu0 0.0
        %4997 = vmatprep.subr.mxu0 0.0
        %4998 = vmatpush1.msra.mxu0 0.0
        %4999 = vmatprep.subr.mxu0 0.0
        %5000 = vmatpush1.msra.mxu0 0.0
        %5001 = vmatprep.subr.mxu0 0.0
        %5002 = vmatpush1.msra.mxu0 0.0
        %5003 = vmatprep.subr.mxu0 0.0
        %5004 = vmatpush1.msra.mxu0 0.0
        %5005 = vmatprep.subr.mxu0 0.0
        %5006 = vmatpush1.msra.mxu0 0.0
        %5007 = vmatprep.subr.mxu0 0.0
        %5008 = vmatpush1.msra.mxu0 0.0
        %5009 = vmatprep.subr.mxu0 0.0
        %5010 = vmatpush1.msra.mxu0 0.0
        %5011 = vmatprep.subr.mxu0 0.0
        %5012 = vmatpush1.msra.mxu0 0.0
        %5013 = vmatprep.subr.mxu0 0.0
        %5014 = vmatpush1.msra.mxu0 0.0
        %5015 = vmatprep.subr.mxu0 0.0
        %5016 = vmatpush1.msra.mxu0 0.0
        %5017 = vmatprep.subr.mxu0 0.0
        %5018 = vmatpush1.msra.mxu0 0.0
        %5019 = vmatprep.subr.mxu0 0.0
        %5020 = vmatpush1.msra.mxu0 0.0
        %5021 = vmatprep.subr.mxu0 0.0
        %5022 = vmatpush1.msra.mxu0 0.0
        %5023 = vmatprep.subr.mxu0 0.0
        %5024 = vmatpush1.msra.mxu0 0.0
        %5025 = vmatprep.subr.mxu0 0.0
        %5026 = vmatpush1.msra.mxu0 0.0
        %5027 = vmatprep.subr.mxu0 0.0
        %5028 = vmatpush1.msra.mxu0 0.0
        %5029 = vmatprep.subr.mxu0 0.0
        %5030 = vmatpush1.msra.mxu0 0.0
        %5031 = vmatprep.subr.mxu0 0.0
        %5032 = vmatpush1.msra.mxu0 0.0
        %5033 = vmatprep.subr.mxu0 0.0
        %5034 = vmatpush1.msra.mxu0 0.0
        %5035 = vmatprep.subr.mxu0 0.0
        %5036 = vmatpush1.msra.mxu0 0.0
        %5037 = vmatprep.subr.mxu0 0.0
        %5038 = vmatpush1.msra.mxu0 0.0
        %5039 = vmatprep.mubr.f32.mxu0 0.0
        %5040 = vmatmul.mubr.f32.gmra.mrb[0].mxu0 %v4973
        %v5041 = vpop.f32.mrb[0].mxu0
        %v5042 = vadd.f32 %v4970, %v5041
        %v5043 = vpop.f32.mrb[0].mxu0
        %5044 = vdwg.mxu0
        %vm5045 = vcmask 0
        %5046 = vst.msk [vmem:[%s414] sm:$0x1] %vm5045, %v5042
        %p5047 = scmp.lt.s32.totalorder %s26, 1
        %s5048 = scalar_select %p5047, %s26, 1
        %s5049 = scalar_lea.vmem %s11, %s5048
        // Predicated region
        $region73: #{single_ccnn_forward.1} parent=63 // pred_check
          %p5050 = pneg %p280
        $region74: #{single_ccnn_forward.1} parent=63 // pred_check_branch
          %5052 = sbr.rel (%p5050) target = $region76
        $region75: #{single_ccnn_forward.1} parent=63 // pred_region
          _
        $region76: #{single_ccnn_forward.1} parent=63 // pred_fallthru
          _
      $region64: #{single_ccnn_forward.1} parent=5 // pred_fallthru
        _
      %p5053 = scmp.le.s32.totalorder 2, %s21
      // Predicated region
      $region77: #{single_ccnn_forward.1} parent=5 // pred_check
        %p5054 = pneg %p5053
      $region78: #{single_ccnn_forward.1} parent=5 // pred_check_branch
        %5056 = sbr.rel (%p5054) target = $region80
      $region79: #{single_ccnn_forward.1} parent=5 // pred_region
        %s5057 = ssub.s32 %s21, 2
        // Predicated region
        $region81: #{single_ccnn_forward.1} parent=79 // pred_check
          %p5058 = pneg %p286
        $region82: #{single_ccnn_forward.1} parent=79 // pred_check_branch
          %5060 = sbr.rel (%p5058) target = $region84
        $region83: #{single_ccnn_forward.1} parent=79 // pred_region
          %p5061 = scmp.lt.s32.totalorder %s27, 1
          %s5062 = scalar_select %p5061, %s27, 1
          %s5063 = scalar_lea.vmem %s11, %s5062
        $region84: #{single_ccnn_forward.1} parent=79 // pred_fallthru
          _
      $region80: #{single_ccnn_forward.1} parent=5 // pred_fallthru
        _
    $region6: #{single_ccnn_forward.1} parent=1 // loop_footer
      %s25 = sadd.s32 1, %s21
    $region7: #{single_ccnn_forward.1} parent=1 // loop_footer_branch
      %20 = sbr.rel target = $region3
    $region8: #{single_ccnn_forward.1} parent=1 // loop_exit
      _
    %5064 = vsyncpa [#allocation7], 1
    %s5065 = scalar_lea.sflag [#allocation7], 1
    %5066 = vsyncpa %s5065, 1
    %5067 = vsyncpa [#allocation9], 1

</llo_original>
